<compile_context>
chip_gen: v5e
topology: v5e:2x2
jax: 0.10.0
libtpu: 0.0.40
codegen_flags: <defaults>
</compile_context>

<pallas_src>
import functools

import jax
import jax.numpy as jnp
from jax.experimental import pallas as pl
from jax.experimental.pallas import tpu as pltpu


def _round_up(x, m):
    return (x + m - 1) // m * m


def _log_softmax(x):
    m = jnp.max(x, axis=1, keepdims=True)
    s = x - m
    return s - jnp.log(jnp.sum(jnp.exp(s), axis=1, keepdims=True))


def rnn_ha_kernel(
    im_ref, h0_ref,
    wih_ref, whh_ref, bih_ref, bhh_ref,
    w1_ref, b1_ref, w2_ref, b2_ref,
    w3_ref, b3_ref, w4_ref, b4_ref,
    logp_model_ref, logp_vin_ref, out_vin_ref,
    *, hidden_dim, epsilon, s_valid,
):
    H = hidden_dim
    f32 = jnp.float32
    bf16 = jnp.bfloat16
    inv_s = 1.0 / s_valid

    im_bf = im_ref[...]                    # (TB, S_pad, C) bf16, padded rows are 0
    im32 = im_bf.astype(f32)
    h0 = h0_ref[...]                       # (TB, H) f32

    wih = wih_ref[...]                     # (C, 3H) bf16, gate order r, z, n
    whh = whh_ref[...]                     # (H, 3H) bf16
    bih = bih_ref[...]                     # (1, 3H) f32
    bhh = bhh_ref[...]                     # (1, 3H) f32

    def sigmoid(x):                        # EUP exp + EUP reciprocal
        return pl.reciprocal(1.0 + jnp.exp(-x), approx=True)

    def gru_step(gi, h):
        # gi: precomputed input gates (TB, 3H) f32; h: (TB, H) f32
        gh = jnp.dot(h.astype(bf16), whh, preferred_element_type=f32) + bhh
        r = sigmoid(gi[:, 0:H] + gh[:, 0:H])
        z = sigmoid(gi[:, H:2 * H] + gh[:, H:2 * H])
        n = jnp.tanh(gi[:, 2 * H:3 * H] + r * gh[:, 2 * H:3 * H])
        return (1.0 - z) * n + z * h

    # first_gap: AvgPool2d(7) over the 7x7 map == mean over the 49 valid
    # spatial positions (padding rows are zero, so a plain sum is exact).
    first_feat = jnp.sum(im32, axis=1) * inv_s                       # (TB, C)

    # The input-gate matmul is identical for both steps of the length-2
    # sequence (first_feat, first_feat): compute it once.
    gi_first = jnp.dot(first_feat.astype(bf16), wih,
                       preferred_element_type=f32) + bih             # (TB, 3H)
    h1 = gru_step(gi_first, h0)            # output[0, :, :]
    h2 = gru_step(gi_first, h1)            # hn after 2 steps
    o_model = h1

    # Attention query: W4(relu(W3(o_model))).
    q = jnp.dot(o_model.astype(bf16), w3_ref[...],
                preferred_element_type=f32) + b3_ref[...]
    q = jnp.maximum(q, 0.0)
    q = jnp.dot(q.astype(bf16), w4_ref[...],
                preferred_element_type=f32) + b4_ref[...]            # (TB, C)

    # Channel-reduced attention score per spatial position, softplus + eps,
    # normalized over the 49 valid positions only.
    raw = jnp.sum(im32 * q[:, None, :], axis=-1)                     # (TB, S_pad)
    sp = jnp.maximum(raw, 0.0) + jnp.log1p(jnp.exp(-jnp.abs(raw)))   # softplus
    pos = jax.lax.broadcasted_iota(jnp.int32, sp.shape, 1)
    score = jnp.where(pos < s_valid, sp + epsilon, 0.0)
    total = jnp.sum(score, axis=1, keepdims=True)                    # (TB, 1)
    score_n = score * pl.reciprocal(total, approx=True)

    # Weighted feature map, then second_gap (mean over the 49 positions).
    second_feat = jnp.sum(im32 * score_n[:, :, None], axis=1) * inv_s  # (TB, C)

    # Second GRU step (sequence length 1), initial state hn.
    gi_second = jnp.dot(second_feat.astype(bf16), wih,
                        preferred_element_type=f32) + bih
    o_vin = gru_step(gi_second, h2)                                  # (TB, H)

    ss = jnp.sum(o_vin * o_vin, axis=1, keepdims=True)
    out_vin_ref[...] = o_vin * pl.reciprocal(jnp.sqrt(ss), approx=True)

    pred_model = jnp.dot(o_model.astype(bf16), w1_ref[...],
                         preferred_element_type=f32) + b1_ref[...]
    pred_vin = jnp.dot(o_vin.astype(bf16), w2_ref[...],
                       preferred_element_type=f32) + b2_ref[...]
    # Padded class columns carry bias -1e30 -> exp underflows to 0, so the
    # log_softmax of the real classes is unaffected (padding sliced in wrapper).
    logp_model_ref[...] = _log_softmax(pred_model)
    logp_vin_ref[...] = _log_softmax(pred_vin)


def rnn_ha_forward(im_feat_nchw, h0, params, *, hidden_dim, epsilon=0.1):
    """im_feat_nchw: (B, C, 7, 7) float32 backbone features (NCHW, like PyTorch).
       h0:           (num_layers=1, B, hidden_dim) float32 GRU initial state."""
    B, C, Hs, Ws = im_feat_nchw.shape
    S = Hs * Ws
    S_pad = _round_up(S, 8)
    H = hidden_dim

    # NCHW -> (B, S, C) channels-last, bf16, spatial padded to sublane multiple.
    im = jnp.transpose(im_feat_nchw.reshape(B, C, S), (0, 2, 1)).astype(jnp.bfloat16)
    im = jnp.pad(im, ((0, 0), (0, S_pad - S), (0, 0)))
    h0b = h0[0].astype(jnp.float32)                                  # (B, H)

    # Batch tiling (multiple of 8 sublanes; larger tiles for larger batches).
    tile_b = min(128, _round_up(B, 8))
    B_pad = _round_up(B, tile_b)
    if B_pad != B:
        im = jnp.pad(im, ((0, B_pad - B), (0, 0), (0, 0)))
        h0b = jnp.pad(h0b, ((0, B_pad - B), (0, 0)))
    grid = (B_pad // tile_b,)

    num_model_cls = params["w1"].shape[1]
    num_vehicle_cls = params["w2"].shape[1]
    nm_pad = _round_up(num_model_cls, 128)
    nv_pad = _round_up(num_vehicle_cls, 128)

    def pad_cls(w, b, n_pad):
        n = w.shape[1]
        wp = jnp.pad(w, ((0, 0), (0, n_pad - n))).astype(jnp.bfloat16)
        bp = jnp.pad(b.astype(jnp.float32), ((0, 0), (0, n_pad - n)),
                     constant_values=-1e30)
        return wp, bp

    w1p, b1p = pad_cls(params["w1"], params["b1"], nm_pad)
    w2p, b2p = pad_cls(params["w2"], params["b2"], nv_pad)

    flat = [
        params["wih"].astype(jnp.bfloat16), params["whh"].astype(jnp.bfloat16),
        params["bih"].astype(jnp.float32), params["bhh"].astype(jnp.float32),
        w1p, b1p, w2p, b2p,
        params["w3"].astype(jnp.bfloat16), params["b3"].astype(jnp.float32),
        params["w4"].astype(jnp.bfloat16), params["b4"].astype(jnp.float32),
    ]

    def const_spec(x):
        ndim = x.ndim
        return pl.BlockSpec(x.shape, lambda b, _n=ndim: (0,) * _n)

    in_specs = [
        pl.BlockSpec((tile_b, S_pad, C), lambda b: (b, 0, 0)),
        pl.BlockSpec((tile_b, H), lambda b: (b, 0)),
    ] + [const_spec(x) for x in flat]

    out_specs = (
        pl.BlockSpec((tile_b, nm_pad), lambda b: (b, 0)),
        pl.BlockSpec((tile_b, nv_pad), lambda b: (b, 0)),
        pl.BlockSpec((tile_b, H), lambda b: (b, 0)),
    )
    out_shape = (
        jax.ShapeDtypeStruct((B_pad, nm_pad), jnp.float32),
        jax.ShapeDtypeStruct((B_pad, nv_pad), jnp.float32),
        jax.ShapeDtypeStruct((B_pad, H), jnp.float32),
    )

    # Explicit VMEM budget: resident bf16 weights + double-buffered batch tiles,
    # floored at the 32 MiB default and capped below v7x's 64 MiB physical VMEM.
    def _nbytes(a):
        return int(a.size) * jnp.dtype(a.dtype).itemsize

    weight_bytes = sum(_nbytes(x) for x in flat)
    tile_in_bytes = tile_b * S_pad * C * 2 + tile_b * H * 4
    tile_out_bytes = tile_b * (nm_pad + nv_pad + H) * 4
    vmem_limit = int(min(
        max(weight_bytes + 4 * (tile_in_bytes + tile_out_bytes) + (16 << 20),
            32 << 20),
        48 << 20))

    flops = 2 * B_pad * (
        2 * C * 3 * H          # shared + second-step input-gate matmuls
        + 3 * H * 3 * H        # three hidden-gate matmuls
        + H * H + H * C        # W3, W4
        + H * nm_pad + H * nv_pad
        + 2 * S_pad * C)       # attention score + weighted pooling
    transcendentals = B_pad * (9 * H + 2 * S_pad + nm_pad + nv_pad + 2)
    bytes_accessed = (_nbytes(im) + _nbytes(h0b) + weight_bytes
                      + B_pad * (nm_pad + nv_pad + H) * 4)

    kernel = functools.partial(rnn_ha_kernel, hidden_dim=H,
                               epsilon=epsilon, s_valid=S)

    logp_m, logp_v, out_v = pl.pallas_call(
        kernel,
        out_shape=out_shape,
        grid=grid,
        in_specs=in_specs,
        out_specs=out_specs,
        compiler_params=pltpu.CompilerParams(
            dimension_semantics=("parallel",),
            vmem_limit_bytes=vmem_limit),
        cost_estimate=pl.CostEstimate(flops=flops,
                                      transcendentals=transcendentals,
                                      bytes_accessed=bytes_accessed),
    )(im, h0b, *flat)

    return (logp_m[:B, :num_model_cls],
            logp_v[:B, :num_vehicle_cls],
            out_v[:B])


def make_params(key, *, emb_dim, hidden_dim, num_model_cls, num_vehicle_cls):
    """Deterministic synthetic parameters. Weights are stored pre-transposed
    to (in, out) so the kernel computes y = x @ W + b (== PyTorch x @ W.T + b)."""
    ks = jax.random.split(key, 12)
    n = lambda k, shape, s=0.05: (s * jax.random.normal(k, shape)).astype(jnp.float32)
    H, C = hidden_dim, emb_dim
    return {
        "wih": n(ks[0], (C, 3 * H)),
        "whh": n(ks[1], (H, 3 * H)),
        "bih": n(ks[2], (1, 3 * H)),
        "bhh": n(ks[3], (1, 3 * H)),
        "w1": n(ks[4], (H, num_model_cls)),
        "b1": n(ks[5], (1, num_model_cls)),
        "w2": n(ks[6], (H, num_vehicle_cls)),
        "b2": n(ks[7], (1, num_vehicle_cls)),
        "w3": n(ks[8], (H, H)),
        "b3": n(ks[9], (1, H)),
        "w4": n(ks[10], (H, C)),
        "b4": n(ks[11], (1, C)),
    }


if __name__ == "__main__":
    B = 2            # batch
    C = 256          # word_embedding_dim (scaled down from resnet50's 2048)
    HID = 128        # hidden_dim (scaled down from 1024)
    N_MODEL = 9      # num_model_cls
    N_VIN = 64       # num_vehicle_cls (scaled down from 776)

    key = jax.random.PRNGKey(0)
    k_im, k_h0, k_p = jax.random.split(key, 3)

    im_feat = jax.random.normal(k_im, (B, C, 7, 7), dtype=jnp.float32)  # NCHW backbone features
    h0 = jax.random.normal(k_h0, (1, B, HID), dtype=jnp.float32)        # (num_layers, B, H)
    params = make_params(k_p, emb_dim=C, hidden_dim=HID,
                         num_model_cls=N_MODEL, num_vehicle_cls=N_VIN)

    fwd = jax.jit(functools.partial(rnn_ha_forward, hidden_dim=HID, epsilon=0.1))
    logp_model, logp_vin, out_vin = fwd(im_feat, h0, params)
    jax.block_until_ready((logp_model, logp_vin, out_vin))

    assert logp_model.shape == (B, N_MODEL)
    assert logp_vin.shape == (B, N_VIN)
    assert out_vin.shape == (B, HID)
    print("KERNEL_OK")
</pallas_src>

<mosaic_0001>
module attributes {stable_mosaic.version = 11 : i64} {
  func.func @rnn_ha_kernel(%arg0: i32, %arg1: memref<8x56x256xbf16, #tpu.memory_space<vmem>>, %arg2: memref<8x128xf32, #tpu.memory_space<vmem>>, %arg3: memref<256x384xbf16, #tpu.memory_space<vmem>>, %arg4: memref<128x384xbf16, #tpu.memory_space<vmem>>, %arg5: memref<1x384xf32, #tpu.memory_space<vmem>>, %arg6: memref<1x384xf32, #tpu.memory_space<vmem>>, %arg7: memref<128x128xbf16, #tpu.memory_space<vmem>>, %arg8: memref<1x128xf32, #tpu.memory_space<vmem>>, %arg9: memref<128x128xbf16, #tpu.memory_space<vmem>>, %arg10: memref<1x128xf32, #tpu.memory_space<vmem>>, %arg11: memref<128x128xbf16, #tpu.memory_space<vmem>>, %arg12: memref<1x128xf32, #tpu.memory_space<vmem>>, %arg13: memref<128x256xbf16, #tpu.memory_space<vmem>>, %arg14: memref<1x256xf32, #tpu.memory_space<vmem>>, %arg15: memref<8x128xf32, #tpu.memory_space<vmem>>, %arg16: memref<8x128xf32, #tpu.memory_space<vmem>>, %arg17: memref<8x128xf32, #tpu.memory_space<vmem>>) attributes {dimension_semantics = [#tpu.dimension_semantics<parallel>], iteration_bounds = array<i64: 1>, scalar_prefetch = 0 : i64, scratch_operands = 0 : i64, tpu.core_type = #tpu.core_type<tc>, window_params = [{transform_indices = @transform_0, window_bounds = array<i64: 8, 56, 256>}, {transform_indices = @transform_1, window_bounds = array<i64: 8, 128>}, {pipeline_mode = #tpu.pipeline_mode<synchronous>, transform_indices = @transform_2, window_bounds = array<i64: 256, 384>}, {pipeline_mode = #tpu.pipeline_mode<synchronous>, transform_indices = @transform_3, window_bounds = array<i64: 128, 384>}, {pipeline_mode = #tpu.pipeline_mode<synchronous>, transform_indices = @transform_4, window_bounds = array<i64: 1, 384>}, {pipeline_mode = #tpu.pipeline_mode<synchronous>, transform_indices = @transform_5, window_bounds = array<i64: 1, 384>}, {pipeline_mode = #tpu.pipeline_mode<synchronous>, transform_indices = @transform_6, window_bounds = array<i64: 128, 128>}, {pipeline_mode = #tpu.pipeline_mode<synchronous>, transform_indices = @transform_7, window_bounds = array<i64: 1, 128>}, {pipeline_mode = #tpu.pipeline_mode<synchronous>, transform_indices = @transform_8, window_bounds = array<i64: 128, 128>}, {pipeline_mode = #tpu.pipeline_mode<synchronous>, transform_indices = @transform_9, window_bounds = array<i64: 1, 128>}, {pipeline_mode = #tpu.pipeline_mode<synchronous>, transform_indices = @transform_10, window_bounds = array<i64: 128, 128>}, {pipeline_mode = #tpu.pipeline_mode<synchronous>, transform_indices = @transform_11, window_bounds = array<i64: 1, 128>}, {pipeline_mode = #tpu.pipeline_mode<synchronous>, transform_indices = @transform_12, window_bounds = array<i64: 128, 256>}, {pipeline_mode = #tpu.pipeline_mode<synchronous>, transform_indices = @transform_13, window_bounds = array<i64: 1, 256>}, {transform_indices = @transform_14, window_bounds = array<i64: 8, 128>}, {transform_indices = @transform_15, window_bounds = array<i64: 8, 128>}, {transform_indices = @transform_16, window_bounds = array<i64: 8, 128>}]} {
    %c0 = arith.constant 0 : index
    %c0_0 = arith.constant 0 : index
    %c0_1 = arith.constant 0 : index
    %0 = vector.load %arg1[%c0, %c0_0, %c0_1] : memref<8x56x256xbf16, #tpu.memory_space<vmem>>, vector<8x56x256xbf16>
    %1 = arith.extf %0 : vector<8x56x256xbf16> to vector<8x56x256xf32>
    %c0_2 = arith.constant 0 : index
    %c0_3 = arith.constant 0 : index
    %2 = vector.load %arg2[%c0_2, %c0_3] : memref<8x128xf32, #tpu.memory_space<vmem>>, vector<8x128xf32>
    %c0_4 = arith.constant 0 : index
    %c0_5 = arith.constant 0 : index
    %3 = vector.load %arg3[%c0_4, %c0_5] : memref<256x384xbf16, #tpu.memory_space<vmem>>, vector<256x384xbf16>
    %c0_6 = arith.constant 0 : index
    %c0_7 = arith.constant 0 : index
    %4 = vector.load %arg4[%c0_6, %c0_7] : memref<128x384xbf16, #tpu.memory_space<vmem>>, vector<128x384xbf16>
    %c0_8 = arith.constant 0 : index
    %c0_9 = arith.constant 0 : index
    %5 = vector.load %arg5[%c0_8, %c0_9] : memref<1x384xf32, #tpu.memory_space<vmem>>, vector<1x384xf32>
    %c0_10 = arith.constant 0 : index
    %c0_11 = arith.constant 0 : index
    %6 = vector.load %arg6[%c0_10, %c0_11] : memref<1x384xf32, #tpu.memory_space<vmem>>, vector<1x384xf32>
    %cst = arith.constant dense<0.000000e+00> : vector<8x256xf32>
    %7 = vector.multi_reduction <add>, %1, %cst [1] : vector<8x56x256xf32> to vector<8x256xf32>
    %cst_12 = arith.constant 0.0204081628 : f32
    %8 = vector.broadcast %cst_12 : f32 to vector<8x256xf32>
    %9 = arith.mulf %7, %8 : vector<8x256xf32>
    %10 = arith.truncf %9 : vector<8x256xf32> to vector<8x256xbf16>
    %cst_13 = arith.constant dense<0.000000e+00> : vector<8x384xf32>
    %11 = tpu.matmul %10, %3, %cst_13 {dimension_numbers = #tpu.dot_dimension_numbers<[1], [0], [0], [1], [0, 0, 1, 1], [], []>} : vector<8x256xbf16>, vector<256x384xbf16>, vector<8x384xf32> -> vector<8x384xf32>
    %12 = vector.broadcast %5 : vector<1x384xf32> to vector<8x384xf32>
    %13 = arith.addf %11, %12 : vector<8x384xf32>
    %14 = arith.truncf %2 : vector<8x128xf32> to vector<8x128xbf16>
    %cst_14 = arith.constant dense<0.000000e+00> : vector<8x384xf32>
    %15 = tpu.matmul %14, %4, %cst_14 {dimension_numbers = #tpu.dot_dimension_numbers<[1], [0], [0], [1], [0, 0, 1, 1], [], []>} : vector<8x128xbf16>, vector<128x384xbf16>, vector<8x384xf32> -> vector<8x384xf32>
    %16 = vector.broadcast %6 : vector<1x384xf32> to vector<8x384xf32>
    %17 = arith.addf %15, %16 : vector<8x384xf32>
    %18 = vector.extract_strided_slice %13 {offsets = [0, 0], sizes = [8, 128], strides = [1, 1]} : vector<8x384xf32> to vector<8x128xf32>
    %19 = vector.extract_strided_slice %17 {offsets = [0, 0], sizes = [8, 128], strides = [1, 1]} : vector<8x384xf32> to vector<8x128xf32>
    %20 = arith.addf %18, %19 : vector<8x128xf32>
    %cst_15 = arith.constant 0.000000e+00 : f32
    %21 = vector.broadcast %cst_15 : f32 to vector<8x128xf32>
    %22 = arith.subf %21, %20 : vector<8x128xf32>
    %23 = math.exp %22 : vector<8x128xf32>
    %cst_16 = arith.constant 1.000000e+00 : f32
    %24 = vector.broadcast %cst_16 : f32 to vector<8x128xf32>
    %25 = arith.addf %24, %23 : vector<8x128xf32>
    %26 = tpu.reciprocal %25 {approx = true} : vector<8x128xf32> -> vector<8x128xf32>
    %27 = vector.extract_strided_slice %13 {offsets = [0, 128], sizes = [8, 128], strides = [1, 1]} : vector<8x384xf32> to vector<8x128xf32>
    %28 = vector.extract_strided_slice %17 {offsets = [0, 128], sizes = [8, 128], strides = [1, 1]} : vector<8x384xf32> to vector<8x128xf32>
    %29 = arith.addf %27, %28 : vector<8x128xf32>
    %cst_17 = arith.constant 0.000000e+00 : f32
    %30 = vector.broadcast %cst_17 : f32 to vector<8x128xf32>
    %31 = arith.subf %30, %29 : vector<8x128xf32>
    %32 = math.exp %31 : vector<8x128xf32>
    %cst_18 = arith.constant 1.000000e+00 : f32
    %33 = vector.broadcast %cst_18 : f32 to vector<8x128xf32>
    %34 = arith.addf %33, %32 : vector<8x128xf32>
    %35 = tpu.reciprocal %34 {approx = true} : vector<8x128xf32> -> vector<8x128xf32>
    %36 = vector.extract_strided_slice %13 {offsets = [0, 256], sizes = [8, 128], strides = [1, 1]} : vector<8x384xf32> to vector<8x128xf32>
    %37 = vector.extract_strided_slice %17 {offsets = [0, 256], sizes = [8, 128], strides = [1, 1]} : vector<8x384xf32> to vector<8x128xf32>
    %38 = arith.mulf %26, %37 : vector<8x128xf32>
    %39 = arith.addf %36, %38 : vector<8x128xf32>
    %40 = math.tanh %39 : vector<8x128xf32>
    %cst_19 = arith.constant 1.000000e+00 : f32
    %41 = vector.broadcast %cst_19 : f32 to vector<8x128xf32>
    %42 = arith.subf %41, %35 : vector<8x128xf32>
    %43 = arith.mulf %42, %40 : vector<8x128xf32>
    %44 = arith.mulf %35, %2 : vector<8x128xf32>
    %45 = arith.addf %43, %44 : vector<8x128xf32>
    %46 = arith.truncf %45 : vector<8x128xf32> to vector<8x128xbf16>
    %cst_20 = arith.constant dense<0.000000e+00> : vector<8x384xf32>
    %47 = tpu.matmul %46, %4, %cst_20 {dimension_numbers = #tpu.dot_dimension_numbers<[1], [0], [0], [1], [0, 0, 1, 1], [], []>} : vector<8x128xbf16>, vector<128x384xbf16>, vector<8x384xf32> -> vector<8x384xf32>
    %48 = vector.broadcast %6 : vector<1x384xf32> to vector<8x384xf32>
    %49 = arith.addf %47, %48 : vector<8x384xf32>
    %50 = vector.extract_strided_slice %13 {offsets = [0, 0], sizes = [8, 128], strides = [1, 1]} : vector<8x384xf32> to vector<8x128xf32>
    %51 = vector.extract_strided_slice %49 {offsets = [0, 0], sizes = [8, 128], strides = [1, 1]} : vector<8x384xf32> to vector<8x128xf32>
    %52 = arith.addf %50, %51 : vector<8x128xf32>
    %cst_21 = arith.constant 0.000000e+00 : f32
    %53 = vector.broadcast %cst_21 : f32 to vector<8x128xf32>
    %54 = arith.subf %53, %52 : vector<8x128xf32>
    %55 = math.exp %54 : vector<8x128xf32>
    %cst_22 = arith.constant 1.000000e+00 : f32
    %56 = vector.broadcast %cst_22 : f32 to vector<8x128xf32>
    %57 = arith.addf %56, %55 : vector<8x128xf32>
    %58 = tpu.reciprocal %57 {approx = true} : vector<8x128xf32> -> vector<8x128xf32>
    %59 = vector.extract_strided_slice %13 {offsets = [0, 128], sizes = [8, 128], strides = [1, 1]} : vector<8x384xf32> to vector<8x128xf32>
    %60 = vector.extract_strided_slice %49 {offsets = [0, 128], sizes = [8, 128], strides = [1, 1]} : vector<8x384xf32> to vector<8x128xf32>
    %61 = arith.addf %59, %60 : vector<8x128xf32>
    %cst_23 = arith.constant 0.000000e+00 : f32
    %62 = vector.broadcast %cst_23 : f32 to vector<8x128xf32>
    %63 = arith.subf %62, %61 : vector<8x128xf32>
    %64 = math.exp %63 : vector<8x128xf32>
    %cst_24 = arith.constant 1.000000e+00 : f32
    %65 = vector.broadcast %cst_24 : f32 to vector<8x128xf32>
    %66 = arith.addf %65, %64 : vector<8x128xf32>
    %67 = tpu.reciprocal %66 {approx = true} : vector<8x128xf32> -> vector<8x128xf32>
    %68 = vector.extract_strided_slice %13 {offsets = [0, 256], sizes = [8, 128], strides = [1, 1]} : vector<8x384xf32> to vector<8x128xf32>
    %69 = vector.extract_strided_slice %49 {offsets = [0, 256], sizes = [8, 128], strides = [1, 1]} : vector<8x384xf32> to vector<8x128xf32>
    %70 = arith.mulf %58, %69 : vector<8x128xf32>
    %71 = arith.addf %68, %70 : vector<8x128xf32>
    %72 = math.tanh %71 : vector<8x128xf32>
    %cst_25 = arith.constant 1.000000e+00 : f32
    %73 = vector.broadcast %cst_25 : f32 to vector<8x128xf32>
    %74 = arith.subf %73, %67 : vector<8x128xf32>
    %75 = arith.mulf %74, %72 : vector<8x128xf32>
    %76 = arith.mulf %67, %45 : vector<8x128xf32>
    %77 = arith.addf %75, %76 : vector<8x128xf32>
    %78 = arith.truncf %45 : vector<8x128xf32> to vector<8x128xbf16>
    %c0_26 = arith.constant 0 : index
    %c0_27 = arith.constant 0 : index
    %79 = vector.load %arg11[%c0_26, %c0_27] : memref<128x128xbf16, #tpu.memory_space<vmem>>, vector<128x128xbf16>
    %cst_28 = arith.constant dense<0.000000e+00> : vector<8x128xf32>
    %80 = tpu.matmul %78, %79, %cst_28 {dimension_numbers = #tpu.dot_dimension_numbers<[1], [0], [0], [1], [0, 0, 1, 1], [], []>} : vector<8x128xbf16>, vector<128x128xbf16>, vector<8x128xf32> -> vector<8x128xf32>
    %c0_29 = arith.constant 0 : index
    %c0_30 = arith.constant 0 : index
    %81 = vector.load %arg12[%c0_29, %c0_30] : memref<1x128xf32, #tpu.memory_space<vmem>>, vector<1x128xf32>
    %82 = vector.broadcast %81 : vector<1x128xf32> to vector<8x128xf32>
    %83 = arith.addf %80, %82 : vector<8x128xf32>
    %cst_31 = arith.constant 0.000000e+00 : f32
    %84 = vector.broadcast %cst_31 : f32 to vector<8x128xf32>
    %85 = arith.maximumf %83, %84 : vector<8x128xf32>
    %86 = arith.truncf %85 : vector<8x128xf32> to vector<8x128xbf16>
    %c0_32 = arith.constant 0 : index
    %c0_33 = arith.constant 0 : index
    %87 = vector.load %arg13[%c0_32, %c0_33] : memref<128x256xbf16, #tpu.memory_space<vmem>>, vector<128x256xbf16>
    %cst_34 = arith.constant dense<0.000000e+00> : vector<8x256xf32>
    %88 = tpu.matmul %86, %87, %cst_34 {dimension_numbers = #tpu.dot_dimension_numbers<[1], [0], [0], [1], [0, 0, 1, 1], [], []>} : vector<8x128xbf16>, vector<128x256xbf16>, vector<8x256xf32> -> vector<8x256xf32>
    %c0_35 = arith.constant 0 : index
    %c0_36 = arith.constant 0 : index
    %89 = vector.load %arg14[%c0_35, %c0_36] : memref<1x256xf32, #tpu.memory_space<vmem>>, vector<1x256xf32>
    %90 = vector.broadcast %89 : vector<1x256xf32> to vector<8x256xf32>
    %91 = arith.addf %88, %90 : vector<8x256xf32>
    %92 = vector.shape_cast %91 : vector<8x256xf32> to vector<8x1x256xf32>
    %93 = vector.broadcast %92 : vector<8x1x256xf32> to vector<8x56x256xf32>
    %94 = arith.mulf %1, %93 : vector<8x56x256xf32>
    %cst_37 = arith.constant dense<0.000000e+00> : vector<8x56xf32>
    %95 = vector.multi_reduction <add>, %94, %cst_37 [2] : vector<8x56x256xf32> to vector<8x56xf32>
    %cst_38 = arith.constant 0.000000e+00 : f32
    %96 = vector.broadcast %cst_38 : f32 to vector<8x56xf32>
    %97 = arith.maximumf %95, %96 : vector<8x56xf32>
    %98 = math.absf %95 : vector<8x56xf32>
    %cst_39 = arith.constant 0.000000e+00 : f32
    %99 = vector.broadcast %cst_39 : f32 to vector<8x56xf32>
    %100 = arith.subf %99, %98 : vector<8x56xf32>
    %101 = math.exp %100 : vector<8x56xf32>
    %102 = math.log1p %101 : vector<8x56xf32>
    %103 = arith.addf %97, %102 : vector<8x56xf32>
    %104 = tpu.iota {dimensions = array<i32: 1>} : vector<8x56xi32>
    %c49_i32 = arith.constant 49 : i32
    %105 = vector.broadcast %c49_i32 : i32 to vector<8x56xi32>
    %106 = arith.cmpi slt, %104, %105 : vector<8x56xi32>
    %cst_40 = arith.constant 1.000000e-01 : f32
    %107 = vector.broadcast %cst_40 : f32 to vector<8x56xf32>
    %108 = arith.addf %103, %107 : vector<8x56xf32>
    %cst_41 = arith.constant 0.000000e+00 : f32
    %109 = vector.broadcast %cst_41 : f32 to vector<8x56xf32>
    %110 = arith.select %106, %108, %109 : vector<8x56xi1>, vector<8x56xf32>
    %cst_42 = arith.constant dense<0.000000e+00> : vector<8xf32>
    %111 = vector.multi_reduction <add>, %110, %cst_42 [1] : vector<8x56xf32> to vector<8xf32>
    %112 = vector.shape_cast %111 : vector<8xf32> to vector<8x1xf32>
    %113 = tpu.reciprocal %112 {approx = true} : vector<8x1xf32> -> vector<8x1xf32>
    %114 = vector.broadcast %113 : vector<8x1xf32> to vector<8x56xf32>
    %115 = arith.mulf %110, %114 : vector<8x56xf32>
    %116 = vector.shape_cast %115 : vector<8x56xf32> to vector<8x56x1xf32>
    %117 = vector.broadcast %116 : vector<8x56x1xf32> to vector<8x56x256xf32>
    %118 = arith.mulf %1, %117 : vector<8x56x256xf32>
    %cst_43 = arith.constant dense<0.000000e+00> : vector<8x256xf32>
    %119 = vector.multi_reduction <add>, %118, %cst_43 [1] : vector<8x56x256xf32> to vector<8x256xf32>
    %cst_44 = arith.constant 0.0204081628 : f32
    %120 = vector.broadcast %cst_44 : f32 to vector<8x256xf32>
    %121 = arith.mulf %119, %120 : vector<8x256xf32>
    %122 = arith.truncf %121 : vector<8x256xf32> to vector<8x256xbf16>
    %cst_45 = arith.constant dense<0.000000e+00> : vector<8x384xf32>
    %123 = tpu.matmul %122, %3, %cst_45 {dimension_numbers = #tpu.dot_dimension_numbers<[1], [0], [0], [1], [0, 0, 1, 1], [], []>} : vector<8x256xbf16>, vector<256x384xbf16>, vector<8x384xf32> -> vector<8x384xf32>
    %124 = vector.broadcast %5 : vector<1x384xf32> to vector<8x384xf32>
    %125 = arith.addf %123, %124 : vector<8x384xf32>
    %126 = arith.truncf %77 : vector<8x128xf32> to vector<8x128xbf16>
    %cst_46 = arith.constant dense<0.000000e+00> : vector<8x384xf32>
    %127 = tpu.matmul %126, %4, %cst_46 {dimension_numbers = #tpu.dot_dimension_numbers<[1], [0], [0], [1], [0, 0, 1, 1], [], []>} : vector<8x128xbf16>, vector<128x384xbf16>, vector<8x384xf32> -> vector<8x384xf32>
    %128 = vector.broadcast %6 : vector<1x384xf32> to vector<8x384xf32>
    %129 = arith.addf %127, %128 : vector<8x384xf32>
    %130 = vector.extract_strided_slice %125 {offsets = [0, 0], sizes = [8, 128], strides = [1, 1]} : vector<8x384xf32> to vector<8x128xf32>
    %131 = vector.extract_strided_slice %129 {offsets = [0, 0], sizes = [8, 128], strides = [1, 1]} : vector<8x384xf32> to vector<8x128xf32>
    %132 = arith.addf %130, %131 : vector<8x128xf32>
    %cst_47 = arith.constant 0.000000e+00 : f32
    %133 = vector.broadcast %cst_47 : f32 to vector<8x128xf32>
    %134 = arith.subf %133, %132 : vector<8x128xf32>
    %135 = math.exp %134 : vector<8x128xf32>
    %cst_48 = arith.constant 1.000000e+00 : f32
    %136 = vector.broadcast %cst_48 : f32 to vector<8x128xf32>
    %137 = arith.addf %136, %135 : vector<8x128xf32>
    %138 = tpu.reciprocal %137 {approx = true} : vector<8x128xf32> -> vector<8x128xf32>
    %139 = vector.extract_strided_slice %125 {offsets = [0, 128], sizes = [8, 128], strides = [1, 1]} : vector<8x384xf32> to vector<8x128xf32>
    %140 = vector.extract_strided_slice %129 {offsets = [0, 128], sizes = [8, 128], strides = [1, 1]} : vector<8x384xf32> to vector<8x128xf32>
    %141 = arith.addf %139, %140 : vector<8x128xf32>
    %cst_49 = arith.constant 0.000000e+00 : f32
    %142 = vector.broadcast %cst_49 : f32 to vector<8x128xf32>
    %143 = arith.subf %142, %141 : vector<8x128xf32>
    %144 = math.exp %143 : vector<8x128xf32>
    %cst_50 = arith.constant 1.000000e+00 : f32
    %145 = vector.broadcast %cst_50 : f32 to vector<8x128xf32>
    %146 = arith.addf %145, %144 : vector<8x128xf32>
    %147 = tpu.reciprocal %146 {approx = true} : vector<8x128xf32> -> vector<8x128xf32>
    %148 = vector.extract_strided_slice %125 {offsets = [0, 256], sizes = [8, 128], strides = [1, 1]} : vector<8x384xf32> to vector<8x128xf32>
    %149 = vector.extract_strided_slice %129 {offsets = [0, 256], sizes = [8, 128], strides = [1, 1]} : vector<8x384xf32> to vector<8x128xf32>
    %150 = arith.mulf %138, %149 : vector<8x128xf32>
    %151 = arith.addf %148, %150 : vector<8x128xf32>
    %152 = math.tanh %151 : vector<8x128xf32>
    %cst_51 = arith.constant 1.000000e+00 : f32
    %153 = vector.broadcast %cst_51 : f32 to vector<8x128xf32>
    %154 = arith.subf %153, %147 : vector<8x128xf32>
    %155 = arith.mulf %154, %152 : vector<8x128xf32>
    %156 = arith.mulf %147, %77 : vector<8x128xf32>
    %157 = arith.addf %155, %156 : vector<8x128xf32>
    %158 = arith.mulf %157, %157 : vector<8x128xf32>
    %cst_52 = arith.constant dense<0.000000e+00> : vector<8xf32>
    %159 = vector.multi_reduction <add>, %158, %cst_52 [1] : vector<8x128xf32> to vector<8xf32>
    %160 = vector.shape_cast %159 : vector<8xf32> to vector<8x1xf32>
    %161 = math.sqrt %160 : vector<8x1xf32>
    %162 = tpu.reciprocal %161 {approx = true} : vector<8x1xf32> -> vector<8x1xf32>
    %163 = vector.broadcast %162 : vector<8x1xf32> to vector<8x128xf32>
    %164 = arith.mulf %157, %163 : vector<8x128xf32>
    %c0_53 = arith.constant 0 : index
    %c0_54 = arith.constant 0 : index
    %165 = vector.load %arg17[%c0_53, %c0_54] : memref<8x128xf32, #tpu.memory_space<vmem>>, vector<8x128xf32>
    tpu.vector_store %arg17[%c0_53, %c0_54], %164 {strides = array<i32>} : memref<8x128xf32, #tpu.memory_space<vmem>>, vector<8x128xf32>,
    %166 = arith.truncf %45 : vector<8x128xf32> to vector<8x128xbf16>
    %c0_55 = arith.constant 0 : index
    %c0_56 = arith.constant 0 : index
    %167 = vector.load %arg7[%c0_55, %c0_56] : memref<128x128xbf16, #tpu.memory_space<vmem>>, vector<128x128xbf16>
    %cst_57 = arith.constant dense<0.000000e+00> : vector<8x128xf32>
    %168 = tpu.matmul %166, %167, %cst_57 {dimension_numbers = #tpu.dot_dimension_numbers<[1], [0], [0], [1], [0, 0, 1, 1], [], []>} : vector<8x128xbf16>, vector<128x128xbf16>, vector<8x128xf32> -> vector<8x128xf32>
    %c0_58 = arith.constant 0 : index
    %c0_59 = arith.constant 0 : index
    %169 = vector.load %arg8[%c0_58, %c0_59] : memref<1x128xf32, #tpu.memory_space<vmem>>, vector<1x128xf32>
    %170 = vector.broadcast %169 : vector<1x128xf32> to vector<8x128xf32>
    %171 = arith.addf %168, %170 : vector<8x128xf32>
    %172 = arith.truncf %157 : vector<8x128xf32> to vector<8x128xbf16>
    %c0_60 = arith.constant 0 : index
    %c0_61 = arith.constant 0 : index
    %173 = vector.load %arg9[%c0_60, %c0_61] : memref<128x128xbf16, #tpu.memory_space<vmem>>, vector<128x128xbf16>
    %cst_62 = arith.constant dense<0.000000e+00> : vector<8x128xf32>
    %174 = tpu.matmul %172, %173, %cst_62 {dimension_numbers = #tpu.dot_dimension_numbers<[1], [0], [0], [1], [0, 0, 1, 1], [], []>} : vector<8x128xbf16>, vector<128x128xbf16>, vector<8x128xf32> -> vector<8x128xf32>
    %c0_63 = arith.constant 0 : index
    %c0_64 = arith.constant 0 : index
    %175 = vector.load %arg10[%c0_63, %c0_64] : memref<1x128xf32, #tpu.memory_space<vmem>>, vector<1x128xf32>
    %176 = vector.broadcast %175 : vector<1x128xf32> to vector<8x128xf32>
    %177 = arith.addf %174, %176 : vector<8x128xf32>
    %cst_65 = arith.constant dense<0xFF800000> : vector<8xf32>
    %178 = vector.multi_reduction <maximumf>, %171, %cst_65 [1] : vector<8x128xf32> to vector<8xf32>
    %179 = vector.shape_cast %178 : vector<8xf32> to vector<8x1xf32>
    %180 = vector.broadcast %179 : vector<8x1xf32> to vector<8x128xf32>
    %181 = arith.subf %171, %180 : vector<8x128xf32>
    %182 = math.exp %181 : vector<8x128xf32>
    %cst_66 = arith.constant dense<0.000000e+00> : vector<8xf32>
    %183 = vector.multi_reduction <add>, %182, %cst_66 [1] : vector<8x128xf32> to vector<8xf32>
    %184 = vector.shape_cast %183 : vector<8xf32> to vector<8x1xf32>
    %185 = math.log %184 : vector<8x1xf32>
    %186 = vector.broadcast %185 : vector<8x1xf32> to vector<8x128xf32>
    %187 = arith.subf %181, %186 : vector<8x128xf32>
    %c0_67 = arith.constant 0 : index
    %c0_68 = arith.constant 0 : index
    %188 = vector.load %arg15[%c0_67, %c0_68] : memref<8x128xf32, #tpu.memory_space<vmem>>, vector<8x128xf32>
    tpu.vector_store %arg15[%c0_67, %c0_68], %187 {strides = array<i32>} : memref<8x128xf32, #tpu.memory_space<vmem>>, vector<8x128xf32>,
    %cst_69 = arith.constant dense<0xFF800000> : vector<8xf32>
    %189 = vector.multi_reduction <maximumf>, %177, %cst_69 [1] : vector<8x128xf32> to vector<8xf32>
    %190 = vector.shape_cast %189 : vector<8xf32> to vector<8x1xf32>
    %191 = vector.broadcast %190 : vector<8x1xf32> to vector<8x128xf32>
    %192 = arith.subf %177, %191 : vector<8x128xf32>
    %193 = math.exp %192 : vector<8x128xf32>
    %cst_70 = arith.constant dense<0.000000e+00> : vector<8xf32>
    %194 = vector.multi_reduction <add>, %193, %cst_70 [1] : vector<8x128xf32> to vector<8xf32>
    %195 = vector.shape_cast %194 : vector<8xf32> to vector<8x1xf32>
    %196 = math.log %195 : vector<8x1xf32>
    %197 = vector.broadcast %196 : vector<8x1xf32> to vector<8x128xf32>
    %198 = arith.subf %192, %197 : vector<8x128xf32>
    %c0_71 = arith.constant 0 : index
    %c0_72 = arith.constant 0 : index
    %199 = vector.load %arg16[%c0_71, %c0_72] : memref<8x128xf32, #tpu.memory_space<vmem>>, vector<8x128xf32>
    tpu.vector_store %arg16[%c0_71, %c0_72], %198 {strides = array<i32>} : memref<8x128xf32, #tpu.memory_space<vmem>>, vector<8x128xf32>,
    return
  }
  func.func @transform_0(%arg0: i32) -> (i32, i32, i32) {
    %c0_i32 = arith.constant 0 : i32
    %c0_i32_0 = arith.constant 0 : i32
    %c0_i32_1 = arith.constant 0 : i32
    return %arg0, %c0_i32, %c0_i32_0 : i32, i32, i32
  }
  func.func @transform_1(%arg0: i32) -> (i32, i32) {
    %c0_i32 = arith.constant 0 : i32
    %c0_i32_0 = arith.constant 0 : i32
    return %arg0, %c0_i32 : i32, i32
  }
  func.func @transform_2(%arg0: i32) -> (i32, i32) {
    %c0_i32 = arith.constant 0 : i32
    %c0_i32_0 = arith.constant 0 : i32
    %c0_i32_1 = arith.constant 0 : i32
    return %c0_i32, %c0_i32_0 : i32, i32
  }
  func.func @transform_3(%arg0: i32) -> (i32, i32) {
    %c0_i32 = arith.constant 0 : i32
    %c0_i32_0 = arith.constant 0 : i32
    %c0_i32_1 = arith.constant 0 : i32
    return %c0_i32, %c0_i32_0 : i32, i32
  }
  func.func @transform_4(%arg0: i32) -> (i32, i32) {
    %c0_i32 = arith.constant 0 : i32
    %c0_i32_0 = arith.constant 0 : i32
    %c0_i32_1 = arith.constant 0 : i32
    return %c0_i32, %c0_i32_0 : i32, i32
  }
  func.func @transform_5(%arg0: i32) -> (i32, i32) {
    %c0_i32 = arith.constant 0 : i32
    %c0_i32_0 = arith.constant 0 : i32
    %c0_i32_1 = arith.constant 0 : i32
    return %c0_i32, %c0_i32_0 : i32, i32
  }
  func.func @transform_6(%arg0: i32) -> (i32, i32) {
    %c0_i32 = arith.constant 0 : i32
    %c0_i32_0 = arith.constant 0 : i32
    %c0_i32_1 = arith.constant 0 : i32
    return %c0_i32, %c0_i32_0 : i32, i32
  }
  func.func @transform_7(%arg0: i32) -> (i32, i32) {
    %c0_i32 = arith.constant 0 : i32
    %c0_i32_0 = arith.constant 0 : i32
    %c0_i32_1 = arith.constant 0 : i32
    return %c0_i32, %c0_i32_0 : i32, i32
  }
  func.func @transform_8(%arg0: i32) -> (i32, i32) {
    %c0_i32 = arith.constant 0 : i32
    %c0_i32_0 = arith.constant 0 : i32
    %c0_i32_1 = arith.constant 0 : i32
    return %c0_i32, %c0_i32_0 : i32, i32
  }
  func.func @transform_9(%arg0: i32) -> (i32, i32) {
    %c0_i32 = arith.constant 0 : i32
    %c0_i32_0 = arith.constant 0 : i32
    %c0_i32_1 = arith.constant 0 : i32
    return %c0_i32, %c0_i32_0 : i32, i32
  }
  func.func @transform_10(%arg0: i32) -> (i32, i32) {
    %c0_i32 = arith.constant 0 : i32
    %c0_i32_0 = arith.constant 0 : i32
    %c0_i32_1 = arith.constant 0 : i32
    return %c0_i32, %c0_i32_0 : i32, i32
  }
  func.func @transform_11(%arg0: i32) -> (i32, i32) {
    %c0_i32 = arith.constant 0 : i32
    %c0_i32_0 = arith.constant 0 : i32
    %c0_i32_1 = arith.constant 0 : i32
    return %c0_i32, %c0_i32_0 : i32, i32
  }
  func.func @transform_12(%arg0: i32) -> (i32, i32) {
    %c0_i32 = arith.constant 0 : i32
    %c0_i32_0 = arith.constant 0 : i32
    %c0_i32_1 = arith.constant 0 : i32
    return %c0_i32, %c0_i32_0 : i32, i32
  }
  func.func @transform_13(%arg0: i32) -> (i32, i32) {
    %c0_i32 = arith.constant 0 : i32
    %c0_i32_0 = arith.constant 0 : i32
    %c0_i32_1 = arith.constant 0 : i32
    return %c0_i32, %c0_i32_0 : i32, i32
  }
  func.func @transform_14(%arg0: i32) -> (i32, i32) {
    %c0_i32 = arith.constant 0 : i32
    %c0_i32_0 = arith.constant 0 : i32
    return %arg0, %c0_i32 : i32, i32
  }
  func.func @transform_15(%arg0: i32) -> (i32, i32) {
    %c0_i32 = arith.constant 0 : i32
    %c0_i32_0 = arith.constant 0 : i32
    return %arg0, %c0_i32 : i32, i32
  }
  func.func @transform_16(%arg0: i32) -> (i32, i32) {
    %c0_i32 = arith.constant 0 : i32
    %c0_i32_0 = arith.constant 0 : i32
    return %arg0, %c0_i32 : i32, i32
  }
}

</mosaic_0001>

<llo_original>
// kernel: rnn_ha_forward.1
$region0: #{rnn_ha_forward.1}
  #allocation0 [shape = 'u32[]', space=smem, size = 0x4, offset = 0x4, fixed_abs, tag = 'smem constant byte address 0x4 - core index']
  #allocation1 [shape = 'u32[72,128]{1,0:T(1,128)}', space=vmem, size = 0x9000, scoped, tag = 'internal scratch']
  %s0 = inlined_call_operand.vmem [shape: bf16[8,56,256], index: 0, kind: input, shape index: {}]
  %s1 = inlined_call_operand.vmem [shape: f32[8,128], index: 1, kind: input, shape index: {}]
  %s2 = inlined_call_operand.vmem [shape: bf16[256,384], index: 2, kind: input, shape index: {}]
  %s3 = inlined_call_operand.vmem [shape: bf16[128,384], index: 3, kind: input, shape index: {}]
  %s4 = inlined_call_operand.vmem [shape: f32[1,384], index: 4, kind: input, shape index: {}]
  %s5 = inlined_call_operand.vmem [shape: f32[1,384], index: 5, kind: input, shape index: {}]
  %s6 = inlined_call_operand.vmem [shape: bf16[128,128], index: 6, kind: input, shape index: {}]
  %s7 = inlined_call_operand.vmem [shape: f32[1,128], index: 7, kind: input, shape index: {}]
  %s8 = inlined_call_operand.vmem [shape: bf16[128,128], index: 8, kind: input, shape index: {}]
  %s9 = inlined_call_operand.vmem [shape: f32[1,128], index: 9, kind: input, shape index: {}]
  %s10 = inlined_call_operand.vmem [shape: bf16[128,128], index: 10, kind: input, shape index: {}]
  %s11 = inlined_call_operand.vmem [shape: f32[1,128], index: 11, kind: input, shape index: {}]
  %s12 = inlined_call_operand.vmem [shape: bf16[128,256], index: 12, kind: input, shape index: {}]
  %s13 = inlined_call_operand.vmem [shape: f32[1,256], index: 13, kind: input, shape index: {}]
  %s14 = inlined_call_operand.vmem [shape: f32[8,128], index: 14, kind: output, shape index: {0}]
  %s15 = inlined_call_operand.vmem [shape: f32[8,128], index: 15, kind: output, shape index: {1}]
  %s16 = inlined_call_operand.vmem [shape: f32[8,128], index: 16, kind: output, shape index: {2}]
  %17 = xla_tuple %s14, %s15, %s16
  %s18 = sld [smem:[#allocation0]]
  $region82: #{rnn_ha_forward.1} parent=0
    _
  %s20 = ssub.s32 1, %s18
  %s21 = scalar_select 0, %s20, %s18
  // Predicated region
  $region2: #{rnn_ha_forward.1} parent=0 // pred_check
    _
  $region3: #{rnn_ha_forward.1} parent=0 // pred_check_branch
    %23 = sbr.rel (0) target = $region5
  $region4: #{rnn_ha_forward.1} parent=0 // pred_region
    _
  $region5: #{rnn_ha_forward.1} parent=0 // pred_fallthru
    _
  // Predicated region
  $region6: #{rnn_ha_forward.1} parent=0 // pred_check
    _
  $region7: #{rnn_ha_forward.1} parent=0 // pred_check_branch
    %25 = sbr.rel (0) target = $region9
  $region8: #{rnn_ha_forward.1} parent=0 // pred_region
    _
  $region9: #{rnn_ha_forward.1} parent=0 // pred_fallthru
    _
  // Predicated region
  $region10: #{rnn_ha_forward.1} parent=0 // pred_check
    _
  $region11: #{rnn_ha_forward.1} parent=0 // pred_check_branch
    %27 = sbr.rel (0) target = $region13
  $region12: #{rnn_ha_forward.1} parent=0 // pred_region
    _
  $region13: #{rnn_ha_forward.1} parent=0 // pred_fallthru
    _
  // Predicated region
  $region14: #{rnn_ha_forward.1} parent=0 // pred_check
    _
  $region15: #{rnn_ha_forward.1} parent=0 // pred_check_branch
    %29 = sbr.rel (0) target = $region17
  $region16: #{rnn_ha_forward.1} parent=0 // pred_region
    _
  $region17: #{rnn_ha_forward.1} parent=0 // pred_fallthru
    _
  // Predicated region
  $region18: #{rnn_ha_forward.1} parent=0 // pred_check
    _
  $region19: #{rnn_ha_forward.1} parent=0 // pred_check_branch
    %31 = sbr.rel (0) target = $region21
  $region20: #{rnn_ha_forward.1} parent=0 // pred_region
    _
  $region21: #{rnn_ha_forward.1} parent=0 // pred_fallthru
    _
  // Predicated region
  $region22: #{rnn_ha_forward.1} parent=0 // pred_check
    _
  $region23: #{rnn_ha_forward.1} parent=0 // pred_check_branch
    %33 = sbr.rel (0) target = $region25
  $region24: #{rnn_ha_forward.1} parent=0 // pred_region
    _
  $region25: #{rnn_ha_forward.1} parent=0 // pred_fallthru
    _
  // Predicated region
  $region26: #{rnn_ha_forward.1} parent=0 // pred_check
    _
  $region27: #{rnn_ha_forward.1} parent=0 // pred_check_branch
    %35 = sbr.rel (0) target = $region29
  $region28: #{rnn_ha_forward.1} parent=0 // pred_region
    _
  $region29: #{rnn_ha_forward.1} parent=0 // pred_fallthru
    _
  // Predicated region
  $region30: #{rnn_ha_forward.1} parent=0 // pred_check
    _
  $region31: #{rnn_ha_forward.1} parent=0 // pred_check_branch
    %37 = sbr.rel (0) target = $region33
  $region32: #{rnn_ha_forward.1} parent=0 // pred_region
    _
  $region33: #{rnn_ha_forward.1} parent=0 // pred_fallthru
    _
  // Predicated region
  $region34: #{rnn_ha_forward.1} parent=0 // pred_check
    _
  $region35: #{rnn_ha_forward.1} parent=0 // pred_check_branch
    %39 = sbr.rel (0) target = $region37
  $region36: #{rnn_ha_forward.1} parent=0 // pred_region
    _
  $region37: #{rnn_ha_forward.1} parent=0 // pred_fallthru
    _
  // Predicated region
  $region38: #{rnn_ha_forward.1} parent=0 // pred_check
    _
  $region39: #{rnn_ha_forward.1} parent=0 // pred_check_branch
    %41 = sbr.rel (0) target = $region41
  $region40: #{rnn_ha_forward.1} parent=0 // pred_region
    _
  $region41: #{rnn_ha_forward.1} parent=0 // pred_fallthru
    _
  // Predicated region
  $region42: #{rnn_ha_forward.1} parent=0 // pred_check
    _
  $region43: #{rnn_ha_forward.1} parent=0 // pred_check_branch
    %43 = sbr.rel (0) target = $region45
  $region44: #{rnn_ha_forward.1} parent=0 // pred_region
    _
  $region45: #{rnn_ha_forward.1} parent=0 // pred_fallthru
    _
  // Predicated region
  $region46: #{rnn_ha_forward.1} parent=0 // pred_check
    _
  $region47: #{rnn_ha_forward.1} parent=0 // pred_check_branch
    %45 = sbr.rel (0) target = $region49
  $region48: #{rnn_ha_forward.1} parent=0 // pred_region
    _
  $region49: #{rnn_ha_forward.1} parent=0 // pred_fallthru
    _
  // Predicated region
  $region50: #{rnn_ha_forward.1} parent=0 // pred_check
    _
  $region51: #{rnn_ha_forward.1} parent=0 // pred_check_branch
    %47 = sbr.rel (0) target = $region53
  $region52: #{rnn_ha_forward.1} parent=0 // pred_region
    _
  $region53: #{rnn_ha_forward.1} parent=0 // pred_fallthru
    _
  // Predicated region
  $region54: #{rnn_ha_forward.1} parent=0 // pred_check
    _
  $region55: #{rnn_ha_forward.1} parent=0 // pred_check_branch
    %49 = sbr.rel (0) target = $region57
  $region56: #{rnn_ha_forward.1} parent=0 // pred_region
    _
  $region57: #{rnn_ha_forward.1} parent=0 // pred_fallthru
    _
  %v50 = vld [vmem:[%s0] sm:$0xff]
  %v51 = vld [vmem:[%s0 + $0x8] sm:$0xff]
  %v52 = vld [vmem:[%s0 + $0x10] sm:$0xff]
  %v53 = vld [vmem:[%s0 + $0x18] sm:$0xff]
  %v54 = vld [vmem:[%s0 + $0x20] sm:$0xff]
  %v55 = vld [vmem:[%s0 + $0x28] sm:$0xff]
  %v56 = vld [vmem:[%s0 + $0x30] sm:$0xff]
  %v57 = vld [vmem:[%s0 + $0x38] sm:$0xff]
  %v58 = vld [vmem:[%s0 + $0x40] sm:$0xff]
  %v59 = vld [vmem:[%s0 + $0x48] sm:$0xff]
  %v60 = vld [vmem:[%s0 + $0x50] sm:$0xff]
  %v61 = vld [vmem:[%s0 + $0x58] sm:$0xff]
  %v62 = vld [vmem:[%s0 + $0x60] sm:$0xff]
  %v63 = vld [vmem:[%s0 + $0x68] sm:$0xff]
  %v64 = vld [vmem:[%s0 + $0x70] sm:$0xff]
  %v65 = vld [vmem:[%s0 + $0x78] sm:$0xff]
  %v66 = vld [vmem:[%s0 + $0x80] sm:$0xff]
  %v67 = vld [vmem:[%s0 + $0x88] sm:$0xff]
  %v68 = vld [vmem:[%s0 + $0x90] sm:$0xff]
  %v69 = vld [vmem:[%s0 + $0x98] sm:$0xff]
  %v70 = vld [vmem:[%s0 + $0xa0] sm:$0xff]
  %v71 = vld [vmem:[%s0 + $0xa8] sm:$0xff]
  %v72 = vld [vmem:[%s0 + $0xb0] sm:$0xff]
  %v73 = vld [vmem:[%s0 + $0xb8] sm:$0xff]
  %v74 = vld [vmem:[%s0 + $0xc0] sm:$0xff]
  %v75 = vld [vmem:[%s0 + $0xc8] sm:$0xff]
  %v76 = vld [vmem:[%s0 + $0xd0] sm:$0xff]
  %v77 = vld [vmem:[%s0 + $0xd8] sm:$0xff]
  %v78 = vld [vmem:[%s0 + $0xe0] sm:$0xff]
  %v79 = vld [vmem:[%s0 + $0xe8] sm:$0xff]
  %v80 = vld [vmem:[%s0 + $0xf0] sm:$0xff]
  %v81 = vld [vmem:[%s0 + $0xf8] sm:$0xff]
  %v82 = vld [vmem:[%s0 + $0x100] sm:$0xff]
  %v83 = vld [vmem:[%s0 + $0x108] sm:$0xff]
  %v84 = vld [vmem:[%s0 + $0x110] sm:$0xff]
  %v85 = vld [vmem:[%s0 + $0x118] sm:$0xff]
  %v86 = vld [vmem:[%s0 + $0x120] sm:$0xff]
  %v87 = vld [vmem:[%s0 + $0x128] sm:$0xff]
  %v88 = vld [vmem:[%s0 + $0x130] sm:$0xff]
  %v89 = vld [vmem:[%s0 + $0x138] sm:$0xff]
  %v90 = vld [vmem:[%s0 + $0x140] sm:$0xff]
  %v91 = vld [vmem:[%s0 + $0x148] sm:$0xff]
  %v92 = vld [vmem:[%s0 + $0x150] sm:$0xff]
  %v93 = vld [vmem:[%s0 + $0x158] sm:$0xff]
  %v94 = vld [vmem:[%s0 + $0x160] sm:$0xff]
  %v95 = vld [vmem:[%s0 + $0x168] sm:$0xff]
  %v96 = vld [vmem:[%s0 + $0x170] sm:$0xff]
  %v97 = vld [vmem:[%s0 + $0x178] sm:$0xff]
  %v98 = vld [vmem:[%s0 + $0x180] sm:$0xff]
  %v99 = vld [vmem:[%s0 + $0x188] sm:$0xff]
  %v100 = vld [vmem:[%s0 + $0x190] sm:$0xff]
  %v101 = vld [vmem:[%s0 + $0x198] sm:$0xff]
  %v102 = vld [vmem:[%s0 + $0x1a0] sm:$0xff]
  %v103 = vld [vmem:[%s0 + $0x1a8] sm:$0xff]
  %v104 = vld [vmem:[%s0 + $0x1b0] sm:$0xff]
  %v105 = vld [vmem:[%s0 + $0x1b8] sm:$0xff]
  %v106 = vunpack.c.l.bf16 %v50
  %v107 = vunpack.c.h.bf16 %v50
  %v108 = vunpack.c.l.bf16 %v51
  %v109 = vunpack.c.h.bf16 %v51
  %v110 = vunpack.c.l.bf16 %v52
  %v111 = vunpack.c.h.bf16 %v52
  %v112 = vunpack.c.l.bf16 %v53
  %v113 = vunpack.c.h.bf16 %v53
  %v114 = vunpack.c.l.bf16 %v54
  %v115 = vunpack.c.h.bf16 %v54
  %v116 = vunpack.c.l.bf16 %v55
  %v117 = vunpack.c.h.bf16 %v55
  %v118 = vunpack.c.l.bf16 %v56
  %v119 = vunpack.c.h.bf16 %v56
  %v120 = vunpack.c.l.bf16 %v57
  %v121 = vunpack.c.h.bf16 %v57
  %v122 = vunpack.c.l.bf16 %v58
  %v123 = vunpack.c.h.bf16 %v58
  %v124 = vunpack.c.l.bf16 %v59
  %v125 = vunpack.c.h.bf16 %v59
  %v126 = vunpack.c.l.bf16 %v60
  %v127 = vunpack.c.h.bf16 %v60
  %v128 = vunpack.c.l.bf16 %v61
  %v129 = vunpack.c.h.bf16 %v61
  %v130 = vunpack.c.l.bf16 %v62
  %v131 = vunpack.c.h.bf16 %v62
  %v132 = vunpack.c.l.bf16 %v63
  %v133 = vunpack.c.h.bf16 %v63
  %v134 = vunpack.c.l.bf16 %v64
  %v135 = vunpack.c.h.bf16 %v64
  %v136 = vunpack.c.l.bf16 %v65
  %v137 = vunpack.c.h.bf16 %v65
  %v138 = vunpack.c.l.bf16 %v66
  %v139 = vunpack.c.h.bf16 %v66
  %v140 = vunpack.c.l.bf16 %v67
  %v141 = vunpack.c.h.bf16 %v67
  %v142 = vunpack.c.l.bf16 %v68
  %v143 = vunpack.c.h.bf16 %v68
  %v144 = vunpack.c.l.bf16 %v69
  %v145 = vunpack.c.h.bf16 %v69
  %v146 = vunpack.c.l.bf16 %v70
  %v147 = vunpack.c.h.bf16 %v70
  %v148 = vunpack.c.l.bf16 %v71
  %v149 = vunpack.c.h.bf16 %v71
  %v150 = vunpack.c.l.bf16 %v72
  %v151 = vunpack.c.h.bf16 %v72
  %v152 = vunpack.c.l.bf16 %v73
  %v153 = vunpack.c.h.bf16 %v73
  %v154 = vunpack.c.l.bf16 %v74
  %v155 = vunpack.c.h.bf16 %v74
  %v156 = vunpack.c.l.bf16 %v75
  %v157 = vunpack.c.h.bf16 %v75
  %v158 = vunpack.c.l.bf16 %v76
  %v159 = vunpack.c.h.bf16 %v76
  %v160 = vunpack.c.l.bf16 %v77
  %v161 = vunpack.c.h.bf16 %v77
  %v162 = vunpack.c.l.bf16 %v78
  %v163 = vunpack.c.h.bf16 %v78
  %v164 = vunpack.c.l.bf16 %v79
  %v165 = vunpack.c.h.bf16 %v79
  %v166 = vunpack.c.l.bf16 %v80
  %v167 = vunpack.c.h.bf16 %v80
  %v168 = vunpack.c.l.bf16 %v81
  %v169 = vunpack.c.h.bf16 %v81
  %v170 = vunpack.c.l.bf16 %v82
  %v171 = vunpack.c.h.bf16 %v82
  %v172 = vunpack.c.l.bf16 %v83
  %v173 = vunpack.c.h.bf16 %v83
  %v174 = vunpack.c.l.bf16 %v84
  %v175 = vunpack.c.h.bf16 %v84
  %v176 = vunpack.c.l.bf16 %v85
  %v177 = vunpack.c.h.bf16 %v85
  %v178 = vunpack.c.l.bf16 %v86
  %v179 = vunpack.c.h.bf16 %v86
  %v180 = vunpack.c.l.bf16 %v87
  %v181 = vunpack.c.h.bf16 %v87
  %v182 = vunpack.c.l.bf16 %v88
  %v183 = vunpack.c.h.bf16 %v88
  %v184 = vunpack.c.l.bf16 %v89
  %v185 = vunpack.c.h.bf16 %v89
  %v186 = vunpack.c.l.bf16 %v90
  %v187 = vunpack.c.h.bf16 %v90
  %v188 = vunpack.c.l.bf16 %v91
  %v189 = vunpack.c.h.bf16 %v91
  %v190 = vunpack.c.l.bf16 %v92
  %v191 = vunpack.c.h.bf16 %v92
  %v192 = vunpack.c.l.bf16 %v93
  %v193 = vunpack.c.h.bf16 %v93
  %v194 = vunpack.c.l.bf16 %v94
  %v195 = vunpack.c.h.bf16 %v94
  %v196 = vunpack.c.l.bf16 %v95
  %v197 = vunpack.c.h.bf16 %v95
  %v198 = vunpack.c.l.bf16 %v96
  %v199 = vunpack.c.h.bf16 %v96
  %v200 = vunpack.c.l.bf16 %v97
  %v201 = vunpack.c.h.bf16 %v97
  %v202 = vunpack.c.l.bf16 %v98
  %v203 = vunpack.c.h.bf16 %v98
  %v204 = vunpack.c.l.bf16 %v99
  %v205 = vunpack.c.h.bf16 %v99
  %v206 = vunpack.c.l.bf16 %v100
  %v207 = vunpack.c.h.bf16 %v100
  %v208 = vunpack.c.l.bf16 %v101
  %v209 = vunpack.c.h.bf16 %v101
  %v210 = vunpack.c.l.bf16 %v102
  %v211 = vunpack.c.h.bf16 %v102
  %v212 = vunpack.c.l.bf16 %v103
  %v213 = vunpack.c.h.bf16 %v103
  %v214 = vunpack.c.l.bf16 %v104
  %v215 = vunpack.c.h.bf16 %v104
  %v216 = vunpack.c.l.bf16 %v105
  %v217 = vunpack.c.h.bf16 %v105
  %v218 = vld [vmem:[%s1] sm:$0xff]
  %v219 = vld [vmem:[%s2] sm:$0xff]
  %v220 = vld [vmem:[%s2 + $0x8] sm:$0xf]
  %v221 = vld [vmem:[%s2 + $0xc] sm:$0xff]
  %v222 = vld [vmem:[%s2 + $0x14] sm:$0xf]
  %v223 = vld [vmem:[%s2 + $0x18] sm:$0xff]
  %v224 = vld [vmem:[%s2 + $0x20] sm:$0xf]
  %v225 = vld [vmem:[%s2 + $0x24] sm:$0xff]
  %v226 = vld [vmem:[%s2 + $0x2c] sm:$0xf]
  %v227 = vld [vmem:[%s2 + $0x30] sm:$0xff]
  %v228 = vld [vmem:[%s2 + $0x38] sm:$0xf]
  %v229 = vld [vmem:[%s2 + $0x3c] sm:$0xff]
  %v230 = vld [vmem:[%s2 + $0x44] sm:$0xf]
  %v231 = vld [vmem:[%s2 + $0x48] sm:$0xff]
  %v232 = vld [vmem:[%s2 + $0x50] sm:$0xf]
  %v233 = vld [vmem:[%s2 + $0x54] sm:$0xff]
  %v234 = vld [vmem:[%s2 + $0x5c] sm:$0xf]
  %v235 = vld [vmem:[%s2 + $0x60] sm:$0xff]
  %v236 = vld [vmem:[%s2 + $0x68] sm:$0xf]
  %v237 = vld [vmem:[%s2 + $0x6c] sm:$0xff]
  %v238 = vld [vmem:[%s2 + $0x74] sm:$0xf]
  %v239 = vld [vmem:[%s2 + $0x78] sm:$0xff]
  %v240 = vld [vmem:[%s2 + $0x80] sm:$0xf]
  %v241 = vld [vmem:[%s2 + $0x84] sm:$0xff]
  %v242 = vld [vmem:[%s2 + $0x8c] sm:$0xf]
  %v243 = vld [vmem:[%s2 + $0x90] sm:$0xff]
  %v244 = vld [vmem:[%s2 + $0x98] sm:$0xf]
  %v245 = vld [vmem:[%s2 + $0x9c] sm:$0xff]
  %v246 = vld [vmem:[%s2 + $0xa4] sm:$0xf]
  %v247 = vld [vmem:[%s2 + $0xa8] sm:$0xff]
  %v248 = vld [vmem:[%s2 + $0xb0] sm:$0xf]
  %v249 = vld [vmem:[%s2 + $0xb4] sm:$0xff]
  %v250 = vld [vmem:[%s2 + $0xbc] sm:$0xf]
  %v251 = vld [vmem:[%s2 + $0xc0] sm:$0xff]
  %v252 = vld [vmem:[%s2 + $0xc8] sm:$0xf]
  %v253 = vld [vmem:[%s2 + $0xcc] sm:$0xff]
  %v254 = vld [vmem:[%s2 + $0xd4] sm:$0xf]
  %v255 = vld [vmem:[%s2 + $0xd8] sm:$0xff]
  %v256 = vld [vmem:[%s2 + $0xe0] sm:$0xf]
  %v257 = vld [vmem:[%s2 + $0xe4] sm:$0xff]
  %v258 = vld [vmem:[%s2 + $0xec] sm:$0xf]
  %v259 = vld [vmem:[%s2 + $0xf0] sm:$0xff]
  %v260 = vld [vmem:[%s2 + $0xf8] sm:$0xf]
  %v261 = vld [vmem:[%s2 + $0xfc] sm:$0xff]
  %v262 = vld [vmem:[%s2 + $0x104] sm:$0xf]
  %v263 = vld [vmem:[%s2 + $0x108] sm:$0xff]
  %v264 = vld [vmem:[%s2 + $0x110] sm:$0xf]
  %v265 = vld [vmem:[%s2 + $0x114] sm:$0xff]
  %v266 = vld [vmem:[%s2 + $0x11c] sm:$0xf]
  %v267 = vld [vmem:[%s2 + $0x120] sm:$0xff]
  %v268 = vld [vmem:[%s2 + $0x128] sm:$0xf]
  %v269 = vld [vmem:[%s2 + $0x12c] sm:$0xff]
  %v270 = vld [vmem:[%s2 + $0x134] sm:$0xf]
  %v271 = vld [vmem:[%s2 + $0x138] sm:$0xff]
  %v272 = vld [vmem:[%s2 + $0x140] sm:$0xf]
  %v273 = vld [vmem:[%s2 + $0x144] sm:$0xff]
  %v274 = vld [vmem:[%s2 + $0x14c] sm:$0xf]
  %v275 = vld [vmem:[%s2 + $0x150] sm:$0xff]
  %v276 = vld [vmem:[%s2 + $0x158] sm:$0xf]
  %v277 = vld [vmem:[%s2 + $0x15c] sm:$0xff]
  %v278 = vld [vmem:[%s2 + $0x164] sm:$0xf]
  %v279 = vld [vmem:[%s2 + $0x168] sm:$0xff]
  %v280 = vld [vmem:[%s2 + $0x170] sm:$0xf]
  %v281 = vld [vmem:[%s2 + $0x174] sm:$0xff]
  %v282 = vld [vmem:[%s2 + $0x17c] sm:$0xf]
  %v283 = vld [vmem:[%s3] sm:$0xff]
  %v284 = vld [vmem:[%s3 + $0x8] sm:$0xf]
  %v285 = vld [vmem:[%s3 + $0xc] sm:$0xff]
  %v286 = vld [vmem:[%s3 + $0x14] sm:$0xf]
  %v287 = vld [vmem:[%s3 + $0x18] sm:$0xff]
  %v288 = vld [vmem:[%s3 + $0x20] sm:$0xf]
  %v289 = vld [vmem:[%s3 + $0x24] sm:$0xff]
  %v290 = vld [vmem:[%s3 + $0x2c] sm:$0xf]
  %v291 = vld [vmem:[%s3 + $0x30] sm:$0xff]
  %v292 = vld [vmem:[%s3 + $0x38] sm:$0xf]
  %v293 = vld [vmem:[%s3 + $0x3c] sm:$0xff]
  %v294 = vld [vmem:[%s3 + $0x44] sm:$0xf]
  %v295 = vld [vmem:[%s3 + $0x48] sm:$0xff]
  %v296 = vld [vmem:[%s3 + $0x50] sm:$0xf]
  %v297 = vld [vmem:[%s3 + $0x54] sm:$0xff]
  %v298 = vld [vmem:[%s3 + $0x5c] sm:$0xf]
  %v299 = vld [vmem:[%s3 + $0x60] sm:$0xff]
  %v300 = vld [vmem:[%s3 + $0x68] sm:$0xf]
  %v301 = vld [vmem:[%s3 + $0x6c] sm:$0xff]
  %v302 = vld [vmem:[%s3 + $0x74] sm:$0xf]
  %v303 = vld [vmem:[%s3 + $0x78] sm:$0xff]
  %v304 = vld [vmem:[%s3 + $0x80] sm:$0xf]
  %v305 = vld [vmem:[%s3 + $0x84] sm:$0xff]
  %v306 = vld [vmem:[%s3 + $0x8c] sm:$0xf]
  %v307 = vld [vmem:[%s3 + $0x90] sm:$0xff]
  %v308 = vld [vmem:[%s3 + $0x98] sm:$0xf]
  %v309 = vld [vmem:[%s3 + $0x9c] sm:$0xff]
  %v310 = vld [vmem:[%s3 + $0xa4] sm:$0xf]
  %v311 = vld [vmem:[%s3 + $0xa8] sm:$0xff]
  %v312 = vld [vmem:[%s3 + $0xb0] sm:$0xf]
  %v313 = vld [vmem:[%s3 + $0xb4] sm:$0xff]
  %v314 = vld [vmem:[%s3 + $0xbc] sm:$0xf]
  %v315 = vld [vmem:[%s4] sm:$0x7]
  %v316 = vld [vmem:[%s5] sm:$0x7]
  %v317 = vadd.f32 %v106, %v108
  %v318 = vadd.f32 %v317, %v110
  %v319 = vadd.f32 %v318, %v112
  %v320 = vadd.f32 %v319, %v114
  %v321 = vadd.f32 %v320, %v116
  %v322 = vadd.f32 %v321, %v118
  %v323 = vrot.slane %v322, 4
  %v324 = vadd.f32 %v322, %v323
  %v325 = vrot.slane %v324, 2
  %v326 = vadd.f32 %v324, %v325
  %v327 = vrot.slane %v326, 1
  %v328 = vadd.f32 %v326, %v327
  %v329 = vadd.f32 %v107, %v109
  %v330 = vadd.f32 %v329, %v111
  %v331 = vadd.f32 %v330, %v113
  %v332 = vadd.f32 %v331, %v115
  %v333 = vadd.f32 %v332, %v117
  %v334 = vadd.f32 %v333, %v119
  %v335 = vrot.slane %v334, 4
  %v336 = vadd.f32 %v334, %v335
  %v337 = vrot.slane %v336, 2
  %v338 = vadd.f32 %v336, %v337
  %v339 = vrot.slane %v338, 1
  %v340 = vadd.f32 %v338, %v339
  %v341 = vadd.f32 %v120, %v122
  %v342 = vadd.f32 %v341, %v124
  %v343 = vadd.f32 %v342, %v126
  %v344 = vadd.f32 %v343, %v128
  %v345 = vadd.f32 %v344, %v130
  %v346 = vadd.f32 %v345, %v132
  %v347 = vrot.slane %v346, 4
  %v348 = vadd.f32 %v346, %v347
  %v349 = vrot.slane %v348, 2
  %v350 = vadd.f32 %v348, %v349
  %v351 = vrot.slane %v350, 1
  %v352 = vadd.f32 %v350, %v351
  %v353 = vadd.f32 %v121, %v123
  %v354 = vadd.f32 %v353, %v125
  %v355 = vadd.f32 %v354, %v127
  %v356 = vadd.f32 %v355, %v129
  %v357 = vadd.f32 %v356, %v131
  %v358 = vadd.f32 %v357, %v133
  %v359 = vrot.slane %v358, 4
  %v360 = vadd.f32 %v358, %v359
  %v361 = vrot.slane %v360, 2
  %v362 = vadd.f32 %v360, %v361
  %v363 = vrot.slane %v362, 1
  %v364 = vadd.f32 %v362, %v363
  %v365 = vadd.f32 %v134, %v136
  %v366 = vadd.f32 %v365, %v138
  %v367 = vadd.f32 %v366, %v140
  %v368 = vadd.f32 %v367, %v142
  %v369 = vadd.f32 %v368, %v144
  %v370 = vadd.f32 %v369, %v146
  %v371 = vrot.slane %v370, 4
  %v372 = vadd.f32 %v370, %v371
  %v373 = vrot.slane %v372, 2
  %v374 = vadd.f32 %v372, %v373
  %v375 = vrot.slane %v374, 1
  %v376 = vadd.f32 %v374, %v375
  %v377 = vadd.f32 %v135, %v137
  %v378 = vadd.f32 %v377, %v139
  %v379 = vadd.f32 %v378, %v141
  %v380 = vadd.f32 %v379, %v143
  %v381 = vadd.f32 %v380, %v145
  %v382 = vadd.f32 %v381, %v147
  %v383 = vrot.slane %v382, 4
  %v384 = vadd.f32 %v382, %v383
  %v385 = vrot.slane %v384, 2
  %v386 = vadd.f32 %v384, %v385
  %v387 = vrot.slane %v386, 1
  %v388 = vadd.f32 %v386, %v387
  %v389 = vadd.f32 %v148, %v150
  %v390 = vadd.f32 %v389, %v152
  %v391 = vadd.f32 %v390, %v154
  %v392 = vadd.f32 %v391, %v156
  %v393 = vadd.f32 %v392, %v158
  %v394 = vadd.f32 %v393, %v160
  %v395 = vrot.slane %v394, 4
  %v396 = vadd.f32 %v394, %v395
  %v397 = vrot.slane %v396, 2
  %v398 = vadd.f32 %v396, %v397
  %v399 = vrot.slane %v398, 1
  %v400 = vadd.f32 %v398, %v399
  %v401 = vadd.f32 %v149, %v151
  %v402 = vadd.f32 %v401, %v153
  %v403 = vadd.f32 %v402, %v155
  %v404 = vadd.f32 %v403, %v157
  %v405 = vadd.f32 %v404, %v159
  %v406 = vadd.f32 %v405, %v161
  %v407 = vrot.slane %v406, 4
  %v408 = vadd.f32 %v406, %v407
  %v409 = vrot.slane %v408, 2
  %v410 = vadd.f32 %v408, %v409
  %v411 = vrot.slane %v410, 1
  %v412 = vadd.f32 %v410, %v411
  %v413 = vadd.f32 %v162, %v164
  %v414 = vadd.f32 %v413, %v166
  %v415 = vadd.f32 %v414, %v168
  %v416 = vadd.f32 %v415, %v170
  %v417 = vadd.f32 %v416, %v172
  %v418 = vadd.f32 %v417, %v174
  %v419 = vrot.slane %v418, 4
  %v420 = vadd.f32 %v418, %v419
  %v421 = vrot.slane %v420, 2
  %v422 = vadd.f32 %v420, %v421
  %v423 = vrot.slane %v422, 1
  %v424 = vadd.f32 %v422, %v423
  %v425 = vadd.f32 %v163, %v165
  %v426 = vadd.f32 %v425, %v167
  %v427 = vadd.f32 %v426, %v169
  %v428 = vadd.f32 %v427, %v171
  %v429 = vadd.f32 %v428, %v173
  %v430 = vadd.f32 %v429, %v175
  %v431 = vrot.slane %v430, 4
  %v432 = vadd.f32 %v430, %v431
  %v433 = vrot.slane %v432, 2
  %v434 = vadd.f32 %v432, %v433
  %v435 = vrot.slane %v434, 1
  %v436 = vadd.f32 %v434, %v435
  %v437 = vadd.f32 %v176, %v178
  %v438 = vadd.f32 %v437, %v180
  %v439 = vadd.f32 %v438, %v182
  %v440 = vadd.f32 %v439, %v184
  %v441 = vadd.f32 %v440, %v186
  %v442 = vadd.f32 %v441, %v188
  %v443 = vrot.slane %v442, 4
  %v444 = vadd.f32 %v442, %v443
  %v445 = vrot.slane %v444, 2
  %v446 = vadd.f32 %v444, %v445
  %v447 = vrot.slane %v446, 1
  %v448 = vadd.f32 %v446, %v447
  %v449 = vadd.f32 %v177, %v179
  %v450 = vadd.f32 %v449, %v181
  %v451 = vadd.f32 %v450, %v183
  %v452 = vadd.f32 %v451, %v185
  %v453 = vadd.f32 %v452, %v187
  %v454 = vadd.f32 %v453, %v189
  %v455 = vrot.slane %v454, 4
  %v456 = vadd.f32 %v454, %v455
  %v457 = vrot.slane %v456, 2
  %v458 = vadd.f32 %v456, %v457
  %v459 = vrot.slane %v458, 1
  %v460 = vadd.f32 %v458, %v459
  %v461 = vadd.f32 %v190, %v192
  %v462 = vadd.f32 %v461, %v194
  %v463 = vadd.f32 %v462, %v196
  %v464 = vadd.f32 %v463, %v198
  %v465 = vadd.f32 %v464, %v200
  %v466 = vadd.f32 %v465, %v202
  %v467 = vrot.slane %v466, 4
  %v468 = vadd.f32 %v466, %v467
  %v469 = vrot.slane %v468, 2
  %v470 = vadd.f32 %v468, %v469
  %v471 = vrot.slane %v470, 1
  %v472 = vadd.f32 %v470, %v471
  %v473 = vadd.f32 %v191, %v193
  %v474 = vadd.f32 %v473, %v195
  %v475 = vadd.f32 %v474, %v197
  %v476 = vadd.f32 %v475, %v199
  %v477 = vadd.f32 %v476, %v201
  %v478 = vadd.f32 %v477, %v203
  %v479 = vrot.slane %v478, 4
  %v480 = vadd.f32 %v478, %v479
  %v481 = vrot.slane %v480, 2
  %v482 = vadd.f32 %v480, %v481
  %v483 = vrot.slane %v482, 1
  %v484 = vadd.f32 %v482, %v483
  %v485 = vadd.f32 %v204, %v206
  %v486 = vadd.f32 %v485, %v208
  %v487 = vadd.f32 %v486, %v210
  %v488 = vadd.f32 %v487, %v212
  %v489 = vadd.f32 %v488, %v214
  %v490 = vadd.f32 %v489, %v216
  %v491 = vrot.slane %v490, 4
  %v492 = vadd.f32 %v490, %v491
  %v493 = vrot.slane %v492, 2
  %v494 = vadd.f32 %v492, %v493
  %v495 = vrot.slane %v494, 1
  %v496 = vadd.f32 %v494, %v495
  %v497 = vadd.f32 %v205, %v207
  %v498 = vadd.f32 %v497, %v209
  %v499 = vadd.f32 %v498, %v211
  %v500 = vadd.f32 %v499, %v213
  %v501 = vadd.f32 %v500, %v215
  %v502 = vadd.f32 %v501, %v217
  %v503 = vrot.slane %v502, 4
  %v504 = vadd.f32 %v502, %v503
  %v505 = vrot.slane %v504, 2
  %v506 = vadd.f32 %v504, %v505
  %v507 = vrot.slane %v506, 1
  %v508 = vadd.f32 %v506, %v507
  %v509 = vmul.f32 %v328, 0.020408163
  %v510 = vmul.f32 %v340, 0.020408163
  %v511 = vmul.f32 %v352, 0.020408163
  %v512 = vmul.f32 %v364, 0.020408163
  %v513 = vmul.f32 %v376, 0.020408163
  %v514 = vmul.f32 %v388, 0.020408163
  %v515 = vmul.f32 %v400, 0.020408163
  %v516 = vmul.f32 %v412, 0.020408163
  %v517 = vmul.f32 %v424, 0.020408163
  %v518 = vmul.f32 %v436, 0.020408163
  %v519 = vmul.f32 %v448, 0.020408163
  %v520 = vmul.f32 %v460, 0.020408163
  %v521 = vmul.f32 %v472, 0.020408163
  %v522 = vmul.f32 %v484, 0.020408163
  %v523 = vmul.f32 %v496, 0.020408163
  %v524 = vmul.f32 %v508, 0.020408163
  %v525 = vpack.c.bf16 %v509, %v509
  %v526 = vpack.c.bf16 %v510, %v510
  %v527 = vpack.c.bf16 %v511, %v511
  %v528 = vpack.c.bf16 %v512, %v512
  %v529 = vpack.c.bf16 %v513, %v513
  %v530 = vpack.c.bf16 %v514, %v514
  %v531 = vpack.c.bf16 %v515, %v515
  %v532 = vpack.c.bf16 %v516, %v516
  %v533 = vpack.c.bf16 %v517, %v517
  %v534 = vpack.c.bf16 %v518, %v518
  %v535 = vpack.c.bf16 %v519, %v519
  %v536 = vpack.c.bf16 %v520, %v520
  %v537 = vpack.c.bf16 %v521, %v521
  %v538 = vpack.c.bf16 %v522, %v522
  %v539 = vpack.c.bf16 %v523, %v523
  %v540 = vpack.c.bf16 %v524, %v524
  %v542 = vperm.slane %v315, 0
  %v543 = vperm.slane %v315, 1
  %v544 = vperm.slane %v315, 2
  %v564 = vunpack.c.l.b16 %v525
  %v565 = vunpack.c.l.b16 %v526
  %v566 = vunpack.c.l.b16 %v527
  %v567 = vunpack.c.l.b16 %v528
  %v568 = vunpack.c.l.b16 %v529
  %v569 = vunpack.c.l.b16 %v530
  %v570 = vunpack.c.l.b16 %v531
  %v571 = vunpack.c.l.b16 %v532
  %v572 = vunpack.c.l.b16 %v533
  %v573 = vunpack.c.l.b16 %v534
  %v574 = vunpack.c.l.b16 %v535
  %v575 = vunpack.c.l.b16 %v536
  %v576 = vunpack.c.l.b16 %v537
  %v577 = vunpack.c.l.b16 %v538
  %v578 = vunpack.c.l.b16 %v539
  %v579 = vunpack.c.l.b16 %v540
  %vm580 = vcmask 1041409
  %v581 = vsel %vm580, %v566, %v564
  %vm582 = vcmask 1042434
  %v583 = vsel %vm582, %v568, %v581
  %vm584 = vcmask 1043459
  %v585 = vsel %vm584, %v570, %v583
  %vm586 = vcmask 1044484
  %v587 = vsel %vm586, %v572, %v585
  %vm588 = vcmask 1045509
  %v589 = vsel %vm588, %v574, %v587
  %vm590 = vcmask 1046534
  %v591 = vsel %vm590, %v576, %v589
  %vm592 = vcmask 1047559
  %v593 = vsel %vm592, %v578, %v591
  %v594 = vsel %vm580, %v567, %v565
  %v595 = vsel %vm582, %v569, %v594
  %v596 = vsel %vm584, %v571, %v595
  %v597 = vsel %vm586, %v573, %v596
  %v598 = vsel %vm588, %v575, %v597
  %v599 = vsel %vm590, %v577, %v598
  %v600 = vsel %vm592, %v579, %v599
  %v601 = vpack.c.b16 %v593, %v593
  %v602 = vpack.c.b16 %v600, %v600
  %v669 = vunpack.c.l.b16 %v219
  %v670 = vunpack.c.h.b16 %v219
  %v671 = vunpack.c.l.b16 %v220
  %v672 = vunpack.c.l.b16 %v221
  %v673 = vunpack.c.h.b16 %v221
  %v674 = vunpack.c.l.b16 %v222
  %v675 = vunpack.c.l.b16 %v223
  %v676 = vunpack.c.h.b16 %v223
  %v677 = vunpack.c.l.b16 %v224
  %v678 = vunpack.c.l.b16 %v225
  %v679 = vunpack.c.h.b16 %v225
  %v680 = vunpack.c.l.b16 %v226
  %v681 = vunpack.c.l.b16 %v227
  %v682 = vunpack.c.h.b16 %v227
  %v683 = vunpack.c.l.b16 %v228
  %v684 = vunpack.c.l.b16 %v229
  %v685 = vunpack.c.h.b16 %v229
  %v686 = vunpack.c.l.b16 %v230
  %v687 = vunpack.c.l.b16 %v231
  %v688 = vunpack.c.h.b16 %v231
  %v689 = vunpack.c.l.b16 %v232
  %v690 = vunpack.c.l.b16 %v233
  %v691 = vunpack.c.h.b16 %v233
  %v692 = vunpack.c.l.b16 %v234
  %v693 = vunpack.c.l.b16 %v235
  %v694 = vunpack.c.h.b16 %v235
  %v695 = vunpack.c.l.b16 %v236
  %v696 = vunpack.c.l.b16 %v237
  %v697 = vunpack.c.h.b16 %v237
  %v698 = vunpack.c.l.b16 %v238
  %v699 = vunpack.c.l.b16 %v239
  %v700 = vunpack.c.h.b16 %v239
  %v701 = vunpack.c.l.b16 %v240
  %v702 = vunpack.c.l.b16 %v241
  %v703 = vunpack.c.h.b16 %v241
  %v704 = vunpack.c.l.b16 %v242
  %v705 = vunpack.c.l.b16 %v243
  %v706 = vunpack.c.h.b16 %v243
  %v707 = vunpack.c.l.b16 %v244
  %v708 = vunpack.c.l.b16 %v245
  %v709 = vunpack.c.h.b16 %v245
  %v710 = vunpack.c.l.b16 %v246
  %v711 = vunpack.c.l.b16 %v247
  %v712 = vunpack.c.h.b16 %v247
  %v713 = vunpack.c.l.b16 %v248
  %v714 = vunpack.c.l.b16 %v249
  %v715 = vunpack.c.h.b16 %v249
  %v716 = vunpack.c.l.b16 %v250
  %v717 = vunpack.c.l.b16 %v251
  %v718 = vunpack.c.h.b16 %v251
  %v719 = vunpack.c.l.b16 %v252
  %v720 = vunpack.c.l.b16 %v253
  %v721 = vunpack.c.h.b16 %v253
  %v722 = vunpack.c.l.b16 %v254
  %v723 = vunpack.c.l.b16 %v255
  %v724 = vunpack.c.h.b16 %v255
  %v725 = vunpack.c.l.b16 %v256
  %v726 = vunpack.c.l.b16 %v257
  %v727 = vunpack.c.h.b16 %v257
  %v728 = vunpack.c.l.b16 %v258
  %v729 = vunpack.c.l.b16 %v259
  %v730 = vunpack.c.h.b16 %v259
  %v731 = vunpack.c.l.b16 %v260
  %v732 = vunpack.c.l.b16 %v261
  %v733 = vunpack.c.h.b16 %v261
  %v734 = vunpack.c.l.b16 %v262
  %v735 = vunpack.c.l.b16 %v263
  %v736 = vunpack.c.h.b16 %v263
  %v737 = vunpack.c.l.b16 %v264
  %v738 = vunpack.c.l.b16 %v265
  %v739 = vunpack.c.h.b16 %v265
  %v740 = vunpack.c.l.b16 %v266
  %v741 = vunpack.c.l.b16 %v267
  %v742 = vunpack.c.h.b16 %v267
  %v743 = vunpack.c.l.b16 %v268
  %v744 = vunpack.c.l.b16 %v269
  %v745 = vunpack.c.h.b16 %v269
  %v746 = vunpack.c.l.b16 %v270
  %v747 = vunpack.c.l.b16 %v271
  %v748 = vunpack.c.h.b16 %v271
  %v749 = vunpack.c.l.b16 %v272
  %v750 = vunpack.c.l.b16 %v273
  %v751 = vunpack.c.h.b16 %v273
  %v752 = vunpack.c.l.b16 %v274
  %v753 = vunpack.c.l.b16 %v275
  %v754 = vunpack.c.h.b16 %v275
  %v755 = vunpack.c.l.b16 %v276
  %v756 = vunpack.c.l.b16 %v277
  %v757 = vunpack.c.h.b16 %v277
  %v758 = vunpack.c.l.b16 %v278
  %v759 = vunpack.c.l.b16 %v279
  %v760 = vunpack.c.h.b16 %v279
  %v761 = vunpack.c.l.b16 %v280
  %v762 = vunpack.c.l.b16 %v281
  %v763 = vunpack.c.h.b16 %v281
  %v764 = vunpack.c.l.b16 %v282
  %v765 = vpack.c.b16 %v672, %v669
  %v766 = vpack.c.b16 %v673, %v670
  %v767 = vpack.c.b16 %v674, %v671
  %v768 = vpack.c.b16 %v678, %v675
  %v769 = vpack.c.b16 %v679, %v676
  %v770 = vpack.c.b16 %v680, %v677
  %v771 = vpack.c.b16 %v684, %v681
  %v772 = vpack.c.b16 %v685, %v682
  %v773 = vpack.c.b16 %v686, %v683
  %v774 = vpack.c.b16 %v690, %v687
  %v775 = vpack.c.b16 %v691, %v688
  %v776 = vpack.c.b16 %v692, %v689
  %v777 = vpack.c.b16 %v696, %v693
  %v778 = vpack.c.b16 %v697, %v694
  %v779 = vpack.c.b16 %v698, %v695
  %v780 = vpack.c.b16 %v702, %v699
  %v781 = vpack.c.b16 %v703, %v700
  %v782 = vpack.c.b16 %v704, %v701
  %v783 = vpack.c.b16 %v708, %v705
  %v784 = vpack.c.b16 %v709, %v706
  %v785 = vpack.c.b16 %v710, %v707
  %v786 = vpack.c.b16 %v714, %v711
  %v787 = vpack.c.b16 %v715, %v712
  %v788 = vpack.c.b16 %v716, %v713
  %v789 = vpack.c.b16 %v720, %v717
  %v790 = vpack.c.b16 %v721, %v718
  %v791 = vpack.c.b16 %v722, %v719
  %v792 = vpack.c.b16 %v726, %v723
  %v793 = vpack.c.b16 %v727, %v724
  %v794 = vpack.c.b16 %v728, %v725
  %v795 = vpack.c.b16 %v732, %v729
  %v796 = vpack.c.b16 %v733, %v730
  %v797 = vpack.c.b16 %v734, %v731
  %v798 = vpack.c.b16 %v738, %v735
  %v799 = vpack.c.b16 %v739, %v736
  %v800 = vpack.c.b16 %v740, %v737
  %v801 = vpack.c.b16 %v744, %v741
  %v802 = vpack.c.b16 %v745, %v742
  %v803 = vpack.c.b16 %v746, %v743
  %v804 = vpack.c.b16 %v750, %v747
  %v805 = vpack.c.b16 %v751, %v748
  %v806 = vpack.c.b16 %v752, %v749
  %v807 = vpack.c.b16 %v756, %v753
  %v808 = vpack.c.b16 %v757, %v754
  %v809 = vpack.c.b16 %v758, %v755
  %v810 = vpack.c.b16 %v762, %v759
  %v811 = vpack.c.b16 %v763, %v760
  %v812 = vpack.c.b16 %v764, %v761
  %861 = vmatpush.bf16.msra.mxu0 %v786
  %862 = vmatpush.bf16.msra.mxu0 %v783
  %863 = vmatpush.bf16.msra.mxu0 %v780
  %864 = vmatpush.bf16.msra.mxu0 %v777
  %865 = vmatpush.bf16.msra.mxu0 %v774
  %866 = vmatpush.bf16.msra.mxu0 %v771
  %867 = vmatpush.bf16.msra.mxu0 %v768
  %868 = vmatpush.bf16.msra.mxu0 %v765
  %869 = vmatmul.bf16.gmra.mxu0 %v601
  %v870 = vpop.f32.mrf.mxu0
  %v871 = vadd.f32 %v542, %v870
  %v872 = vpop.f32.mrf.mxu0
  %873 = vdwg.mxu0
  %874 = vmatpush.bf16.msra.mxu0 %v810
  %875 = vmatpush.bf16.msra.mxu0 %v807
  %876 = vmatpush.bf16.msra.mxu0 %v804
  %877 = vmatpush.bf16.msra.mxu0 %v801
  %878 = vmatpush.bf16.msra.mxu0 %v798
  %879 = vmatpush.bf16.msra.mxu0 %v795
  %880 = vmatpush.bf16.msra.mxu0 %v792
  %881 = vmatpush.bf16.msra.mxu0 %v789
  %882 = vmatmul.bf16.gmra.mxu0 %v602
  %v883 = vpop.f32.mrf.mxu0
  %v884 = vadd.f32 %v871, %v883
  %v885 = vpop.f32.mrf.mxu0
  %886 = vdwg.mxu0
  %887 = vmatpush.bf16.msra.mxu0 %v787
  %888 = vmatpush.bf16.msra.mxu0 %v784
  %889 = vmatpush.bf16.msra.mxu0 %v781
  %890 = vmatpush.bf16.msra.mxu0 %v778
  %891 = vmatpush.bf16.msra.mxu0 %v775
  %892 = vmatpush.bf16.msra.mxu0 %v772
  %893 = vmatpush.bf16.msra.mxu0 %v769
  %894 = vmatpush.bf16.msra.mxu0 %v766
  %895 = vmatmul.bf16.gmra.mxu0 %v601
  %v896 = vpop.f32.mrf.mxu0
  %v897 = vadd.f32 %v543, %v896
  %v898 = vpop.f32.mrf.mxu0
  %899 = vdwg.mxu0
  %900 = vmatpush.bf16.msra.mxu0 %v811
  %901 = vmatpush.bf16.msra.mxu0 %v808
  %902 = vmatpush.bf16.msra.mxu0 %v805
  %903 = vmatpush.bf16.msra.mxu0 %v802
  %904 = vmatpush.bf16.msra.mxu0 %v799
  %905 = vmatpush.bf16.msra.mxu0 %v796
  %906 = vmatpush.bf16.msra.mxu0 %v793
  %907 = vmatpush.bf16.msra.mxu0 %v790
  %908 = vmatmul.bf16.gmra.mxu0 %v602
  %v909 = vpop.f32.mrf.mxu0
  %v910 = vadd.f32 %v897, %v909
  %v911 = vpop.f32.mrf.mxu0
  %912 = vdwg.mxu0
  %913 = vmatpush.bf16.msra.mxu0 %v788
  %914 = vmatpush.bf16.msra.mxu0 %v785
  %915 = vmatpush.bf16.msra.mxu0 %v782
  %916 = vmatpush.bf16.msra.mxu0 %v779
  %917 = vmatpush.bf16.msra.mxu0 %v776
  %918 = vmatpush.bf16.msra.mxu0 %v773
  %919 = vmatpush.bf16.msra.mxu0 %v770
  %920 = vmatpush.bf16.msra.mxu0 %v767
  %921 = vmatmul.bf16.gmra.mxu0 %v601
  %v922 = vpop.f32.mrf.mxu0
  %v923 = vadd.f32 %v544, %v922
  %v924 = vpop.f32.mrf.mxu0
  %925 = vdwg.mxu0
  %926 = vmatpush.bf16.msra.mxu0 %v812
  %927 = vmatpush.bf16.msra.mxu0 %v809
  %928 = vmatpush.bf16.msra.mxu0 %v806
  %929 = vmatpush.bf16.msra.mxu0 %v803
  %930 = vmatpush.bf16.msra.mxu0 %v800
  %931 = vmatpush.bf16.msra.mxu0 %v797
  %932 = vmatpush.bf16.msra.mxu0 %v794
  %933 = vmatpush.bf16.msra.mxu0 %v791
  %934 = vmatmul.bf16.gmra.mxu0 %v602
  %v935 = vpop.f32.mrf.mxu0
  %v936 = vadd.f32 %v923, %v935
  %v937 = vpop.f32.mrf.mxu0
  %938 = vdwg.mxu0
  %v939 = vpack.c.bf16 %v218, %v218
  %v941 = vperm.slane %v316, 0
  %v942 = vperm.slane %v316, 1
  %v943 = vperm.slane %v316, 2
  %v979 = vunpack.c.l.b16 %v283
  %v980 = vunpack.c.h.b16 %v283
  %v981 = vunpack.c.l.b16 %v284
  %v982 = vunpack.c.l.b16 %v285
  %v983 = vunpack.c.h.b16 %v285
  %v984 = vunpack.c.l.b16 %v286
  %v985 = vunpack.c.l.b16 %v287
  %v986 = vunpack.c.h.b16 %v287
  %v987 = vunpack.c.l.b16 %v288
  %v988 = vunpack.c.l.b16 %v289
  %v989 = vunpack.c.h.b16 %v289
  %v990 = vunpack.c.l.b16 %v290
  %v991 = vunpack.c.l.b16 %v291
  %v992 = vunpack.c.h.b16 %v291
  %v993 = vunpack.c.l.b16 %v292
  %v994 = vunpack.c.l.b16 %v293
  %v995 = vunpack.c.h.b16 %v293
  %v996 = vunpack.c.l.b16 %v294
  %v997 = vunpack.c.l.b16 %v295
  %v998 = vunpack.c.h.b16 %v295
  %v999 = vunpack.c.l.b16 %v296
  %v1000 = vunpack.c.l.b16 %v297
  %v1001 = vunpack.c.h.b16 %v297
  %v1002 = vunpack.c.l.b16 %v298
  %v1003 = vunpack.c.l.b16 %v299
  %v1004 = vunpack.c.h.b16 %v299
  %v1005 = vunpack.c.l.b16 %v300
  %v1006 = vunpack.c.l.b16 %v301
  %v1007 = vunpack.c.h.b16 %v301
  %v1008 = vunpack.c.l.b16 %v302
  %v1009 = vunpack.c.l.b16 %v303
  %v1010 = vunpack.c.h.b16 %v303
  %v1011 = vunpack.c.l.b16 %v304
  %v1012 = vunpack.c.l.b16 %v305
  %v1013 = vunpack.c.h.b16 %v305
  %v1014 = vunpack.c.l.b16 %v306
  %v1015 = vunpack.c.l.b16 %v307
  %v1016 = vunpack.c.h.b16 %v307
  %v1017 = vunpack.c.l.b16 %v308
  %v1018 = vunpack.c.l.b16 %v309
  %v1019 = vunpack.c.h.b16 %v309
  %v1020 = vunpack.c.l.b16 %v310
  %v1021 = vunpack.c.l.b16 %v311
  %v1022 = vunpack.c.h.b16 %v311
  %v1023 = vunpack.c.l.b16 %v312
  %v1024 = vunpack.c.l.b16 %v313
  %v1025 = vunpack.c.h.b16 %v313
  %v1026 = vunpack.c.l.b16 %v314
  %v1027 = vpack.c.b16 %v982, %v979
  %v1028 = vpack.c.b16 %v983, %v980
  %v1029 = vpack.c.b16 %v984, %v981
  %v1030 = vpack.c.b16 %v988, %v985
  %v1031 = vpack.c.b16 %v989, %v986
  %v1032 = vpack.c.b16 %v990, %v987
  %v1033 = vpack.c.b16 %v994, %v991
  %v1034 = vpack.c.b16 %v995, %v992
  %v1035 = vpack.c.b16 %v996, %v993
  %v1036 = vpack.c.b16 %v1000, %v997
  %v1037 = vpack.c.b16 %v1001, %v998
  %v1038 = vpack.c.b16 %v1002, %v999
  %v1039 = vpack.c.b16 %v1006, %v1003
  %v1040 = vpack.c.b16 %v1007, %v1004
  %v1041 = vpack.c.b16 %v1008, %v1005
  %v1042 = vpack.c.b16 %v1012, %v1009
  %v1043 = vpack.c.b16 %v1013, %v1010
  %v1044 = vpack.c.b16 %v1014, %v1011
  %v1045 = vpack.c.b16 %v1018, %v1015
  %v1046 = vpack.c.b16 %v1019, %v1016
  %v1047 = vpack.c.b16 %v1020, %v1017
  %v1048 = vpack.c.b16 %v1024, %v1021
  %v1049 = vpack.c.b16 %v1025, %v1022
  %v1050 = vpack.c.b16 %v1026, %v1023
  %1075 = vmatpush.bf16.msra.mxu0 %v1048
  %1076 = vmatpush.bf16.msra.mxu0 %v1045
  %1077 = vmatpush.bf16.msra.mxu0 %v1042
  %1078 = vmatpush.bf16.msra.mxu0 %v1039
  %1079 = vmatpush.bf16.msra.mxu0 %v1036
  %1080 = vmatpush.bf16.msra.mxu0 %v1033
  %1081 = vmatpush.bf16.msra.mxu0 %v1030
  %1082 = vmatpush.bf16.msra.mxu0 %v1027
  %1083 = vmatmul.bf16.gmra.mxu0 %v939
  %v1084 = vpop.f32.mrf.mxu0
  %v1085 = vadd.f32 %v941, %v1084
  %v1086 = vpop.f32.mrf.mxu0
  %1087 = vdwg.mxu0
  %1088 = vmatpush.bf16.msra.mxu0 %v1049
  %1089 = vmatpush.bf16.msra.mxu0 %v1046
  %1090 = vmatpush.bf16.msra.mxu0 %v1043
  %1091 = vmatpush.bf16.msra.mxu0 %v1040
  %1092 = vmatpush.bf16.msra.mxu0 %v1037
  %1093 = vmatpush.bf16.msra.mxu0 %v1034
  %1094 = vmatpush.bf16.msra.mxu0 %v1031
  %1095 = vmatpush.bf16.msra.mxu0 %v1028
  %1096 = vmatmul.bf16.gmra.mxu0 %v939
  %v1097 = vpop.f32.mrf.mxu0
  %v1098 = vadd.f32 %v942, %v1097
  %v1099 = vpop.f32.mrf.mxu0
  %1100 = vdwg.mxu0
  %1101 = vmatpush.bf16.msra.mxu0 %v1050
  %1102 = vmatpush.bf16.msra.mxu0 %v1047
  %1103 = vmatpush.bf16.msra.mxu0 %v1044
  %1104 = vmatpush.bf16.msra.mxu0 %v1041
  %1105 = vmatpush.bf16.msra.mxu0 %v1038
  %1106 = vmatpush.bf16.msra.mxu0 %v1035
  %1107 = vmatpush.bf16.msra.mxu0 %v1032
  %1108 = vmatpush.bf16.msra.mxu0 %v1029
  %1109 = vmatmul.bf16.gmra.mxu0 %v939
  %v1110 = vpop.f32.mrf.mxu0
  %v1111 = vadd.f32 %v943, %v1110
  %v1112 = vpop.f32.mrf.mxu0
  %1113 = vdwg.mxu0
  %v1114 = vadd.f32 %v884, %v1085
  %v1115 = vsub.f32 0.0, %v1114
  %v1116 = vmul.f32 %v1115, 1.442695
  %v1117 = vpow.pop %v1116
  %v1118 = vadd.f32 %v1117, 1.0
  %v1119 = vrcp.pop %v1118
  %v1120 = vadd.f32 %v910, %v1098
  %v1121 = vsub.f32 0.0, %v1120
  %v1122 = vmul.f32 %v1121, 1.442695
  %v1123 = vpow.pop %v1122
  %v1124 = vadd.f32 %v1123, 1.0
  %v1125 = vrcp.pop %v1124
  %v1126 = vmul.f32 %v1119, %v1111
  %v1127 = vadd.f32 %v936, %v1126
  %v1128 = vtanh.pop %v1127
  %v1129 = vsub.f32 1.0, %v1125
  %v1130 = vmul.f32 %v1129, %v1128
  %v1131 = vmul.f32 %v1125, %v218
  %v1132 = vadd.f32 %v1130, %v1131
  %v1133 = vpack.c.bf16 %v1132, %v1132
  %1134 = vmatpush.bf16.msra.mxu0 %v1048
  %1135 = vmatpush.bf16.msra.mxu0 %v1045
  %1136 = vmatpush.bf16.msra.mxu0 %v1042
  %1137 = vmatpush.bf16.msra.mxu0 %v1039
  %1138 = vmatpush.bf16.msra.mxu0 %v1036
  %1139 = vmatpush.bf16.msra.mxu0 %v1033
  %1140 = vmatpush.bf16.msra.mxu0 %v1030
  %1141 = vmatpush.bf16.msra.mxu0 %v1027
  %1142 = vmatmul.bf16.gmra.mxu0 %v1133
  %v1143 = vpop.f32.mrf.mxu0
  %v1144 = vadd.f32 %v941, %v1143
  %v1145 = vpop.f32.mrf.mxu0
  %1146 = vdwg.mxu0
  %1147 = vmatpush.bf16.msra.mxu0 %v1049
  %1148 = vmatpush.bf16.msra.mxu0 %v1046
  %1149 = vmatpush.bf16.msra.mxu0 %v1043
  %1150 = vmatpush.bf16.msra.mxu0 %v1040
  %1151 = vmatpush.bf16.msra.mxu0 %v1037
  %1152 = vmatpush.bf16.msra.mxu0 %v1034
  %1153 = vmatpush.bf16.msra.mxu0 %v1031
  %1154 = vmatpush.bf16.msra.mxu0 %v1028
  %1155 = vmatmul.bf16.gmra.mxu0 %v1133
  %v1156 = vpop.f32.mrf.mxu0
  %v1157 = vadd.f32 %v942, %v1156
  %v1158 = vpop.f32.mrf.mxu0
  %1159 = vdwg.mxu0
  %1160 = vmatpush.bf16.msra.mxu0 %v1050
  %1161 = vmatpush.bf16.msra.mxu0 %v1047
  %1162 = vmatpush.bf16.msra.mxu0 %v1044
  %1163 = vmatpush.bf16.msra.mxu0 %v1041
  %1164 = vmatpush.bf16.msra.mxu0 %v1038
  %1165 = vmatpush.bf16.msra.mxu0 %v1035
  %1166 = vmatpush.bf16.msra.mxu0 %v1032
  %1167 = vmatpush.bf16.msra.mxu0 %v1029
  %1168 = vmatmul.bf16.gmra.mxu0 %v1133
  %v1169 = vpop.f32.mrf.mxu0
  %v1170 = vadd.f32 %v943, %v1169
  %v1171 = vpop.f32.mrf.mxu0
  %1172 = vdwg.mxu0
  %v1173 = vadd.f32 %v884, %v1144
  %v1174 = vsub.f32 0.0, %v1173
  %v1175 = vmul.f32 %v1174, 1.442695
  %v1176 = vpow.pop %v1175
  %v1177 = vadd.f32 %v1176, 1.0
  %v1178 = vrcp.pop %v1177
  %v1179 = vadd.f32 %v910, %v1157
  %v1180 = vsub.f32 0.0, %v1179
  %v1181 = vmul.f32 %v1180, 1.442695
  %v1182 = vpow.pop %v1181
  %v1183 = vadd.f32 %v1182, 1.0
  %v1184 = vrcp.pop %v1183
  %v1185 = vmul.f32 %v1178, %v1170
  %v1186 = vadd.f32 %v936, %v1185
  %v1187 = vtanh.pop %v1186
  %v1188 = vsub.f32 1.0, %v1184
  %v1189 = vmul.f32 %v1188, %v1187
  %v1190 = vmul.f32 %v1184, %v1132
  %v1191 = vadd.f32 %v1189, %v1190
  %v1192 = vld [vmem:[%s10] sm:$0xf]
  %v1193 = vld [vmem:[%s10 + $0x4] sm:$0xf]
  %v1194 = vld [vmem:[%s10 + $0x8] sm:$0xf]
  %v1195 = vld [vmem:[%s10 + $0xc] sm:$0xf]
  %v1196 = vld [vmem:[%s10 + $0x10] sm:$0xf]
  %v1197 = vld [vmem:[%s10 + $0x14] sm:$0xf]
  %v1198 = vld [vmem:[%s10 + $0x18] sm:$0xf]
  %v1199 = vld [vmem:[%s10 + $0x1c] sm:$0xf]
  %v1200 = vld [vmem:[%s10 + $0x20] sm:$0xf]
  %v1201 = vld [vmem:[%s10 + $0x24] sm:$0xf]
  %v1202 = vld [vmem:[%s10 + $0x28] sm:$0xf]
  %v1203 = vld [vmem:[%s10 + $0x2c] sm:$0xf]
  %v1204 = vld [vmem:[%s10 + $0x30] sm:$0xf]
  %v1205 = vld [vmem:[%s10 + $0x34] sm:$0xf]
  %v1206 = vld [vmem:[%s10 + $0x38] sm:$0xf]
  %v1207 = vld [vmem:[%s10 + $0x3c] sm:$0xf]
  %v1208 = vld [vmem:[%s11] sm:$0x1]
  %v1210 = vperm.slane %v1208, 0
  %v1228 = vunpack.c.l.b16 %v1192
  %v1229 = vunpack.c.l.b16 %v1193
  %v1230 = vunpack.c.l.b16 %v1194
  %v1231 = vunpack.c.l.b16 %v1195
  %v1232 = vunpack.c.l.b16 %v1196
  %v1233 = vunpack.c.l.b16 %v1197
  %v1234 = vunpack.c.l.b16 %v1198
  %v1235 = vunpack.c.l.b16 %v1199
  %v1236 = vunpack.c.l.b16 %v1200
  %v1237 = vunpack.c.l.b16 %v1201
  %v1238 = vunpack.c.l.b16 %v1202
  %v1239 = vunpack.c.l.b16 %v1203
  %v1240 = vunpack.c.l.b16 %v1204
  %v1241 = vunpack.c.l.b16 %v1205
  %v1242 = vunpack.c.l.b16 %v1206
  %v1243 = vunpack.c.l.b16 %v1207
  %v1244 = vpack.c.b16 %v1229, %v1228
  %v1245 = vpack.c.b16 %v1231, %v1230
  %v1246 = vpack.c.b16 %v1233, %v1232
  %v1247 = vpack.c.b16 %v1235, %v1234
  %v1248 = vpack.c.b16 %v1237, %v1236
  %v1249 = vpack.c.b16 %v1239, %v1238
  %v1250 = vpack.c.b16 %v1241, %v1240
  %v1251 = vpack.c.b16 %v1243, %v1242
  %1260 = vmatpush.bf16.msra.mxu0 %v1251
  %1261 = vmatpush.bf16.msra.mxu0 %v1250
  %1262 = vmatpush.bf16.msra.mxu0 %v1249
  %1263 = vmatpush.bf16.msra.mxu0 %v1248
  %1264 = vmatpush.bf16.msra.mxu0 %v1247
  %1265 = vmatpush.bf16.msra.mxu0 %v1246
  %1266 = vmatpush.bf16.msra.mxu0 %v1245
  %1267 = vmatpush.bf16.msra.mxu0 %v1244
  %1268 = vmatmul.bf16.gmra.mxu0 %v1133
  %v1269 = vpop.f32.mrf.mxu0
  %v1270 = vadd.f32 %v1210, %v1269
  %v1271 = vpop.f32.mrf.mxu0
  %1272 = vdwg.mxu0
  %v1273 = vmax.f32 %v1270, 0.0
  %v1274 = vpack.c.bf16 %v1273, %v1273
  %v1275 = vld [vmem:[%s12] sm:$0xff]
  %v1276 = vld [vmem:[%s12 + $0x8] sm:$0xff]
  %v1277 = vld [vmem:[%s12 + $0x10] sm:$0xff]
  %v1278 = vld [vmem:[%s12 + $0x18] sm:$0xff]
  %v1279 = vld [vmem:[%s12 + $0x20] sm:$0xff]
  %v1280 = vld [vmem:[%s12 + $0x28] sm:$0xff]
  %v1281 = vld [vmem:[%s12 + $0x30] sm:$0xff]
  %v1282 = vld [vmem:[%s12 + $0x38] sm:$0xff]
  %v1283 = vld [vmem:[%s12 + $0x40] sm:$0xff]
  %v1284 = vld [vmem:[%s12 + $0x48] sm:$0xff]
  %v1285 = vld [vmem:[%s12 + $0x50] sm:$0xff]
  %v1286 = vld [vmem:[%s12 + $0x58] sm:$0xff]
  %v1287 = vld [vmem:[%s12 + $0x60] sm:$0xff]
  %v1288 = vld [vmem:[%s12 + $0x68] sm:$0xff]
  %v1289 = vld [vmem:[%s12 + $0x70] sm:$0xff]
  %v1290 = vld [vmem:[%s12 + $0x78] sm:$0xff]
  %v1291 = vld [vmem:[%s13] sm:$0x3]
  %v1293 = vperm.slane %v1291, 0
  %v1294 = vperm.slane %v1291, 1
  %v1313 = vunpack.c.l.b16 %v1275
  %v1314 = vunpack.c.h.b16 %v1275
  %v1315 = vunpack.c.l.b16 %v1276
  %v1316 = vunpack.c.h.b16 %v1276
  %v1317 = vunpack.c.l.b16 %v1277
  %v1318 = vunpack.c.h.b16 %v1277
  %v1319 = vunpack.c.l.b16 %v1278
  %v1320 = vunpack.c.h.b16 %v1278
  %v1321 = vunpack.c.l.b16 %v1279
  %v1322 = vunpack.c.h.b16 %v1279
  %v1323 = vunpack.c.l.b16 %v1280
  %v1324 = vunpack.c.h.b16 %v1280
  %v1325 = vunpack.c.l.b16 %v1281
  %v1326 = vunpack.c.h.b16 %v1281
  %v1327 = vunpack.c.l.b16 %v1282
  %v1328 = vunpack.c.h.b16 %v1282
  %v1329 = vunpack.c.l.b16 %v1283
  %v1330 = vunpack.c.h.b16 %v1283
  %v1331 = vunpack.c.l.b16 %v1284
  %v1332 = vunpack.c.h.b16 %v1284
  %v1333 = vunpack.c.l.b16 %v1285
  %v1334 = vunpack.c.h.b16 %v1285
  %v1335 = vunpack.c.l.b16 %v1286
  %v1336 = vunpack.c.h.b16 %v1286
  %v1337 = vunpack.c.l.b16 %v1287
  %v1338 = vunpack.c.h.b16 %v1287
  %v1339 = vunpack.c.l.b16 %v1288
  %v1340 = vunpack.c.h.b16 %v1288
  %v1341 = vunpack.c.l.b16 %v1289
  %v1342 = vunpack.c.h.b16 %v1289
  %v1343 = vunpack.c.l.b16 %v1290
  %v1344 = vunpack.c.h.b16 %v1290
  %v1345 = vpack.c.b16 %v1315, %v1313
  %v1346 = vpack.c.b16 %v1316, %v1314
  %v1347 = vpack.c.b16 %v1319, %v1317
  %v1348 = vpack.c.b16 %v1320, %v1318
  %v1349 = vpack.c.b16 %v1323, %v1321
  %v1350 = vpack.c.b16 %v1324, %v1322
  %v1351 = vpack.c.b16 %v1327, %v1325
  %v1352 = vpack.c.b16 %v1328, %v1326
  %v1353 = vpack.c.b16 %v1331, %v1329
  %v1354 = vpack.c.b16 %v1332, %v1330
  %v1355 = vpack.c.b16 %v1335, %v1333
  %v1356 = vpack.c.b16 %v1336, %v1334
  %v1357 = vpack.c.b16 %v1339, %v1337
  %v1358 = vpack.c.b16 %v1340, %v1338
  %v1359 = vpack.c.b16 %v1343, %v1341
  %v1360 = vpack.c.b16 %v1344, %v1342
  %1377 = vmatpush.bf16.msra.mxu0 %v1359
  %1378 = vmatpush.bf16.msra.mxu0 %v1357
  %1379 = vmatpush.bf16.msra.mxu0 %v1355
  %1380 = vmatpush.bf16.msra.mxu0 %v1353
  %1381 = vmatpush.bf16.msra.mxu0 %v1351
  %1382 = vmatpush.bf16.msra.mxu0 %v1349
  %1383 = vmatpush.bf16.msra.mxu0 %v1347
  %1384 = vmatpush.bf16.msra.mxu0 %v1345
  %1385 = vmatmul.bf16.gmra.mxu0 %v1274
  %v1386 = vpop.f32.mrf.mxu0
  %v1387 = vadd.f32 %v1293, %v1386
  %v1388 = vpop.f32.mrf.mxu0
  %1389 = vdwg.mxu0
  %1390 = vmatpush.bf16.msra.mxu0 %v1360
  %1391 = vmatpush.bf16.msra.mxu0 %v1358
  %1392 = vmatpush.bf16.msra.mxu0 %v1356
  %1393 = vmatpush.bf16.msra.mxu0 %v1354
  %1394 = vmatpush.bf16.msra.mxu0 %v1352
  %1395 = vmatpush.bf16.msra.mxu0 %v1350
  %1396 = vmatpush.bf16.msra.mxu0 %v1348
  %1397 = vmatpush.bf16.msra.mxu0 %v1346
  %1398 = vmatmul.bf16.gmra.mxu0 %v1274
  %v1399 = vpop.f32.mrf.mxu0
  %v1400 = vadd.f32 %v1294, %v1399
  %v1401 = vpop.f32.mrf.mxu0
  %1402 = vdwg.mxu0
  %v1405 = vrot.slane %v1400, 7
  %vm1406 = vcmask 1040384
  %v1407 = vsel %vm1406, %v1387, %v1405
  %v1408 = vsel %vm580, %v1387, %v1405
  %v1409 = vrot.slane %v1408, 1
  %v1410 = vsel %vm582, %v1387, %v1405
  %v1411 = vrot.slane %v1410, 2
  %v1412 = vsel %vm584, %v1387, %v1405
  %v1413 = vrot.slane %v1412, 3
  %v1414 = vsel %vm586, %v1387, %v1405
  %v1415 = vrot.slane %v1414, 4
  %v1416 = vsel %vm588, %v1387, %v1405
  %v1417 = vrot.slane %v1416, 5
  %v1418 = vsel %vm590, %v1387, %v1405
  %v1419 = vrot.slane %v1418, 6
  %vm1420 = vcmask 1046528
  %v1421 = vsel %vm1420, %v1405, %v1387
  %v1422 = vrot.slane %v1421, 7
  %v1423 = vperm.slane %v1407, 0
  %v1424 = vperm.slane %v1407, 1
  %v1425 = vperm.slane %v1409, 0
  %v1426 = vperm.slane %v1409, 1
  %v1427 = vperm.slane %v1411, 0
  %v1428 = vperm.slane %v1411, 1
  %v1429 = vperm.slane %v1413, 0
  %v1430 = vperm.slane %v1413, 1
  %v1431 = vperm.slane %v1415, 0
  %v1432 = vperm.slane %v1415, 1
  %v1433 = vperm.slane %v1417, 0
  %v1434 = vperm.slane %v1417, 1
  %v1435 = vperm.slane %v1419, 0
  %v1436 = vperm.slane %v1419, 1
  %v1437 = vperm.slane %v1422, 0
  %v1438 = vperm.slane %v1422, 1
  %v1455 = vmul.f32 %v106, %v1423
  %v1456 = vmul.f32 %v107, %v1424
  %v1457 = vmul.f32 %v108, %v1423
  %v1458 = vmul.f32 %v109, %v1424
  %v1459 = vmul.f32 %v110, %v1423
  %v1460 = vmul.f32 %v111, %v1424
  %v1461 = vmul.f32 %v112, %v1423
  %v1462 = vmul.f32 %v113, %v1424
  %v1463 = vmul.f32 %v114, %v1423
  %v1464 = vmul.f32 %v115, %v1424
  %v1465 = vmul.f32 %v116, %v1423
  %v1466 = vmul.f32 %v117, %v1424
  %v1467 = vmul.f32 %v118, %v1423
  %v1468 = vmul.f32 %v119, %v1424
  %v1469 = vmul.f32 %v120, %v1425
  %v1470 = vmul.f32 %v121, %v1426
  %v1471 = vmul.f32 %v122, %v1425
  %v1472 = vmul.f32 %v123, %v1426
  %v1473 = vmul.f32 %v124, %v1425
  %v1474 = vmul.f32 %v125, %v1426
  %v1475 = vmul.f32 %v126, %v1425
  %v1476 = vmul.f32 %v127, %v1426
  %v1477 = vmul.f32 %v128, %v1425
  %v1478 = vmul.f32 %v129, %v1426
  %v1479 = vmul.f32 %v130, %v1425
  %v1480 = vmul.f32 %v131, %v1426
  %v1481 = vmul.f32 %v132, %v1425
  %v1482 = vmul.f32 %v133, %v1426
  %v1483 = vmul.f32 %v134, %v1427
  %v1484 = vmul.f32 %v135, %v1428
  %v1485 = vmul.f32 %v136, %v1427
  %v1486 = vmul.f32 %v137, %v1428
  %v1487 = vmul.f32 %v138, %v1427
  %v1488 = vmul.f32 %v139, %v1428
  %v1489 = vmul.f32 %v140, %v1427
  %v1490 = vmul.f32 %v141, %v1428
  %v1491 = vmul.f32 %v142, %v1427
  %v1492 = vmul.f32 %v143, %v1428
  %v1493 = vmul.f32 %v144, %v1427
  %v1494 = vmul.f32 %v145, %v1428
  %v1495 = vmul.f32 %v146, %v1427
  %v1496 = vmul.f32 %v147, %v1428
  %v1497 = vmul.f32 %v148, %v1429
  %v1498 = vmul.f32 %v149, %v1430
  %v1499 = vmul.f32 %v150, %v1429
  %v1500 = vmul.f32 %v151, %v1430
  %v1501 = vmul.f32 %v152, %v1429
  %v1502 = vmul.f32 %v153, %v1430
  %v1503 = vmul.f32 %v154, %v1429
  %v1504 = vmul.f32 %v155, %v1430
  %v1505 = vmul.f32 %v156, %v1429
  %v1506 = vmul.f32 %v157, %v1430
  %v1507 = vmul.f32 %v158, %v1429
  %v1508 = vmul.f32 %v159, %v1430
  %v1509 = vmul.f32 %v160, %v1429
  %v1510 = vmul.f32 %v161, %v1430
  %v1511 = vmul.f32 %v162, %v1431
  %v1512 = vmul.f32 %v163, %v1432
  %v1513 = vmul.f32 %v164, %v1431
  %v1514 = vmul.f32 %v165, %v1432
  %v1515 = vmul.f32 %v166, %v1431
  %v1516 = vmul.f32 %v167, %v1432
  %v1517 = vmul.f32 %v168, %v1431
  %v1518 = vmul.f32 %v169, %v1432
  %v1519 = vmul.f32 %v170, %v1431
  %v1520 = vmul.f32 %v171, %v1432
  %v1521 = vmul.f32 %v172, %v1431
  %v1522 = vmul.f32 %v173, %v1432
  %v1523 = vmul.f32 %v174, %v1431
  %v1524 = vmul.f32 %v175, %v1432
  %v1525 = vmul.f32 %v176, %v1433
  %v1526 = vmul.f32 %v177, %v1434
  %v1527 = vmul.f32 %v178, %v1433
  %v1528 = vmul.f32 %v179, %v1434
  %v1529 = vmul.f32 %v180, %v1433
  %v1530 = vmul.f32 %v181, %v1434
  %v1531 = vmul.f32 %v182, %v1433
  %v1532 = vmul.f32 %v183, %v1434
  %v1533 = vmul.f32 %v184, %v1433
  %v1534 = vmul.f32 %v185, %v1434
  %v1535 = vmul.f32 %v186, %v1433
  %v1536 = vmul.f32 %v187, %v1434
  %v1537 = vmul.f32 %v188, %v1433
  %v1538 = vmul.f32 %v189, %v1434
  %v1539 = vmul.f32 %v190, %v1435
  %v1540 = vmul.f32 %v191, %v1436
  %v1541 = vmul.f32 %v192, %v1435
  %v1542 = vmul.f32 %v193, %v1436
  %v1543 = vmul.f32 %v194, %v1435
  %v1544 = vmul.f32 %v195, %v1436
  %v1545 = vmul.f32 %v196, %v1435
  %v1546 = vmul.f32 %v197, %v1436
  %v1547 = vmul.f32 %v198, %v1435
  %v1548 = vmul.f32 %v199, %v1436
  %v1549 = vmul.f32 %v200, %v1435
  %v1550 = vmul.f32 %v201, %v1436
  %v1551 = vmul.f32 %v202, %v1435
  %v1552 = vmul.f32 %v203, %v1436
  %v1553 = vmul.f32 %v204, %v1437
  %v1554 = vmul.f32 %v205, %v1438
  %v1555 = vmul.f32 %v206, %v1437
  %v1556 = vmul.f32 %v207, %v1438
  %v1557 = vmul.f32 %v208, %v1437
  %v1558 = vmul.f32 %v209, %v1438
  %v1559 = vmul.f32 %v210, %v1437
  %v1560 = vmul.f32 %v211, %v1438
  %v1561 = vmul.f32 %v212, %v1437
  %v1562 = vmul.f32 %v213, %v1438
  %v1563 = vmul.f32 %v214, %v1437
  %v1564 = vmul.f32 %v215, %v1438
  %v1565 = vmul.f32 %v216, %v1437
  %v1566 = vmul.f32 %v217, %v1438
  %v1567 = vadd.f32 %v1455, %v1456
  %1568 = vadd.xlane.f32.xlu0 %v1567
  %v1569 = vpop.xlane.xlu0 %1568
  %v1570 = vadd.f32 %v1457, %v1458
  %1571 = vadd.xlane.f32.xlu0 %v1570
  %v1572 = vpop.xlane.xlu0 %1571
  %v1573 = vadd.f32 %v1459, %v1460
  %1574 = vadd.xlane.f32.xlu0 %v1573
  %v1575 = vpop.xlane.xlu0 %1574
  %v1576 = vadd.f32 %v1461, %v1462
  %1577 = vadd.xlane.f32.xlu0 %v1576
  %v1578 = vpop.xlane.xlu0 %1577
  %v1579 = vadd.f32 %v1463, %v1464
  %1580 = vadd.xlane.f32.xlu0 %v1579
  %v1581 = vpop.xlane.xlu0 %1580
  %v1582 = vadd.f32 %v1465, %v1466
  %1583 = vadd.xlane.f32.xlu0 %v1582
  %v1584 = vpop.xlane.xlu0 %1583
  %v1585 = vadd.f32 %v1467, %v1468
  %1586 = vadd.xlane.f32.xlu0 %v1585
  %v1587 = vpop.xlane.xlu0 %1586
  %v1588 = vadd.f32 %v1469, %v1470
  %1589 = vadd.xlane.f32.xlu0 %v1588
  %v1590 = vpop.xlane.xlu0 %1589
  %v1591 = vadd.f32 %v1471, %v1472
  %1592 = vadd.xlane.f32.xlu0 %v1591
  %v1593 = vpop.xlane.xlu0 %1592
  %v1594 = vadd.f32 %v1473, %v1474
  %1595 = vadd.xlane.f32.xlu0 %v1594
  %v1596 = vpop.xlane.xlu0 %1595
  %v1597 = vadd.f32 %v1475, %v1476
  %1598 = vadd.xlane.f32.xlu0 %v1597
  %v1599 = vpop.xlane.xlu0 %1598
  %v1600 = vadd.f32 %v1477, %v1478
  %1601 = vadd.xlane.f32.xlu0 %v1600
  %v1602 = vpop.xlane.xlu0 %1601
  %v1603 = vadd.f32 %v1479, %v1480
  %1604 = vadd.xlane.f32.xlu0 %v1603
  %v1605 = vpop.xlane.xlu0 %1604
  %v1606 = vadd.f32 %v1481, %v1482
  %1607 = vadd.xlane.f32.xlu0 %v1606
  %v1608 = vpop.xlane.xlu0 %1607
  %v1609 = vadd.f32 %v1483, %v1484
  %1610 = vadd.xlane.f32.xlu0 %v1609
  %v1611 = vpop.xlane.xlu0 %1610
  %v1612 = vadd.f32 %v1485, %v1486
  %1613 = vadd.xlane.f32.xlu0 %v1612
  %v1614 = vpop.xlane.xlu0 %1613
  %v1615 = vadd.f32 %v1487, %v1488
  %1616 = vadd.xlane.f32.xlu0 %v1615
  %v1617 = vpop.xlane.xlu0 %1616
  %v1618 = vadd.f32 %v1489, %v1490
  %1619 = vadd.xlane.f32.xlu0 %v1618
  %v1620 = vpop.xlane.xlu0 %1619
  %v1621 = vadd.f32 %v1491, %v1492
  %1622 = vadd.xlane.f32.xlu0 %v1621
  %v1623 = vpop.xlane.xlu0 %1622
  %v1624 = vadd.f32 %v1493, %v1494
  %1625 = vadd.xlane.f32.xlu0 %v1624
  %v1626 = vpop.xlane.xlu0 %1625
  %v1627 = vadd.f32 %v1495, %v1496
  %1628 = vadd.xlane.f32.xlu0 %v1627
  %v1629 = vpop.xlane.xlu0 %1628
  %v1630 = vadd.f32 %v1497, %v1498
  %1631 = vadd.xlane.f32.xlu0 %v1630
  %v1632 = vpop.xlane.xlu0 %1631
  %v1633 = vadd.f32 %v1499, %v1500
  %1634 = vadd.xlane.f32.xlu0 %v1633
  %v1635 = vpop.xlane.xlu0 %1634
  %v1636 = vadd.f32 %v1501, %v1502
  %1637 = vadd.xlane.f32.xlu0 %v1636
  %v1638 = vpop.xlane.xlu0 %1637
  %v1639 = vadd.f32 %v1503, %v1504
  %1640 = vadd.xlane.f32.xlu0 %v1639
  %v1641 = vpop.xlane.xlu0 %1640
  %v1642 = vadd.f32 %v1505, %v1506
  %1643 = vadd.xlane.f32.xlu0 %v1642
  %v1644 = vpop.xlane.xlu0 %1643
  %v1645 = vadd.f32 %v1507, %v1508
  %1646 = vadd.xlane.f32.xlu0 %v1645
  %v1647 = vpop.xlane.xlu0 %1646
  %v1648 = vadd.f32 %v1509, %v1510
  %1649 = vadd.xlane.f32.xlu0 %v1648
  %v1650 = vpop.xlane.xlu0 %1649
  %v1651 = vadd.f32 %v1511, %v1512
  %1652 = vadd.xlane.f32.xlu0 %v1651
  %v1653 = vpop.xlane.xlu0 %1652
  %v1654 = vadd.f32 %v1513, %v1514
  %1655 = vadd.xlane.f32.xlu0 %v1654
  %v1656 = vpop.xlane.xlu0 %1655
  %v1657 = vadd.f32 %v1515, %v1516
  %1658 = vadd.xlane.f32.xlu0 %v1657
  %v1659 = vpop.xlane.xlu0 %1658
  %v1660 = vadd.f32 %v1517, %v1518
  %1661 = vadd.xlane.f32.xlu0 %v1660
  %v1662 = vpop.xlane.xlu0 %1661
  %v1663 = vadd.f32 %v1519, %v1520
  %1664 = vadd.xlane.f32.xlu0 %v1663
  %v1665 = vpop.xlane.xlu0 %1664
  %v1666 = vadd.f32 %v1521, %v1522
  %1667 = vadd.xlane.f32.xlu0 %v1666
  %v1668 = vpop.xlane.xlu0 %1667
  %v1669 = vadd.f32 %v1523, %v1524
  %1670 = vadd.xlane.f32.xlu0 %v1669
  %v1671 = vpop.xlane.xlu0 %1670
  %v1672 = vadd.f32 %v1525, %v1526
  %1673 = vadd.xlane.f32.xlu0 %v1672
  %v1674 = vpop.xlane.xlu0 %1673
  %v1675 = vadd.f32 %v1527, %v1528
  %1676 = vadd.xlane.f32.xlu0 %v1675
  %v1677 = vpop.xlane.xlu0 %1676
  %v1678 = vadd.f32 %v1529, %v1530
  %1679 = vadd.xlane.f32.xlu0 %v1678
  %v1680 = vpop.xlane.xlu0 %1679
  %v1681 = vadd.f32 %v1531, %v1532
  %1682 = vadd.xlane.f32.xlu0 %v1681
  %v1683 = vpop.xlane.xlu0 %1682
  %v1684 = vadd.f32 %v1533, %v1534
  %1685 = vadd.xlane.f32.xlu0 %v1684
  %v1686 = vpop.xlane.xlu0 %1685
  %v1687 = vadd.f32 %v1535, %v1536
  %1688 = vadd.xlane.f32.xlu0 %v1687
  %v1689 = vpop.xlane.xlu0 %1688
  %v1690 = vadd.f32 %v1537, %v1538
  %1691 = vadd.xlane.f32.xlu0 %v1690
  %v1692 = vpop.xlane.xlu0 %1691
  %v1693 = vadd.f32 %v1539, %v1540
  %1694 = vadd.xlane.f32.xlu0 %v1693
  %v1695 = vpop.xlane.xlu0 %1694
  %v1696 = vadd.f32 %v1541, %v1542
  %1697 = vadd.xlane.f32.xlu0 %v1696
  %v1698 = vpop.xlane.xlu0 %1697
  %v1699 = vadd.f32 %v1543, %v1544
  %1700 = vadd.xlane.f32.xlu0 %v1699
  %v1701 = vpop.xlane.xlu0 %1700
  %v1702 = vadd.f32 %v1545, %v1546
  %1703 = vadd.xlane.f32.xlu0 %v1702
  %v1704 = vpop.xlane.xlu0 %1703
  %v1705 = vadd.f32 %v1547, %v1548
  %1706 = vadd.xlane.f32.xlu0 %v1705
  %v1707 = vpop.xlane.xlu0 %1706
  %v1708 = vadd.f32 %v1549, %v1550
  %1709 = vadd.xlane.f32.xlu0 %v1708
  %v1710 = vpop.xlane.xlu0 %1709
  %v1711 = vadd.f32 %v1551, %v1552
  %1712 = vadd.xlane.f32.xlu0 %v1711
  %v1713 = vpop.xlane.xlu0 %1712
  %v1714 = vadd.f32 %v1553, %v1554
  %1715 = vadd.xlane.f32.xlu0 %v1714
  %v1716 = vpop.xlane.xlu0 %1715
  %v1717 = vadd.f32 %v1555, %v1556
  %1718 = vadd.xlane.f32.xlu0 %v1717
  %v1719 = vpop.xlane.xlu0 %1718
  %v1720 = vadd.f32 %v1557, %v1558
  %1721 = vadd.xlane.f32.xlu0 %v1720
  %v1722 = vpop.xlane.xlu0 %1721
  %v1723 = vadd.f32 %v1559, %v1560
  %1724 = vadd.xlane.f32.xlu0 %v1723
  %v1725 = vpop.xlane.xlu0 %1724
  %v1726 = vadd.f32 %v1561, %v1562
  %1727 = vadd.xlane.f32.xlu0 %v1726
  %v1728 = vpop.xlane.xlu0 %1727
  %v1729 = vadd.f32 %v1563, %v1564
  %1730 = vadd.xlane.f32.xlu0 %v1729
  %v1731 = vpop.xlane.xlu0 %1730
  %v1732 = vadd.f32 %v1565, %v1566
  %1733 = vadd.xlane.f32.xlu0 %v1732
  %v1734 = vpop.xlane.xlu0 %1733
  %v1735 = vmax.f32 %v1569, 0.0
  %v1736 = vmax.f32 %v1572, 0.0
  %v1737 = vmax.f32 %v1575, 0.0
  %v1738 = vmax.f32 %v1578, 0.0
  %v1739 = vmax.f32 %v1581, 0.0
  %v1740 = vmax.f32 %v1584, 0.0
  %v1741 = vmax.f32 %v1587, 0.0
  %v1742 = vmax.f32 %v1590, 0.0
  %v1743 = vmax.f32 %v1593, 0.0
  %v1744 = vmax.f32 %v1596, 0.0
  %v1745 = vmax.f32 %v1599, 0.0
  %v1746 = vmax.f32 %v1602, 0.0
  %v1747 = vmax.f32 %v1605, 0.0
  %v1748 = vmax.f32 %v1608, 0.0
  %v1749 = vmax.f32 %v1611, 0.0
  %v1750 = vmax.f32 %v1614, 0.0
  %v1751 = vmax.f32 %v1617, 0.0
  %v1752 = vmax.f32 %v1620, 0.0
  %v1753 = vmax.f32 %v1623, 0.0
  %v1754 = vmax.f32 %v1626, 0.0
  %v1755 = vmax.f32 %v1629, 0.0
  %v1756 = vmax.f32 %v1632, 0.0
  %v1757 = vmax.f32 %v1635, 0.0
  %v1758 = vmax.f32 %v1638, 0.0
  %v1759 = vmax.f32 %v1641, 0.0
  %v1760 = vmax.f32 %v1644, 0.0
  %v1761 = vmax.f32 %v1647, 0.0
  %v1762 = vmax.f32 %v1650, 0.0
  %v1763 = vmax.f32 %v1653, 0.0
  %v1764 = vmax.f32 %v1656, 0.0
  %v1765 = vmax.f32 %v1659, 0.0
  %v1766 = vmax.f32 %v1662, 0.0
  %v1767 = vmax.f32 %v1665, 0.0
  %v1768 = vmax.f32 %v1668, 0.0
  %v1769 = vmax.f32 %v1671, 0.0
  %v1770 = vmax.f32 %v1674, 0.0
  %v1771 = vmax.f32 %v1677, 0.0
  %v1772 = vmax.f32 %v1680, 0.0
  %v1773 = vmax.f32 %v1683, 0.0
  %v1774 = vmax.f32 %v1686, 0.0
  %v1775 = vmax.f32 %v1689, 0.0
  %v1776 = vmax.f32 %v1692, 0.0
  %v1777 = vmax.f32 %v1695, 0.0
  %v1778 = vmax.f32 %v1698, 0.0
  %v1779 = vmax.f32 %v1701, 0.0
  %v1780 = vmax.f32 %v1704, 0.0
  %v1781 = vmax.f32 %v1707, 0.0
  %v1782 = vmax.f32 %v1710, 0.0
  %v1783 = vmax.f32 %v1713, 0.0
  %v1784 = vmax.f32 %v1716, 0.0
  %v1785 = vmax.f32 %v1719, 0.0
  %v1786 = vmax.f32 %v1722, 0.0
  %v1787 = vmax.f32 %v1725, 0.0
  %v1788 = vmax.f32 %v1728, 0.0
  %v1789 = vmax.f32 %v1731, 0.0
  %v1790 = vmax.f32 %v1734, 0.0
  %v1791 = vand.u32 2147483647, %v1569
  %v1792 = vand.u32 2147483647, %v1572
  %v1793 = vand.u32 2147483647, %v1575
  %v1794 = vand.u32 2147483647, %v1578
  %v1795 = vand.u32 2147483647, %v1581
  %v1796 = vand.u32 2147483647, %v1584
  %v1797 = vand.u32 2147483647, %v1587
  %v1798 = vand.u32 2147483647, %v1590
  %v1799 = vand.u32 2147483647, %v1593
  %v1800 = vand.u32 2147483647, %v1596
  %v1801 = vand.u32 2147483647, %v1599
  %v1802 = vand.u32 2147483647, %v1602
  %v1803 = vand.u32 2147483647, %v1605
  %v1804 = vand.u32 2147483647, %v1608
  %v1805 = vand.u32 2147483647, %v1611
  %v1806 = vand.u32 2147483647, %v1614
  %v1807 = vand.u32 2147483647, %v1617
  %v1808 = vand.u32 2147483647, %v1620
  %v1809 = vand.u32 2147483647, %v1623
  %v1810 = vand.u32 2147483647, %v1626
  %v1811 = vand.u32 2147483647, %v1629
  %v1812 = vand.u32 2147483647, %v1632
  %v1813 = vand.u32 2147483647, %v1635
  %v1814 = vand.u32 2147483647, %v1638
  %v1815 = vand.u32 2147483647, %v1641
  %v1816 = vand.u32 2147483647, %v1644
  %v1817 = vand.u32 2147483647, %v1647
  %v1818 = vand.u32 2147483647, %v1650
  %v1819 = vand.u32 2147483647, %v1653
  %v1820 = vand.u32 2147483647, %v1656
  %v1821 = vand.u32 2147483647, %v1659
  %v1822 = vand.u32 2147483647, %v1662
  %v1823 = vand.u32 2147483647, %v1665
  %v1824 = vand.u32 2147483647, %v1668
  %v1825 = vand.u32 2147483647, %v1671
  %v1826 = vand.u32 2147483647, %v1674
  %v1827 = vand.u32 2147483647, %v1677
  %v1828 = vand.u32 2147483647, %v1680
  %v1829 = vand.u32 2147483647, %v1683
  %v1830 = vand.u32 2147483647, %v1686
  %v1831 = vand.u32 2147483647, %v1689
  %v1832 = vand.u32 2147483647, %v1692
  %v1833 = vand.u32 2147483647, %v1695
  %v1834 = vand.u32 2147483647, %v1698
  %v1835 = vand.u32 2147483647, %v1701
  %v1836 = vand.u32 2147483647, %v1704
  %v1837 = vand.u32 2147483647, %v1707
  %v1838 = vand.u32 2147483647, %v1710
  %v1839 = vand.u32 2147483647, %v1713
  %v1840 = vand.u32 2147483647, %v1716
  %v1841 = vand.u32 2147483647, %v1719
  %v1842 = vand.u32 2147483647, %v1722
  %v1843 = vand.u32 2147483647, %v1725
  %v1844 = vand.u32 2147483647, %v1728
  %v1845 = vand.u32 2147483647, %v1731
  %v1846 = vand.u32 2147483647, %v1734
  %v1847 = vsub.f32 0.0, %v1791
  %v1848 = vsub.f32 0.0, %v1792
  %v1849 = vsub.f32 0.0, %v1793
  %v1850 = vsub.f32 0.0, %v1794
  %v1851 = vsub.f32 0.0, %v1795
  %v1852 = vsub.f32 0.0, %v1796
  %v1853 = vsub.f32 0.0, %v1797
  %v1854 = vsub.f32 0.0, %v1798
  %v1855 = vsub.f32 0.0, %v1799
  %v1856 = vsub.f32 0.0, %v1800
  %v1857 = vsub.f32 0.0, %v1801
  %v1858 = vsub.f32 0.0, %v1802
  %v1859 = vsub.f32 0.0, %v1803
  %v1860 = vsub.f32 0.0, %v1804
  %v1861 = vsub.f32 0.0, %v1805
  %v1862 = vsub.f32 0.0, %v1806
  %v1863 = vsub.f32 0.0, %v1807
  %v1864 = vsub.f32 0.0, %v1808
  %v1865 = vsub.f32 0.0, %v1809
  %v1866 = vsub.f32 0.0, %v1810
  %v1867 = vsub.f32 0.0, %v1811
  %v1868 = vsub.f32 0.0, %v1812
  %v1869 = vsub.f32 0.0, %v1813
  %v1870 = vsub.f32 0.0, %v1814
  %v1871 = vsub.f32 0.0, %v1815
  %v1872 = vsub.f32 0.0, %v1816
  %v1873 = vsub.f32 0.0, %v1817
  %v1874 = vsub.f32 0.0, %v1818
  %v1875 = vsub.f32 0.0, %v1819
  %v1876 = vsub.f32 0.0, %v1820
  %v1877 = vsub.f32 0.0, %v1821
  %v1878 = vsub.f32 0.0, %v1822
  %v1879 = vsub.f32 0.0, %v1823
  %v1880 = vsub.f32 0.0, %v1824
  %v1881 = vsub.f32 0.0, %v1825
  %v1882 = vsub.f32 0.0, %v1826
  %v1883 = vsub.f32 0.0, %v1827
  %v1884 = vsub.f32 0.0, %v1828
  %v1885 = vsub.f32 0.0, %v1829
  %v1886 = vsub.f32 0.0, %v1830
  %v1887 = vsub.f32 0.0, %v1831
  %v1888 = vsub.f32 0.0, %v1832
  %v1889 = vsub.f32 0.0, %v1833
  %v1890 = vsub.f32 0.0, %v1834
  %v1891 = vsub.f32 0.0, %v1835
  %v1892 = vsub.f32 0.0, %v1836
  %v1893 = vsub.f32 0.0, %v1837
  %v1894 = vsub.f32 0.0, %v1838
  %v1895 = vsub.f32 0.0, %v1839
  %v1896 = vsub.f32 0.0, %v1840
  %v1897 = vsub.f32 0.0, %v1841
  %v1898 = vsub.f32 0.0, %v1842
  %v1899 = vsub.f32 0.0, %v1843
  %v1900 = vsub.f32 0.0, %v1844
  %v1901 = vsub.f32 0.0, %v1845
  %v1902 = vsub.f32 0.0, %v1846
  %v1903 = vmul.f32 %v1847, 1.442695
  %v1904 = vpow.pop %v1903
  %v1905 = vmul.f32 %v1848, 1.442695
  %v1906 = vpow.pop %v1905
  %v1907 = vmul.f32 %v1849, 1.442695
  %v1908 = vpow.pop %v1907
  %v1909 = vmul.f32 %v1850, 1.442695
  %v1910 = vpow.pop %v1909
  %v1911 = vmul.f32 %v1851, 1.442695
  %v1912 = vpow.pop %v1911
  %v1913 = vmul.f32 %v1852, 1.442695
  %v1914 = vpow.pop %v1913
  %v1915 = vmul.f32 %v1853, 1.442695
  %v1916 = vpow.pop %v1915
  %v1917 = vmul.f32 %v1854, 1.442695
  %v1918 = vpow.pop %v1917
  %v1919 = vmul.f32 %v1855, 1.442695
  %v1920 = vpow.pop %v1919
  %v1921 = vmul.f32 %v1856, 1.442695
  %v1922 = vpow.pop %v1921
  %v1923 = vmul.f32 %v1857, 1.442695
  %v1924 = vpow.pop %v1923
  %v1925 = vmul.f32 %v1858, 1.442695
  %v1926 = vpow.pop %v1925
  %v1927 = vmul.f32 %v1859, 1.442695
  %v1928 = vpow.pop %v1927
  %v1929 = vmul.f32 %v1860, 1.442695
  %v1930 = vpow.pop %v1929
  %v1931 = vmul.f32 %v1861, 1.442695
  %v1932 = vpow.pop %v1931
  %v1933 = vmul.f32 %v1862, 1.442695
  %v1934 = vpow.pop %v1933
  %v1935 = vmul.f32 %v1863, 1.442695
  %v1936 = vpow.pop %v1935
  %v1937 = vmul.f32 %v1864, 1.442695
  %v1938 = vpow.pop %v1937
  %v1939 = vmul.f32 %v1865, 1.442695
  %v1940 = vpow.pop %v1939
  %v1941 = vmul.f32 %v1866, 1.442695
  %v1942 = vpow.pop %v1941
  %v1943 = vmul.f32 %v1867, 1.442695
  %v1944 = vpow.pop %v1943
  %v1945 = vmul.f32 %v1868, 1.442695
  %v1946 = vpow.pop %v1945
  %v1947 = vmul.f32 %v1869, 1.442695
  %v1948 = vpow.pop %v1947
  %v1949 = vmul.f32 %v1870, 1.442695
  %v1950 = vpow.pop %v1949
  %v1951 = vmul.f32 %v1871, 1.442695
  %v1952 = vpow.pop %v1951
  %v1953 = vmul.f32 %v1872, 1.442695
  %v1954 = vpow.pop %v1953
  %v1955 = vmul.f32 %v1873, 1.442695
  %v1956 = vpow.pop %v1955
  %v1957 = vmul.f32 %v1874, 1.442695
  %v1958 = vpow.pop %v1957
  %v1959 = vmul.f32 %v1875, 1.442695
  %v1960 = vpow.pop %v1959
  %v1961 = vmul.f32 %v1876, 1.442695
  %v1962 = vpow.pop %v1961
  %v1963 = vmul.f32 %v1877, 1.442695
  %v1964 = vpow.pop %v1963
  %v1965 = vmul.f32 %v1878, 1.442695
  %v1966 = vpow.pop %v1965
  %v1967 = vmul.f32 %v1879, 1.442695
  %v1968 = vpow.pop %v1967
  %v1969 = vmul.f32 %v1880, 1.442695
  %v1970 = vpow.pop %v1969
  %v1971 = vmul.f32 %v1881, 1.442695
  %v1972 = vpow.pop %v1971
  %v1973 = vmul.f32 %v1882, 1.442695
  %v1974 = vpow.pop %v1973
  %v1975 = vmul.f32 %v1883, 1.442695
  %v1976 = vpow.pop %v1975
  %v1977 = vmul.f32 %v1884, 1.442695
  %v1978 = vpow.pop %v1977
  %v1979 = vmul.f32 %v1885, 1.442695
  %v1980 = vpow.pop %v1979
  %v1981 = vmul.f32 %v1886, 1.442695
  %v1982 = vpow.pop %v1981
  %v1983 = vmul.f32 %v1887, 1.442695
  %v1984 = vpow.pop %v1983
  %v1985 = vmul.f32 %v1888, 1.442695
  %v1986 = vpow.pop %v1985
  %v1987 = vmul.f32 %v1889, 1.442695
  %v1988 = vpow.pop %v1987
  %v1989 = vmul.f32 %v1890, 1.442695
  %v1990 = vpow.pop %v1989
  %v1991 = vmul.f32 %v1891, 1.442695
  %v1992 = vpow.pop %v1991
  %v1993 = vmul.f32 %v1892, 1.442695
  %v1994 = vpow.pop %v1993
  %v1995 = vmul.f32 %v1893, 1.442695
  %v1996 = vpow.pop %v1995
  %v1997 = vmul.f32 %v1894, 1.442695
  %v1998 = vpow.pop %v1997
  %v1999 = vmul.f32 %v1895, 1.442695
  %v2000 = vpow.pop %v1999
  %v2001 = vmul.f32 %v1896, 1.442695
  %v2002 = vpow.pop %v2001
  %v2003 = vmul.f32 %v1897, 1.442695
  %v2004 = vpow.pop %v2003
  %v2005 = vmul.f32 %v1898, 1.442695
  %v2006 = vpow.pop %v2005
  %v2007 = vmul.f32 %v1899, 1.442695
  %v2008 = vpow.pop %v2007
  %v2009 = vmul.f32 %v1900, 1.442695
  %v2010 = vpow.pop %v2009
  %v2011 = vmul.f32 %v1901, 1.442695
  %v2012 = vpow.pop %v2011
  %v2013 = vmul.f32 %v1902, 1.442695
  %v2014 = vpow.pop %v2013
  %v2015 = vadd.f32 %v1904, 1.0
  %v2016 = vlog2.pop %v2015
  %v2017 = vmul.f32 %v2016, 0.6931472
  %v2018 = vmul.f32 -0.5, %v1904
  %v2019 = vadd.f32 %v2018, 1.0
  %v2020 = vmul.f32 %v2019, %v1904
  %v2021 = vand.u32 2147483647, %v1904
  %vm2022 = vcmp.lt.f32.partialorder %v2021, 0.0004427343
  %v2023 = vsel %vm2022, %v2020, %v2017
  %v2024 = vadd.f32 %v1906, 1.0
  %v2025 = vlog2.pop %v2024
  %v2026 = vmul.f32 %v2025, 0.6931472
  %v2027 = vmul.f32 -0.5, %v1906
  %v2028 = vadd.f32 %v2027, 1.0
  %v2029 = vmul.f32 %v2028, %v1906
  %v2030 = vand.u32 2147483647, %v1906
  %vm2031 = vcmp.lt.f32.partialorder %v2030, 0.0004427343
  %v2032 = vsel %vm2031, %v2029, %v2026
  %v2033 = vadd.f32 %v1908, 1.0
  %v2034 = vlog2.pop %v2033
  %v2035 = vmul.f32 %v2034, 0.6931472
  %v2036 = vmul.f32 -0.5, %v1908
  %v2037 = vadd.f32 %v2036, 1.0
  %v2038 = vmul.f32 %v2037, %v1908
  %v2039 = vand.u32 2147483647, %v1908
  %vm2040 = vcmp.lt.f32.partialorder %v2039, 0.0004427343
  %v2041 = vsel %vm2040, %v2038, %v2035
  %v2042 = vadd.f32 %v1910, 1.0
  %v2043 = vlog2.pop %v2042
  %v2044 = vmul.f32 %v2043, 0.6931472
  %v2045 = vmul.f32 -0.5, %v1910
  %v2046 = vadd.f32 %v2045, 1.0
  %v2047 = vmul.f32 %v2046, %v1910
  %v2048 = vand.u32 2147483647, %v1910
  %vm2049 = vcmp.lt.f32.partialorder %v2048, 0.0004427343
  %v2050 = vsel %vm2049, %v2047, %v2044
  %v2051 = vadd.f32 %v1912, 1.0
  %v2052 = vlog2.pop %v2051
  %v2053 = vmul.f32 %v2052, 0.6931472
  %v2054 = vmul.f32 -0.5, %v1912
  %v2055 = vadd.f32 %v2054, 1.0
  %v2056 = vmul.f32 %v2055, %v1912
  %v2057 = vand.u32 2147483647, %v1912
  %vm2058 = vcmp.lt.f32.partialorder %v2057, 0.0004427343
  %v2059 = vsel %vm2058, %v2056, %v2053
  %v2060 = vadd.f32 %v1914, 1.0
  %v2061 = vlog2.pop %v2060
  %v2062 = vmul.f32 %v2061, 0.6931472
  %v2063 = vmul.f32 -0.5, %v1914
  %v2064 = vadd.f32 %v2063, 1.0
  %v2065 = vmul.f32 %v2064, %v1914
  %v2066 = vand.u32 2147483647, %v1914
  %vm2067 = vcmp.lt.f32.partialorder %v2066, 0.0004427343
  %v2068 = vsel %vm2067, %v2065, %v2062
  %v2069 = vadd.f32 %v1916, 1.0
  %v2070 = vlog2.pop %v2069
  %v2071 = vmul.f32 %v2070, 0.6931472
  %v2072 = vmul.f32 -0.5, %v1916
  %v2073 = vadd.f32 %v2072, 1.0
  %v2074 = vmul.f32 %v2073, %v1916
  %v2075 = vand.u32 2147483647, %v1916
  %vm2076 = vcmp.lt.f32.partialorder %v2075, 0.0004427343
  %v2077 = vsel %vm2076, %v2074, %v2071
  %v2078 = vadd.f32 %v1918, 1.0
  %v2079 = vlog2.pop %v2078
  %v2080 = vmul.f32 %v2079, 0.6931472
  %v2081 = vmul.f32 -0.5, %v1918
  %v2082 = vadd.f32 %v2081, 1.0
  %v2083 = vmul.f32 %v2082, %v1918
  %v2084 = vand.u32 2147483647, %v1918
  %vm2085 = vcmp.lt.f32.partialorder %v2084, 0.0004427343
  %v2086 = vsel %vm2085, %v2083, %v2080
  %v2087 = vadd.f32 %v1920, 1.0
  %v2088 = vlog2.pop %v2087
  %v2089 = vmul.f32 %v2088, 0.6931472
  %v2090 = vmul.f32 -0.5, %v1920
  %v2091 = vadd.f32 %v2090, 1.0
  %v2092 = vmul.f32 %v2091, %v1920
  %v2093 = vand.u32 2147483647, %v1920
  %vm2094 = vcmp.lt.f32.partialorder %v2093, 0.0004427343
  %v2095 = vsel %vm2094, %v2092, %v2089
  %v2096 = vadd.f32 %v1922, 1.0
  %v2097 = vlog2.pop %v2096
  %v2098 = vmul.f32 %v2097, 0.6931472
  %v2099 = vmul.f32 -0.5, %v1922
  %v2100 = vadd.f32 %v2099, 1.0
  %v2101 = vmul.f32 %v2100, %v1922
  %v2102 = vand.u32 2147483647, %v1922
  %vm2103 = vcmp.lt.f32.partialorder %v2102, 0.0004427343
  %v2104 = vsel %vm2103, %v2101, %v2098
  %v2105 = vadd.f32 %v1924, 1.0
  %v2106 = vlog2.pop %v2105
  %v2107 = vmul.f32 %v2106, 0.6931472
  %v2108 = vmul.f32 -0.5, %v1924
  %v2109 = vadd.f32 %v2108, 1.0
  %v2110 = vmul.f32 %v2109, %v1924
  %v2111 = vand.u32 2147483647, %v1924
  %vm2112 = vcmp.lt.f32.partialorder %v2111, 0.0004427343
  %v2113 = vsel %vm2112, %v2110, %v2107
  %v2114 = vadd.f32 %v1926, 1.0
  %v2115 = vlog2.pop %v2114
  %v2116 = vmul.f32 %v2115, 0.6931472
  %v2117 = vmul.f32 -0.5, %v1926
  %v2118 = vadd.f32 %v2117, 1.0
  %v2119 = vmul.f32 %v2118, %v1926
  %v2120 = vand.u32 2147483647, %v1926
  %vm2121 = vcmp.lt.f32.partialorder %v2120, 0.0004427343
  %v2122 = vsel %vm2121, %v2119, %v2116
  %v2123 = vadd.f32 %v1928, 1.0
  %v2124 = vlog2.pop %v2123
  %v2125 = vmul.f32 %v2124, 0.6931472
  %v2126 = vmul.f32 -0.5, %v1928
  %v2127 = vadd.f32 %v2126, 1.0
  %v2128 = vmul.f32 %v2127, %v1928
  %v2129 = vand.u32 2147483647, %v1928
  %vm2130 = vcmp.lt.f32.partialorder %v2129, 0.0004427343
  %v2131 = vsel %vm2130, %v2128, %v2125
  %v2132 = vadd.f32 %v1930, 1.0
  %v2133 = vlog2.pop %v2132
  %v2134 = vmul.f32 %v2133, 0.6931472
  %v2135 = vmul.f32 -0.5, %v1930
  %v2136 = vadd.f32 %v2135, 1.0
  %v2137 = vmul.f32 %v2136, %v1930
  %v2138 = vand.u32 2147483647, %v1930
  %vm2139 = vcmp.lt.f32.partialorder %v2138, 0.0004427343
  %v2140 = vsel %vm2139, %v2137, %v2134
  %v2141 = vadd.f32 %v1932, 1.0
  %v2142 = vlog2.pop %v2141
  %v2143 = vmul.f32 %v2142, 0.6931472
  %v2144 = vmul.f32 -0.5, %v1932
  %v2145 = vadd.f32 %v2144, 1.0
  %v2146 = vmul.f32 %v2145, %v1932
  %v2147 = vand.u32 2147483647, %v1932
  %vm2148 = vcmp.lt.f32.partialorder %v2147, 0.0004427343
  %v2149 = vsel %vm2148, %v2146, %v2143
  %v2150 = vadd.f32 %v1934, 1.0
  %v2151 = vlog2.pop %v2150
  %v2152 = vmul.f32 %v2151, 0.6931472
  %v2153 = vmul.f32 -0.5, %v1934
  %v2154 = vadd.f32 %v2153, 1.0
  %v2155 = vmul.f32 %v2154, %v1934
  %v2156 = vand.u32 2147483647, %v1934
  %vm2157 = vcmp.lt.f32.partialorder %v2156, 0.0004427343
  %v2158 = vsel %vm2157, %v2155, %v2152
  %v2159 = vadd.f32 %v1936, 1.0
  %v2160 = vlog2.pop %v2159
  %v2161 = vmul.f32 %v2160, 0.6931472
  %v2162 = vmul.f32 -0.5, %v1936
  %v2163 = vadd.f32 %v2162, 1.0
  %v2164 = vmul.f32 %v2163, %v1936
  %v2165 = vand.u32 2147483647, %v1936
  %vm2166 = vcmp.lt.f32.partialorder %v2165, 0.0004427343
  %v2167 = vsel %vm2166, %v2164, %v2161
  %v2168 = vadd.f32 %v1938, 1.0
  %v2169 = vlog2.pop %v2168
  %v2170 = vmul.f32 %v2169, 0.6931472
  %v2171 = vmul.f32 -0.5, %v1938
  %v2172 = vadd.f32 %v2171, 1.0
  %v2173 = vmul.f32 %v2172, %v1938
  %v2174 = vand.u32 2147483647, %v1938
  %vm2175 = vcmp.lt.f32.partialorder %v2174, 0.0004427343
  %v2176 = vsel %vm2175, %v2173, %v2170
  %v2177 = vadd.f32 %v1940, 1.0
  %v2178 = vlog2.pop %v2177
  %v2179 = vmul.f32 %v2178, 0.6931472
  %v2180 = vmul.f32 -0.5, %v1940
  %v2181 = vadd.f32 %v2180, 1.0
  %v2182 = vmul.f32 %v2181, %v1940
  %v2183 = vand.u32 2147483647, %v1940
  %vm2184 = vcmp.lt.f32.partialorder %v2183, 0.0004427343
  %v2185 = vsel %vm2184, %v2182, %v2179
  %v2186 = vadd.f32 %v1942, 1.0
  %v2187 = vlog2.pop %v2186
  %v2188 = vmul.f32 %v2187, 0.6931472
  %v2189 = vmul.f32 -0.5, %v1942
  %v2190 = vadd.f32 %v2189, 1.0
  %v2191 = vmul.f32 %v2190, %v1942
  %v2192 = vand.u32 2147483647, %v1942
  %vm2193 = vcmp.lt.f32.partialorder %v2192, 0.0004427343
  %v2194 = vsel %vm2193, %v2191, %v2188
  %v2195 = vadd.f32 %v1944, 1.0
  %v2196 = vlog2.pop %v2195
  %v2197 = vmul.f32 %v2196, 0.6931472
  %v2198 = vmul.f32 -0.5, %v1944
  %v2199 = vadd.f32 %v2198, 1.0
  %v2200 = vmul.f32 %v2199, %v1944
  %v2201 = vand.u32 2147483647, %v1944
  %vm2202 = vcmp.lt.f32.partialorder %v2201, 0.0004427343
  %v2203 = vsel %vm2202, %v2200, %v2197
  %v2204 = vadd.f32 %v1946, 1.0
  %v2205 = vlog2.pop %v2204
  %v2206 = vmul.f32 %v2205, 0.6931472
  %v2207 = vmul.f32 -0.5, %v1946
  %v2208 = vadd.f32 %v2207, 1.0
  %v2209 = vmul.f32 %v2208, %v1946
  %v2210 = vand.u32 2147483647, %v1946
  %vm2211 = vcmp.lt.f32.partialorder %v2210, 0.0004427343
  %v2212 = vsel %vm2211, %v2209, %v2206
  %v2213 = vadd.f32 %v1948, 1.0
  %v2214 = vlog2.pop %v2213
  %v2215 = vmul.f32 %v2214, 0.6931472
  %v2216 = vmul.f32 -0.5, %v1948
  %v2217 = vadd.f32 %v2216, 1.0
  %v2218 = vmul.f32 %v2217, %v1948
  %v2219 = vand.u32 2147483647, %v1948
  %vm2220 = vcmp.lt.f32.partialorder %v2219, 0.0004427343
  %v2221 = vsel %vm2220, %v2218, %v2215
  %v2222 = vadd.f32 %v1950, 1.0
  %v2223 = vlog2.pop %v2222
  %v2224 = vmul.f32 %v2223, 0.6931472
  %v2225 = vmul.f32 -0.5, %v1950
  %v2226 = vadd.f32 %v2225, 1.0
  %v2227 = vmul.f32 %v2226, %v1950
  %v2228 = vand.u32 2147483647, %v1950
  %vm2229 = vcmp.lt.f32.partialorder %v2228, 0.0004427343
  %v2230 = vsel %vm2229, %v2227, %v2224
  %v2231 = vadd.f32 %v1952, 1.0
  %v2232 = vlog2.pop %v2231
  %v2233 = vmul.f32 %v2232, 0.6931472
  %v2234 = vmul.f32 -0.5, %v1952
  %v2235 = vadd.f32 %v2234, 1.0
  %v2236 = vmul.f32 %v2235, %v1952
  %v2237 = vand.u32 2147483647, %v1952
  %vm2238 = vcmp.lt.f32.partialorder %v2237, 0.0004427343
  %v2239 = vsel %vm2238, %v2236, %v2233
  %v2240 = vadd.f32 %v1954, 1.0
  %v2241 = vlog2.pop %v2240
  %v2242 = vmul.f32 %v2241, 0.6931472
  %v2243 = vmul.f32 -0.5, %v1954
  %v2244 = vadd.f32 %v2243, 1.0
  %v2245 = vmul.f32 %v2244, %v1954
  %v2246 = vand.u32 2147483647, %v1954
  %vm2247 = vcmp.lt.f32.partialorder %v2246, 0.0004427343
  %v2248 = vsel %vm2247, %v2245, %v2242
  %v2249 = vadd.f32 %v1956, 1.0
  %v2250 = vlog2.pop %v2249
  %v2251 = vmul.f32 %v2250, 0.6931472
  %v2252 = vmul.f32 -0.5, %v1956
  %v2253 = vadd.f32 %v2252, 1.0
  %v2254 = vmul.f32 %v2253, %v1956
  %v2255 = vand.u32 2147483647, %v1956
  %vm2256 = vcmp.lt.f32.partialorder %v2255, 0.0004427343
  %v2257 = vsel %vm2256, %v2254, %v2251
  %v2258 = vadd.f32 %v1958, 1.0
  %v2259 = vlog2.pop %v2258
  %v2260 = vmul.f32 %v2259, 0.6931472
  %v2261 = vmul.f32 -0.5, %v1958
  %v2262 = vadd.f32 %v2261, 1.0
  %v2263 = vmul.f32 %v2262, %v1958
  %v2264 = vand.u32 2147483647, %v1958
  %vm2265 = vcmp.lt.f32.partialorder %v2264, 0.0004427343
  %v2266 = vsel %vm2265, %v2263, %v2260
  %v2267 = vadd.f32 %v1960, 1.0
  %v2268 = vlog2.pop %v2267
  %v2269 = vmul.f32 %v2268, 0.6931472
  %v2270 = vmul.f32 -0.5, %v1960
  %v2271 = vadd.f32 %v2270, 1.0
  %v2272 = vmul.f32 %v2271, %v1960
  %v2273 = vand.u32 2147483647, %v1960
  %vm2274 = vcmp.lt.f32.partialorder %v2273, 0.0004427343
  %v2275 = vsel %vm2274, %v2272, %v2269
  %v2276 = vadd.f32 %v1962, 1.0
  %v2277 = vlog2.pop %v2276
  %v2278 = vmul.f32 %v2277, 0.6931472
  %v2279 = vmul.f32 -0.5, %v1962
  %v2280 = vadd.f32 %v2279, 1.0
  %v2281 = vmul.f32 %v2280, %v1962
  %v2282 = vand.u32 2147483647, %v1962
  %vm2283 = vcmp.lt.f32.partialorder %v2282, 0.0004427343
  %v2284 = vsel %vm2283, %v2281, %v2278
  %v2285 = vadd.f32 %v1964, 1.0
  %v2286 = vlog2.pop %v2285
  %v2287 = vmul.f32 %v2286, 0.6931472
  %v2288 = vmul.f32 -0.5, %v1964
  %v2289 = vadd.f32 %v2288, 1.0
  %v2290 = vmul.f32 %v2289, %v1964
  %v2291 = vand.u32 2147483647, %v1964
  %vm2292 = vcmp.lt.f32.partialorder %v2291, 0.0004427343
  %v2293 = vsel %vm2292, %v2290, %v2287
  %v2294 = vadd.f32 %v1966, 1.0
  %v2295 = vlog2.pop %v2294
  %v2296 = vmul.f32 %v2295, 0.6931472
  %v2297 = vmul.f32 -0.5, %v1966
  %v2298 = vadd.f32 %v2297, 1.0
  %v2299 = vmul.f32 %v2298, %v1966
  %v2300 = vand.u32 2147483647, %v1966
  %vm2301 = vcmp.lt.f32.partialorder %v2300, 0.0004427343
  %v2302 = vsel %vm2301, %v2299, %v2296
  %v2303 = vadd.f32 %v1968, 1.0
  %v2304 = vlog2.pop %v2303
  %v2305 = vmul.f32 %v2304, 0.6931472
  %v2306 = vmul.f32 -0.5, %v1968
  %v2307 = vadd.f32 %v2306, 1.0
  %v2308 = vmul.f32 %v2307, %v1968
  %v2309 = vand.u32 2147483647, %v1968
  %vm2310 = vcmp.lt.f32.partialorder %v2309, 0.0004427343
  %v2311 = vsel %vm2310, %v2308, %v2305
  %v2312 = vadd.f32 %v1970, 1.0
  %v2313 = vlog2.pop %v2312
  %v2314 = vmul.f32 %v2313, 0.6931472
  %v2315 = vmul.f32 -0.5, %v1970
  %v2316 = vadd.f32 %v2315, 1.0
  %v2317 = vmul.f32 %v2316, %v1970
  %v2318 = vand.u32 2147483647, %v1970
  %vm2319 = vcmp.lt.f32.partialorder %v2318, 0.0004427343
  %v2320 = vsel %vm2319, %v2317, %v2314
  %v2321 = vadd.f32 %v1972, 1.0
  %v2322 = vlog2.pop %v2321
  %v2323 = vmul.f32 %v2322, 0.6931472
  %v2324 = vmul.f32 -0.5, %v1972
  %v2325 = vadd.f32 %v2324, 1.0
  %v2326 = vmul.f32 %v2325, %v1972
  %v2327 = vand.u32 2147483647, %v1972
  %vm2328 = vcmp.lt.f32.partialorder %v2327, 0.0004427343
  %v2329 = vsel %vm2328, %v2326, %v2323
  %v2330 = vadd.f32 %v1974, 1.0
  %v2331 = vlog2.pop %v2330
  %v2332 = vmul.f32 %v2331, 0.6931472
  %v2333 = vmul.f32 -0.5, %v1974
  %v2334 = vadd.f32 %v2333, 1.0
  %v2335 = vmul.f32 %v2334, %v1974
  %v2336 = vand.u32 2147483647, %v1974
  %vm2337 = vcmp.lt.f32.partialorder %v2336, 0.0004427343
  %v2338 = vsel %vm2337, %v2335, %v2332
  %v2339 = vadd.f32 %v1976, 1.0
  %v2340 = vlog2.pop %v2339
  %v2341 = vmul.f32 %v2340, 0.6931472
  %v2342 = vmul.f32 -0.5, %v1976
  %v2343 = vadd.f32 %v2342, 1.0
  %v2344 = vmul.f32 %v2343, %v1976
  %v2345 = vand.u32 2147483647, %v1976
  %vm2346 = vcmp.lt.f32.partialorder %v2345, 0.0004427343
  %v2347 = vsel %vm2346, %v2344, %v2341
  %v2348 = vadd.f32 %v1978, 1.0
  %v2349 = vlog2.pop %v2348
  %v2350 = vmul.f32 %v2349, 0.6931472
  %v2351 = vmul.f32 -0.5, %v1978
  %v2352 = vadd.f32 %v2351, 1.0
  %v2353 = vmul.f32 %v2352, %v1978
  %v2354 = vand.u32 2147483647, %v1978
  %vm2355 = vcmp.lt.f32.partialorder %v2354, 0.0004427343
  %v2356 = vsel %vm2355, %v2353, %v2350
  %v2357 = vadd.f32 %v1980, 1.0
  %v2358 = vlog2.pop %v2357
  %v2359 = vmul.f32 %v2358, 0.6931472
  %v2360 = vmul.f32 -0.5, %v1980
  %v2361 = vadd.f32 %v2360, 1.0
  %v2362 = vmul.f32 %v2361, %v1980
  %v2363 = vand.u32 2147483647, %v1980
  %vm2364 = vcmp.lt.f32.partialorder %v2363, 0.0004427343
  %v2365 = vsel %vm2364, %v2362, %v2359
  %v2366 = vadd.f32 %v1982, 1.0
  %v2367 = vlog2.pop %v2366
  %v2368 = vmul.f32 %v2367, 0.6931472
  %v2369 = vmul.f32 -0.5, %v1982
  %v2370 = vadd.f32 %v2369, 1.0
  %v2371 = vmul.f32 %v2370, %v1982
  %v2372 = vand.u32 2147483647, %v1982
  %vm2373 = vcmp.lt.f32.partialorder %v2372, 0.0004427343
  %v2374 = vsel %vm2373, %v2371, %v2368
  %v2375 = vadd.f32 %v1984, 1.0
  %v2376 = vlog2.pop %v2375
  %v2377 = vmul.f32 %v2376, 0.6931472
  %v2378 = vmul.f32 -0.5, %v1984
  %v2379 = vadd.f32 %v2378, 1.0
  %v2380 = vmul.f32 %v2379, %v1984
  %v2381 = vand.u32 2147483647, %v1984
  %vm2382 = vcmp.lt.f32.partialorder %v2381, 0.0004427343
  %v2383 = vsel %vm2382, %v2380, %v2377
  %v2384 = vadd.f32 %v1986, 1.0
  %v2385 = vlog2.pop %v2384
  %v2386 = vmul.f32 %v2385, 0.6931472
  %v2387 = vmul.f32 -0.5, %v1986
  %v2388 = vadd.f32 %v2387, 1.0
  %v2389 = vmul.f32 %v2388, %v1986
  %v2390 = vand.u32 2147483647, %v1986
  %vm2391 = vcmp.lt.f32.partialorder %v2390, 0.0004427343
  %v2392 = vsel %vm2391, %v2389, %v2386
  %v2393 = vadd.f32 %v1988, 1.0
  %v2394 = vlog2.pop %v2393
  %v2395 = vmul.f32 %v2394, 0.6931472
  %v2396 = vmul.f32 -0.5, %v1988
  %v2397 = vadd.f32 %v2396, 1.0
  %v2398 = vmul.f32 %v2397, %v1988
  %v2399 = vand.u32 2147483647, %v1988
  %vm2400 = vcmp.lt.f32.partialorder %v2399, 0.0004427343
  %v2401 = vsel %vm2400, %v2398, %v2395
  %v2402 = vadd.f32 %v1990, 1.0
  %v2403 = vlog2.pop %v2402
  %v2404 = vmul.f32 %v2403, 0.6931472
  %v2405 = vmul.f32 -0.5, %v1990
  %v2406 = vadd.f32 %v2405, 1.0
  %v2407 = vmul.f32 %v2406, %v1990
  %v2408 = vand.u32 2147483647, %v1990
  %vm2409 = vcmp.lt.f32.partialorder %v2408, 0.0004427343
  %v2410 = vsel %vm2409, %v2407, %v2404
  %v2411 = vadd.f32 %v1992, 1.0
  %v2412 = vlog2.pop %v2411
  %v2413 = vmul.f32 %v2412, 0.6931472
  %v2414 = vmul.f32 -0.5, %v1992
  %v2415 = vadd.f32 %v2414, 1.0
  %v2416 = vmul.f32 %v2415, %v1992
  %v2417 = vand.u32 2147483647, %v1992
  %vm2418 = vcmp.lt.f32.partialorder %v2417, 0.0004427343
  %v2419 = vsel %vm2418, %v2416, %v2413
  %v2420 = vadd.f32 %v1994, 1.0
  %v2421 = vlog2.pop %v2420
  %v2422 = vmul.f32 %v2421, 0.6931472
  %v2423 = vmul.f32 -0.5, %v1994
  %v2424 = vadd.f32 %v2423, 1.0
  %v2425 = vmul.f32 %v2424, %v1994
  %v2426 = vand.u32 2147483647, %v1994
  %vm2427 = vcmp.lt.f32.partialorder %v2426, 0.0004427343
  %v2428 = vsel %vm2427, %v2425, %v2422
  %v2429 = vadd.f32 %v1996, 1.0
  %v2430 = vlog2.pop %v2429
  %v2431 = vmul.f32 %v2430, 0.6931472
  %v2432 = vmul.f32 -0.5, %v1996
  %v2433 = vadd.f32 %v2432, 1.0
  %v2434 = vmul.f32 %v2433, %v1996
  %v2435 = vand.u32 2147483647, %v1996
  %vm2436 = vcmp.lt.f32.partialorder %v2435, 0.0004427343
  %v2437 = vsel %vm2436, %v2434, %v2431
  %v2438 = vadd.f32 %v1998, 1.0
  %v2439 = vlog2.pop %v2438
  %v2440 = vmul.f32 %v2439, 0.6931472
  %v2441 = vmul.f32 -0.5, %v1998
  %v2442 = vadd.f32 %v2441, 1.0
  %v2443 = vmul.f32 %v2442, %v1998
  %v2444 = vand.u32 2147483647, %v1998
  %vm2445 = vcmp.lt.f32.partialorder %v2444, 0.0004427343
  %v2446 = vsel %vm2445, %v2443, %v2440
  %v2447 = vadd.f32 %v2000, 1.0
  %v2448 = vlog2.pop %v2447
  %v2449 = vmul.f32 %v2448, 0.6931472
  %v2450 = vmul.f32 -0.5, %v2000
  %v2451 = vadd.f32 %v2450, 1.0
  %v2452 = vmul.f32 %v2451, %v2000
  %v2453 = vand.u32 2147483647, %v2000
  %vm2454 = vcmp.lt.f32.partialorder %v2453, 0.0004427343
  %v2455 = vsel %vm2454, %v2452, %v2449
  %v2456 = vadd.f32 %v2002, 1.0
  %v2457 = vlog2.pop %v2456
  %v2458 = vmul.f32 %v2457, 0.6931472
  %v2459 = vmul.f32 -0.5, %v2002
  %v2460 = vadd.f32 %v2459, 1.0
  %v2461 = vmul.f32 %v2460, %v2002
  %v2462 = vand.u32 2147483647, %v2002
  %vm2463 = vcmp.lt.f32.partialorder %v2462, 0.0004427343
  %v2464 = vsel %vm2463, %v2461, %v2458
  %v2465 = vadd.f32 %v2004, 1.0
  %v2466 = vlog2.pop %v2465
  %v2467 = vmul.f32 %v2466, 0.6931472
  %v2468 = vmul.f32 -0.5, %v2004
  %v2469 = vadd.f32 %v2468, 1.0
  %v2470 = vmul.f32 %v2469, %v2004
  %v2471 = vand.u32 2147483647, %v2004
  %vm2472 = vcmp.lt.f32.partialorder %v2471, 0.0004427343
  %v2473 = vsel %vm2472, %v2470, %v2467
  %v2474 = vadd.f32 %v2006, 1.0
  %v2475 = vlog2.pop %v2474
  %v2476 = vmul.f32 %v2475, 0.6931472
  %v2477 = vmul.f32 -0.5, %v2006
  %v2478 = vadd.f32 %v2477, 1.0
  %v2479 = vmul.f32 %v2478, %v2006
  %v2480 = vand.u32 2147483647, %v2006
  %vm2481 = vcmp.lt.f32.partialorder %v2480, 0.0004427343
  %v2482 = vsel %vm2481, %v2479, %v2476
  %v2483 = vadd.f32 %v2008, 1.0
  %v2484 = vlog2.pop %v2483
  %v2485 = vmul.f32 %v2484, 0.6931472
  %v2486 = vmul.f32 -0.5, %v2008
  %v2487 = vadd.f32 %v2486, 1.0
  %v2488 = vmul.f32 %v2487, %v2008
  %v2489 = vand.u32 2147483647, %v2008
  %vm2490 = vcmp.lt.f32.partialorder %v2489, 0.0004427343
  %v2491 = vsel %vm2490, %v2488, %v2485
  %v2492 = vadd.f32 %v2010, 1.0
  %v2493 = vlog2.pop %v2492
  %v2494 = vmul.f32 %v2493, 0.6931472
  %v2495 = vmul.f32 -0.5, %v2010
  %v2496 = vadd.f32 %v2495, 1.0
  %v2497 = vmul.f32 %v2496, %v2010
  %v2498 = vand.u32 2147483647, %v2010
  %vm2499 = vcmp.lt.f32.partialorder %v2498, 0.0004427343
  %v2500 = vsel %vm2499, %v2497, %v2494
  %v2501 = vadd.f32 %v2012, 1.0
  %v2502 = vlog2.pop %v2501
  %v2503 = vmul.f32 %v2502, 0.6931472
  %v2504 = vmul.f32 -0.5, %v2012
  %v2505 = vadd.f32 %v2504, 1.0
  %v2506 = vmul.f32 %v2505, %v2012
  %v2507 = vand.u32 2147483647, %v2012
  %vm2508 = vcmp.lt.f32.partialorder %v2507, 0.0004427343
  %v2509 = vsel %vm2508, %v2506, %v2503
  %v2510 = vadd.f32 %v2014, 1.0
  %v2511 = vlog2.pop %v2510
  %v2512 = vmul.f32 %v2511, 0.6931472
  %v2513 = vmul.f32 -0.5, %v2014
  %v2514 = vadd.f32 %v2513, 1.0
  %v2515 = vmul.f32 %v2514, %v2014
  %v2516 = vand.u32 2147483647, %v2014
  %vm2517 = vcmp.lt.f32.partialorder %v2516, 0.0004427343
  %v2518 = vsel %vm2517, %v2515, %v2512
  %v2519 = vadd.f32 %v1735, %v2023
  %v2520 = vadd.f32 %v1736, %v2032
  %v2521 = vadd.f32 %v1737, %v2041
  %v2522 = vadd.f32 %v1738, %v2050
  %v2523 = vadd.f32 %v1739, %v2059
  %v2524 = vadd.f32 %v1740, %v2068
  %v2525 = vadd.f32 %v1741, %v2077
  %v2526 = vadd.f32 %v1742, %v2086
  %v2527 = vadd.f32 %v1743, %v2095
  %v2528 = vadd.f32 %v1744, %v2104
  %v2529 = vadd.f32 %v1745, %v2113
  %v2530 = vadd.f32 %v1746, %v2122
  %v2531 = vadd.f32 %v1747, %v2131
  %v2532 = vadd.f32 %v1748, %v2140
  %v2533 = vadd.f32 %v1749, %v2149
  %v2534 = vadd.f32 %v1750, %v2158
  %v2535 = vadd.f32 %v1751, %v2167
  %v2536 = vadd.f32 %v1752, %v2176
  %v2537 = vadd.f32 %v1753, %v2185
  %v2538 = vadd.f32 %v1754, %v2194
  %v2539 = vadd.f32 %v1755, %v2203
  %v2540 = vadd.f32 %v1756, %v2212
  %v2541 = vadd.f32 %v1757, %v2221
  %v2542 = vadd.f32 %v1758, %v2230
  %v2543 = vadd.f32 %v1759, %v2239
  %v2544 = vadd.f32 %v1760, %v2248
  %v2545 = vadd.f32 %v1761, %v2257
  %v2546 = vadd.f32 %v1762, %v2266
  %v2547 = vadd.f32 %v1763, %v2275
  %v2548 = vadd.f32 %v1764, %v2284
  %v2549 = vadd.f32 %v1765, %v2293
  %v2550 = vadd.f32 %v1766, %v2302
  %v2551 = vadd.f32 %v1767, %v2311
  %v2552 = vadd.f32 %v1768, %v2320
  %v2553 = vadd.f32 %v1769, %v2329
  %v2554 = vadd.f32 %v1770, %v2338
  %v2555 = vadd.f32 %v1771, %v2347
  %v2556 = vadd.f32 %v1772, %v2356
  %v2557 = vadd.f32 %v1773, %v2365
  %v2558 = vadd.f32 %v1774, %v2374
  %v2559 = vadd.f32 %v1775, %v2383
  %v2560 = vadd.f32 %v1776, %v2392
  %v2561 = vadd.f32 %v1777, %v2401
  %v2562 = vadd.f32 %v1778, %v2410
  %v2563 = vadd.f32 %v1779, %v2419
  %v2564 = vadd.f32 %v1780, %v2428
  %v2565 = vadd.f32 %v1781, %v2437
  %v2566 = vadd.f32 %v1782, %v2446
  %v2567 = vadd.f32 %v1783, %v2455
  %v2568 = vadd.f32 %v1784, %v2464
  %v2569 = vadd.f32 %v1785, %v2473
  %v2570 = vadd.f32 %v1786, %v2482
  %v2571 = vadd.f32 %v1787, %v2491
  %v2572 = vadd.f32 %v1788, %v2500
  %v2573 = vadd.f32 %v1789, %v2509
  %v2574 = vadd.f32 %v1790, %v2518
  %v2575 = vlaneseq
  %v2576 = vand.u32 %v2575, 127
  %vm2577 = vcmp.lt.s32.totalorder %v2576, 49
  %v2578 = vadd.f32 %v2519, 0.1
  %v2579 = vadd.f32 %v2520, 0.1
  %v2580 = vadd.f32 %v2521, 0.1
  %v2581 = vadd.f32 %v2522, 0.1
  %v2582 = vadd.f32 %v2523, 0.1
  %v2583 = vadd.f32 %v2524, 0.1
  %v2584 = vadd.f32 %v2525, 0.1
  %v2585 = vadd.f32 %v2526, 0.1
  %v2586 = vadd.f32 %v2527, 0.1
  %v2587 = vadd.f32 %v2528, 0.1
  %v2588 = vadd.f32 %v2529, 0.1
  %v2589 = vadd.f32 %v2530, 0.1
  %v2590 = vadd.f32 %v2531, 0.1
  %v2591 = vadd.f32 %v2532, 0.1
  %v2592 = vadd.f32 %v2533, 0.1
  %v2593 = vadd.f32 %v2534, 0.1
  %v2594 = vadd.f32 %v2535, 0.1
  %v2595 = vadd.f32 %v2536, 0.1
  %v2596 = vadd.f32 %v2537, 0.1
  %v2597 = vadd.f32 %v2538, 0.1
  %v2598 = vadd.f32 %v2539, 0.1
  %v2599 = vadd.f32 %v2540, 0.1
  %v2600 = vadd.f32 %v2541, 0.1
  %v2601 = vadd.f32 %v2542, 0.1
  %v2602 = vadd.f32 %v2543, 0.1
  %v2603 = vadd.f32 %v2544, 0.1
  %v2604 = vadd.f32 %v2545, 0.1
  %v2605 = vadd.f32 %v2546, 0.1
  %v2606 = vadd.f32 %v2547, 0.1
  %v2607 = vadd.f32 %v2548, 0.1
  %v2608 = vadd.f32 %v2549, 0.1
  %v2609 = vadd.f32 %v2550, 0.1
  %v2610 = vadd.f32 %v2551, 0.1
  %v2611 = vadd.f32 %v2552, 0.1
  %v2612 = vadd.f32 %v2553, 0.1
  %v2613 = vadd.f32 %v2554, 0.1
  %v2614 = vadd.f32 %v2555, 0.1
  %v2615 = vadd.f32 %v2556, 0.1
  %v2616 = vadd.f32 %v2557, 0.1
  %v2617 = vadd.f32 %v2558, 0.1
  %v2618 = vadd.f32 %v2559, 0.1
  %v2619 = vadd.f32 %v2560, 0.1
  %v2620 = vadd.f32 %v2561, 0.1
  %v2621 = vadd.f32 %v2562, 0.1
  %v2622 = vadd.f32 %v2563, 0.1
  %v2623 = vadd.f32 %v2564, 0.1
  %v2624 = vadd.f32 %v2565, 0.1
  %v2625 = vadd.f32 %v2566, 0.1
  %v2626 = vadd.f32 %v2567, 0.1
  %v2627 = vadd.f32 %v2568, 0.1
  %v2628 = vadd.f32 %v2569, 0.1
  %v2629 = vadd.f32 %v2570, 0.1
  %v2630 = vadd.f32 %v2571, 0.1
  %v2631 = vadd.f32 %v2572, 0.1
  %v2632 = vadd.f32 %v2573, 0.1
  %v2633 = vadd.f32 %v2574, 0.1
  %v2690 = vperm.slane %v2578, %v2576
  %v2691 = vadd.s32 %v2576, 4294967288
  %v2692 = vperm.slane %v2579, %v2691
  %vm2693 = vcmask 130112
  %v2694 = vsel %vm2693, %v2692, %v2690
  %v2695 = vadd.s32 %v2576, 4294967280
  %v2696 = vperm.slane %v2580, %v2695
  %vm2697 = vcmask 195712
  %v2698 = vsel %vm2697, %v2696, %v2694
  %v2699 = vadd.s32 %v2576, 4294967272
  %v2700 = vperm.slane %v2581, %v2699
  %vm2701 = vcmask 261312
  %v2702 = vsel %vm2701, %v2700, %v2698
  %v2703 = vadd.s32 %v2576, 4294967264
  %v2704 = vperm.slane %v2582, %v2703
  %vm2705 = vcmask 326912
  %v2706 = vsel %vm2705, %v2704, %v2702
  %v2707 = vadd.s32 %v2576, 4294967256
  %v2708 = vperm.slane %v2583, %v2707
  %vm2709 = vcmask 392512
  %v2710 = vsel %vm2709, %v2708, %v2706
  %v2711 = vadd.s32 %v2576, 4294967248
  %v2712 = vperm.slane %v2584, %v2711
  %vm2713 = vcmask 458112
  %v2714 = vsel %vm2713, %v2712, %v2710
  %v2715 = vperm.slane %v2585, %v2576
  %v2716 = vperm.slane %v2586, %v2691
  %v2717 = vsel %vm2693, %v2716, %v2715
  %v2718 = vperm.slane %v2587, %v2695
  %v2719 = vsel %vm2697, %v2718, %v2717
  %v2720 = vperm.slane %v2588, %v2699
  %v2721 = vsel %vm2701, %v2720, %v2719
  %v2722 = vperm.slane %v2589, %v2703
  %v2723 = vsel %vm2705, %v2722, %v2721
  %v2724 = vperm.slane %v2590, %v2707
  %v2725 = vsel %vm2709, %v2724, %v2723
  %v2726 = vperm.slane %v2591, %v2711
  %v2727 = vsel %vm2713, %v2726, %v2725
  %v2728 = vperm.slane %v2592, %v2576
  %v2729 = vperm.slane %v2593, %v2691
  %v2730 = vsel %vm2693, %v2729, %v2728
  %v2731 = vperm.slane %v2594, %v2695
  %v2732 = vsel %vm2697, %v2731, %v2730
  %v2733 = vperm.slane %v2595, %v2699
  %v2734 = vsel %vm2701, %v2733, %v2732
  %v2735 = vperm.slane %v2596, %v2703
  %v2736 = vsel %vm2705, %v2735, %v2734
  %v2737 = vperm.slane %v2597, %v2707
  %v2738 = vsel %vm2709, %v2737, %v2736
  %v2739 = vperm.slane %v2598, %v2711
  %v2740 = vsel %vm2713, %v2739, %v2738
  %v2741 = vperm.slane %v2599, %v2576
  %v2742 = vperm.slane %v2600, %v2691
  %v2743 = vsel %vm2693, %v2742, %v2741
  %v2744 = vperm.slane %v2601, %v2695
  %v2745 = vsel %vm2697, %v2744, %v2743
  %v2746 = vperm.slane %v2602, %v2699
  %v2747 = vsel %vm2701, %v2746, %v2745
  %v2748 = vperm.slane %v2603, %v2703
  %v2749 = vsel %vm2705, %v2748, %v2747
  %v2750 = vperm.slane %v2604, %v2707
  %v2751 = vsel %vm2709, %v2750, %v2749
  %v2752 = vperm.slane %v2605, %v2711
  %v2753 = vsel %vm2713, %v2752, %v2751
  %v2754 = vperm.slane %v2606, %v2576
  %v2755 = vperm.slane %v2607, %v2691
  %v2756 = vsel %vm2693, %v2755, %v2754
  %v2757 = vperm.slane %v2608, %v2695
  %v2758 = vsel %vm2697, %v2757, %v2756
  %v2759 = vperm.slane %v2609, %v2699
  %v2760 = vsel %vm2701, %v2759, %v2758
  %v2761 = vperm.slane %v2610, %v2703
  %v2762 = vsel %vm2705, %v2761, %v2760
  %v2763 = vperm.slane %v2611, %v2707
  %v2764 = vsel %vm2709, %v2763, %v2762
  %v2765 = vperm.slane %v2612, %v2711
  %v2766 = vsel %vm2713, %v2765, %v2764
  %v2767 = vperm.slane %v2613, %v2576
  %v2768 = vperm.slane %v2614, %v2691
  %v2769 = vsel %vm2693, %v2768, %v2767
  %v2770 = vperm.slane %v2615, %v2695
  %v2771 = vsel %vm2697, %v2770, %v2769
  %v2772 = vperm.slane %v2616, %v2699
  %v2773 = vsel %vm2701, %v2772, %v2771
  %v2774 = vperm.slane %v2617, %v2703
  %v2775 = vsel %vm2705, %v2774, %v2773
  %v2776 = vperm.slane %v2618, %v2707
  %v2777 = vsel %vm2709, %v2776, %v2775
  %v2778 = vperm.slane %v2619, %v2711
  %v2779 = vsel %vm2713, %v2778, %v2777
  %v2780 = vperm.slane %v2620, %v2576
  %v2781 = vperm.slane %v2621, %v2691
  %v2782 = vsel %vm2693, %v2781, %v2780
  %v2783 = vperm.slane %v2622, %v2695
  %v2784 = vsel %vm2697, %v2783, %v2782
  %v2785 = vperm.slane %v2623, %v2699
  %v2786 = vsel %vm2701, %v2785, %v2784
  %v2787 = vperm.slane %v2624, %v2703
  %v2788 = vsel %vm2705, %v2787, %v2786
  %v2789 = vperm.slane %v2625, %v2707
  %v2790 = vsel %vm2709, %v2789, %v2788
  %v2791 = vperm.slane %v2626, %v2711
  %v2792 = vsel %vm2713, %v2791, %v2790
  %v2793 = vperm.slane %v2627, %v2576
  %v2794 = vperm.slane %v2628, %v2691
  %v2795 = vsel %vm2693, %v2794, %v2793
  %v2796 = vperm.slane %v2629, %v2695
  %v2797 = vsel %vm2697, %v2796, %v2795
  %v2798 = vperm.slane %v2630, %v2699
  %v2799 = vsel %vm2701, %v2798, %v2797
  %v2800 = vperm.slane %v2631, %v2703
  %v2801 = vsel %vm2705, %v2800, %v2799
  %v2802 = vperm.slane %v2632, %v2707
  %v2803 = vsel %vm2709, %v2802, %v2801
  %v2804 = vperm.slane %v2633, %v2711
  %v2805 = vsel %vm2713, %v2804, %v2803
  %v2806 = vsel %vm580, %v2727, %v2714
  %v2807 = vsel %vm582, %v2740, %v2806
  %v2808 = vsel %vm584, %v2753, %v2807
  %v2809 = vsel %vm586, %v2766, %v2808
  %v2810 = vsel %vm588, %v2779, %v2809
  %v2811 = vsel %vm590, %v2792, %v2810
  %v2812 = vsel %vm592, %v2805, %v2811
  %v2814 = vsel %vm2577, %v2812, 0.0
  %vm2815 = vcmask 457728
  %v2816 = vsel %vm2815, %v2814, 0.0
  %2817 = vadd.xlane.f32.xlu0 %v2816
  %v2818 = vpop.xlane.xlu0 %2817
  %v2819 = vrcp.pop %v2818
  %v2820 = vmul.f32 %v2814, %v2819
  %v2821 = vperm.slane %v2820, 0
  %v2822 = vlaneseq
  %v2823 = vshrl.u32 %v2822, 7
  %2825 = vset.pattern.permute.xlu0 %v2823
  %2826 = vperm.xlu0 %2825, %v2821
  %v2827 = vpop.permute.xlu0 %2826
  %v2828 = vlaneseq
  %v2829 = vshrl.u32 %v2828, 7
  %v2830 = vadd.s32 %v2829, 8
  %2831 = vset.pattern.permute.xlu0 %v2830
  %2832 = vperm.xlu0 %2831, %v2821
  %v2833 = vpop.permute.xlu0 %2832
  %v2834 = vlaneseq
  %v2835 = vshrl.u32 %v2834, 7
  %v2836 = vadd.s32 %v2835, 16
  %2837 = vset.pattern.permute.xlu0 %v2836
  %2838 = vperm.xlu0 %2837, %v2821
  %v2839 = vpop.permute.xlu0 %2838
  %v2840 = vlaneseq
  %v2841 = vshrl.u32 %v2840, 7
  %v2842 = vadd.s32 %v2841, 24
  %2843 = vset.pattern.permute.xlu0 %v2842
  %2844 = vperm.xlu0 %2843, %v2821
  %v2845 = vpop.permute.xlu0 %2844
  %v2846 = vlaneseq
  %v2847 = vshrl.u32 %v2846, 7
  %v2848 = vadd.s32 %v2847, 32
  %2849 = vset.pattern.permute.xlu0 %v2848
  %2850 = vperm.xlu0 %2849, %v2821
  %v2851 = vpop.permute.xlu0 %2850
  %v2852 = vlaneseq
  %v2853 = vshrl.u32 %v2852, 7
  %v2854 = vadd.s32 %v2853, 40
  %2855 = vset.pattern.permute.xlu0 %v2854
  %2856 = vperm.xlu0 %2855, %v2821
  %v2857 = vpop.permute.xlu0 %2856
  %v2858 = vlaneseq
  %v2859 = vshrl.u32 %v2858, 7
  %v2860 = vadd.s32 %v2859, 48
  %2861 = vset.pattern.permute.xlu0 %v2860
  %2862 = vperm.xlu0 %2861, %v2821
  %v2863 = vpop.permute.xlu0 %2862
  %v2864 = vperm.slane %v2820, 1
  %v2865 = vlaneseq
  %v2866 = vshrl.u32 %v2865, 7
  %2868 = vset.pattern.permute.xlu0 %v2866
  %2869 = vperm.xlu0 %2868, %v2864
  %v2870 = vpop.permute.xlu0 %2869
  %v2871 = vlaneseq
  %v2872 = vshrl.u32 %v2871, 7
  %v2873 = vadd.s32 %v2872, 8
  %2874 = vset.pattern.permute.xlu0 %v2873
  %2875 = vperm.xlu0 %2874, %v2864
  %v2876 = vpop.permute.xlu0 %2875
  %v2877 = vlaneseq
  %v2878 = vshrl.u32 %v2877, 7
  %v2879 = vadd.s32 %v2878, 16
  %2880 = vset.pattern.permute.xlu0 %v2879
  %2881 = vperm.xlu0 %2880, %v2864
  %v2882 = vpop.permute.xlu0 %2881
  %v2883 = vlaneseq
  %v2884 = vshrl.u32 %v2883, 7
  %v2885 = vadd.s32 %v2884, 24
  %2886 = vset.pattern.permute.xlu0 %v2885
  %2887 = vperm.xlu0 %2886, %v2864
  %v2888 = vpop.permute.xlu0 %2887
  %v2889 = vlaneseq
  %v2890 = vshrl.u32 %v2889, 7
  %v2891 = vadd.s32 %v2890, 32
  %2892 = vset.pattern.permute.xlu0 %v2891
  %2893 = vperm.xlu0 %2892, %v2864
  %v2894 = vpop.permute.xlu0 %2893
  %v2895 = vlaneseq
  %v2896 = vshrl.u32 %v2895, 7
  %v2897 = vadd.s32 %v2896, 40
  %2898 = vset.pattern.permute.xlu0 %v2897
  %2899 = vperm.xlu0 %2898, %v2864
  %v2900 = vpop.permute.xlu0 %2899
  %v2901 = vlaneseq
  %v2902 = vshrl.u32 %v2901, 7
  %v2903 = vadd.s32 %v2902, 48
  %2904 = vset.pattern.permute.xlu0 %v2903
  %2905 = vperm.xlu0 %2904, %v2864
  %v2906 = vpop.permute.xlu0 %2905
  %v2907 = vperm.slane %v2820, 2
  %v2908 = vlaneseq
  %v2909 = vshrl.u32 %v2908, 7
  %2911 = vset.pattern.permute.xlu0 %v2909
  %2912 = vperm.xlu0 %2911, %v2907
  %v2913 = vpop.permute.xlu0 %2912
  %v2914 = vlaneseq
  %v2915 = vshrl.u32 %v2914, 7
  %v2916 = vadd.s32 %v2915, 8
  %2917 = vset.pattern.permute.xlu0 %v2916
  %2918 = vperm.xlu0 %2917, %v2907
  %v2919 = vpop.permute.xlu0 %2918
  %v2920 = vlaneseq
  %v2921 = vshrl.u32 %v2920, 7
  %v2922 = vadd.s32 %v2921, 16
  %2923 = vset.pattern.permute.xlu0 %v2922
  %2924 = vperm.xlu0 %2923, %v2907
  %v2925 = vpop.permute.xlu0 %2924
  %v2926 = vlaneseq
  %v2927 = vshrl.u32 %v2926, 7
  %v2928 = vadd.s32 %v2927, 24
  %2929 = vset.pattern.permute.xlu0 %v2928
  %2930 = vperm.xlu0 %2929, %v2907
  %v2931 = vpop.permute.xlu0 %2930
  %v2932 = vlaneseq
  %v2933 = vshrl.u32 %v2932, 7
  %v2934 = vadd.s32 %v2933, 32
  %2935 = vset.pattern.permute.xlu0 %v2934
  %2936 = vperm.xlu0 %2935, %v2907
  %v2937 = vpop.permute.xlu0 %2936
  %v2938 = vlaneseq
  %v2939 = vshrl.u32 %v2938, 7
  %v2940 = vadd.s32 %v2939, 40
  %2941 = vset.pattern.permute.xlu0 %v2940
  %2942 = vperm.xlu0 %2941, %v2907
  %v2943 = vpop.permute.xlu0 %2942
  %v2944 = vlaneseq
  %v2945 = vshrl.u32 %v2944, 7
  %v2946 = vadd.s32 %v2945, 48
  %2947 = vset.pattern.permute.xlu0 %v2946
  %2948 = vperm.xlu0 %2947, %v2907
  %v2949 = vpop.permute.xlu0 %2948
  %v2950 = vperm.slane %v2820, 3
  %v2951 = vlaneseq
  %v2952 = vshrl.u32 %v2951, 7
  %2954 = vset.pattern.permute.xlu0 %v2952
  %2955 = vperm.xlu0 %2954, %v2950
  %v2956 = vpop.permute.xlu0 %2955
  %v2957 = vlaneseq
  %v2958 = vshrl.u32 %v2957, 7
  %v2959 = vadd.s32 %v2958, 8
  %2960 = vset.pattern.permute.xlu0 %v2959
  %2961 = vperm.xlu0 %2960, %v2950
  %v2962 = vpop.permute.xlu0 %2961
  %v2963 = vlaneseq
  %v2964 = vshrl.u32 %v2963, 7
  %v2965 = vadd.s32 %v2964, 16
  %2966 = vset.pattern.permute.xlu0 %v2965
  %2967 = vperm.xlu0 %2966, %v2950
  %v2968 = vpop.permute.xlu0 %2967
  %v2969 = vlaneseq
  %v2970 = vshrl.u32 %v2969, 7
  %v2971 = vadd.s32 %v2970, 24
  %2972 = vset.pattern.permute.xlu0 %v2971
  %2973 = vperm.xlu0 %2972, %v2950
  %v2974 = vpop.permute.xlu0 %2973
  %v2975 = vlaneseq
  %v2976 = vshrl.u32 %v2975, 7
  %v2977 = vadd.s32 %v2976, 32
  %2978 = vset.pattern.permute.xlu0 %v2977
  %2979 = vperm.xlu0 %2978, %v2950
  %v2980 = vpop.permute.xlu0 %2979
  %v2981 = vlaneseq
  %v2982 = vshrl.u32 %v2981, 7
  %v2983 = vadd.s32 %v2982, 40
  %2984 = vset.pattern.permute.xlu0 %v2983
  %2985 = vperm.xlu0 %2984, %v2950
  %v2986 = vpop.permute.xlu0 %2985
  %v2987 = vlaneseq
  %v2988 = vshrl.u32 %v2987, 7
  %v2989 = vadd.s32 %v2988, 48
  %2990 = vset.pattern.permute.xlu0 %v2989
  %2991 = vperm.xlu0 %2990, %v2950
  %v2992 = vpop.permute.xlu0 %2991
  %v2993 = vperm.slane %v2820, 4
  %v2994 = vlaneseq
  %v2995 = vshrl.u32 %v2994, 7
  %2997 = vset.pattern.permute.xlu0 %v2995
  %2998 = vperm.xlu0 %2997, %v2993
  %v2999 = vpop.permute.xlu0 %2998
  %v3000 = vlaneseq
  %v3001 = vshrl.u32 %v3000, 7
  %v3002 = vadd.s32 %v3001, 8
  %3003 = vset.pattern.permute.xlu0 %v3002
  %3004 = vperm.xlu0 %3003, %v2993
  %v3005 = vpop.permute.xlu0 %3004
  %v3006 = vlaneseq
  %v3007 = vshrl.u32 %v3006, 7
  %v3008 = vadd.s32 %v3007, 16
  %3009 = vset.pattern.permute.xlu0 %v3008
  %3010 = vperm.xlu0 %3009, %v2993
  %v3011 = vpop.permute.xlu0 %3010
  %v3012 = vlaneseq
  %v3013 = vshrl.u32 %v3012, 7
  %v3014 = vadd.s32 %v3013, 24
  %3015 = vset.pattern.permute.xlu0 %v3014
  %3016 = vperm.xlu0 %3015, %v2993
  %v3017 = vpop.permute.xlu0 %3016
  %v3018 = vlaneseq
  %v3019 = vshrl.u32 %v3018, 7
  %v3020 = vadd.s32 %v3019, 32
  %3021 = vset.pattern.permute.xlu0 %v3020
  %3022 = vperm.xlu0 %3021, %v2993
  %v3023 = vpop.permute.xlu0 %3022
  %v3024 = vlaneseq
  %v3025 = vshrl.u32 %v3024, 7
  %v3026 = vadd.s32 %v3025, 40
  %3027 = vset.pattern.permute.xlu0 %v3026
  %3028 = vperm.xlu0 %3027, %v2993
  %v3029 = vpop.permute.xlu0 %3028
  %v3030 = vlaneseq
  %v3031 = vshrl.u32 %v3030, 7
  %v3032 = vadd.s32 %v3031, 48
  %3033 = vset.pattern.permute.xlu0 %v3032
  %3034 = vperm.xlu0 %3033, %v2993
  %v3035 = vpop.permute.xlu0 %3034
  %v3036 = vperm.slane %v2820, 5
  %v3037 = vlaneseq
  %v3038 = vshrl.u32 %v3037, 7
  %3040 = vset.pattern.permute.xlu0 %v3038
  %3041 = vperm.xlu0 %3040, %v3036
  %v3042 = vpop.permute.xlu0 %3041
  %v3043 = vlaneseq
  %v3044 = vshrl.u32 %v3043, 7
  %v3045 = vadd.s32 %v3044, 8
  %3046 = vset.pattern.permute.xlu0 %v3045
  %3047 = vperm.xlu0 %3046, %v3036
  %v3048 = vpop.permute.xlu0 %3047
  %v3049 = vlaneseq
  %v3050 = vshrl.u32 %v3049, 7
  %v3051 = vadd.s32 %v3050, 16
  %3052 = vset.pattern.permute.xlu0 %v3051
  %3053 = vperm.xlu0 %3052, %v3036
  %v3054 = vpop.permute.xlu0 %3053
  %v3055 = vlaneseq
  %v3056 = vshrl.u32 %v3055, 7
  %v3057 = vadd.s32 %v3056, 24
  %3058 = vset.pattern.permute.xlu0 %v3057
  %3059 = vperm.xlu0 %3058, %v3036
  %v3060 = vpop.permute.xlu0 %3059
  %v3061 = vlaneseq
  %v3062 = vshrl.u32 %v3061, 7
  %v3063 = vadd.s32 %v3062, 32
  %3064 = vset.pattern.permute.xlu0 %v3063
  %3065 = vperm.xlu0 %3064, %v3036
  %v3066 = vpop.permute.xlu0 %3065
  %v3067 = vlaneseq
  %v3068 = vshrl.u32 %v3067, 7
  %v3069 = vadd.s32 %v3068, 40
  %3070 = vset.pattern.permute.xlu0 %v3069
  %3071 = vperm.xlu0 %3070, %v3036
  %v3072 = vpop.permute.xlu0 %3071
  %v3073 = vlaneseq
  %v3074 = vshrl.u32 %v3073, 7
  %v3075 = vadd.s32 %v3074, 48
  %3076 = vset.pattern.permute.xlu0 %v3075
  %3077 = vperm.xlu0 %3076, %v3036
  %v3078 = vpop.permute.xlu0 %3077
  %v3079 = vperm.slane %v2820, 6
  %v3080 = vlaneseq
  %v3081 = vshrl.u32 %v3080, 7
  %3083 = vset.pattern.permute.xlu0 %v3081
  %3084 = vperm.xlu0 %3083, %v3079
  %v3085 = vpop.permute.xlu0 %3084
  %v3086 = vlaneseq
  %v3087 = vshrl.u32 %v3086, 7
  %v3088 = vadd.s32 %v3087, 8
  %3089 = vset.pattern.permute.xlu0 %v3088
  %3090 = vperm.xlu0 %3089, %v3079
  %v3091 = vpop.permute.xlu0 %3090
  %v3092 = vlaneseq
  %v3093 = vshrl.u32 %v3092, 7
  %v3094 = vadd.s32 %v3093, 16
  %3095 = vset.pattern.permute.xlu0 %v3094
  %3096 = vperm.xlu0 %3095, %v3079
  %v3097 = vpop.permute.xlu0 %3096
  %v3098 = vlaneseq
  %v3099 = vshrl.u32 %v3098, 7
  %v3100 = vadd.s32 %v3099, 24
  %3101 = vset.pattern.permute.xlu0 %v3100
  %3102 = vperm.xlu0 %3101, %v3079
  %v3103 = vpop.permute.xlu0 %3102
  %v3104 = vlaneseq
  %v3105 = vshrl.u32 %v3104, 7
  %v3106 = vadd.s32 %v3105, 32
  %3107 = vset.pattern.permute.xlu0 %v3106
  %3108 = vperm.xlu0 %3107, %v3079
  %v3109 = vpop.permute.xlu0 %3108
  %v3110 = vlaneseq
  %v3111 = vshrl.u32 %v3110, 7
  %v3112 = vadd.s32 %v3111, 40
  %3113 = vset.pattern.permute.xlu0 %v3112
  %3114 = vperm.xlu0 %3113, %v3079
  %v3115 = vpop.permute.xlu0 %3114
  %v3116 = vlaneseq
  %v3117 = vshrl.u32 %v3116, 7
  %v3118 = vadd.s32 %v3117, 48
  %3119 = vset.pattern.permute.xlu0 %v3118
  %3120 = vperm.xlu0 %3119, %v3079
  %v3121 = vpop.permute.xlu0 %3120
  %v3122 = vperm.slane %v2820, 7
  %v3123 = vlaneseq
  %v3124 = vshrl.u32 %v3123, 7
  %3126 = vset.pattern.permute.xlu0 %v3124
  %3127 = vperm.xlu0 %3126, %v3122
  %v3128 = vpop.permute.xlu0 %3127
  %v3129 = vlaneseq
  %v3130 = vshrl.u32 %v3129, 7
  %v3131 = vadd.s32 %v3130, 8
  %3132 = vset.pattern.permute.xlu0 %v3131
  %3133 = vperm.xlu0 %3132, %v3122
  %v3134 = vpop.permute.xlu0 %3133
  %v3135 = vlaneseq
  %v3136 = vshrl.u32 %v3135, 7
  %v3137 = vadd.s32 %v3136, 16
  %3138 = vset.pattern.permute.xlu0 %v3137
  %3139 = vperm.xlu0 %3138, %v3122
  %v3140 = vpop.permute.xlu0 %3139
  %v3141 = vlaneseq
  %v3142 = vshrl.u32 %v3141, 7
  %v3143 = vadd.s32 %v3142, 24
  %3144 = vset.pattern.permute.xlu0 %v3143
  %3145 = vperm.xlu0 %3144, %v3122
  %v3146 = vpop.permute.xlu0 %3145
  %v3147 = vlaneseq
  %v3148 = vshrl.u32 %v3147, 7
  %v3149 = vadd.s32 %v3148, 32
  %3150 = vset.pattern.permute.xlu0 %v3149
  %3151 = vperm.xlu0 %3150, %v3122
  %v3152 = vpop.permute.xlu0 %3151
  %v3153 = vlaneseq
  %v3154 = vshrl.u32 %v3153, 7
  %v3155 = vadd.s32 %v3154, 40
  %3156 = vset.pattern.permute.xlu0 %v3155
  %3157 = vperm.xlu0 %3156, %v3122
  %v3158 = vpop.permute.xlu0 %3157
  %v3159 = vlaneseq
  %v3160 = vshrl.u32 %v3159, 7
  %v3161 = vadd.s32 %v3160, 48
  %3162 = vset.pattern.permute.xlu0 %v3161
  %3163 = vperm.xlu0 %3162, %v3122
  %v3164 = vpop.permute.xlu0 %3163
  %v3165 = vmul.f32 %v106, %v2827
  %v3166 = vmul.f32 %v107, %v2827
  %v3167 = vmul.f32 %v108, %v2833
  %v3168 = vmul.f32 %v109, %v2833
  %v3169 = vmul.f32 %v110, %v2839
  %v3170 = vmul.f32 %v111, %v2839
  %v3171 = vmul.f32 %v112, %v2845
  %v3172 = vmul.f32 %v113, %v2845
  %v3173 = vmul.f32 %v114, %v2851
  %v3174 = vmul.f32 %v115, %v2851
  %v3175 = vmul.f32 %v116, %v2857
  %v3176 = vmul.f32 %v117, %v2857
  %v3177 = vmul.f32 %v118, %v2863
  %v3178 = vmul.f32 %v119, %v2863
  %v3179 = vmul.f32 %v120, %v2870
  %v3180 = vmul.f32 %v121, %v2870
  %v3181 = vmul.f32 %v122, %v2876
  %v3182 = vmul.f32 %v123, %v2876
  %v3183 = vmul.f32 %v124, %v2882
  %v3184 = vmul.f32 %v125, %v2882
  %v3185 = vmul.f32 %v126, %v2888
  %v3186 = vmul.f32 %v127, %v2888
  %v3187 = vmul.f32 %v128, %v2894
  %v3188 = vmul.f32 %v129, %v2894
  %v3189 = vmul.f32 %v130, %v2900
  %v3190 = vmul.f32 %v131, %v2900
  %v3191 = vmul.f32 %v132, %v2906
  %v3192 = vmul.f32 %v133, %v2906
  %v3193 = vmul.f32 %v134, %v2913
  %v3194 = vmul.f32 %v135, %v2913
  %v3195 = vmul.f32 %v136, %v2919
  %v3196 = vmul.f32 %v137, %v2919
  %v3197 = vmul.f32 %v138, %v2925
  %v3198 = vmul.f32 %v139, %v2925
  %v3199 = vmul.f32 %v140, %v2931
  %v3200 = vmul.f32 %v141, %v2931
  %v3201 = vmul.f32 %v142, %v2937
  %v3202 = vmul.f32 %v143, %v2937
  %v3203 = vmul.f32 %v144, %v2943
  %v3204 = vmul.f32 %v145, %v2943
  %v3205 = vmul.f32 %v146, %v2949
  %v3206 = vmul.f32 %v147, %v2949
  %v3207 = vmul.f32 %v148, %v2956
  %v3208 = vmul.f32 %v149, %v2956
  %v3209 = vmul.f32 %v150, %v2962
  %v3210 = vmul.f32 %v151, %v2962
  %v3211 = vmul.f32 %v152, %v2968
  %v3212 = vmul.f32 %v153, %v2968
  %v3213 = vmul.f32 %v154, %v2974
  %v3214 = vmul.f32 %v155, %v2974
  %v3215 = vmul.f32 %v156, %v2980
  %v3216 = vmul.f32 %v157, %v2980
  %v3217 = vmul.f32 %v158, %v2986
  %v3218 = vmul.f32 %v159, %v2986
  %v3219 = vmul.f32 %v160, %v2992
  %v3220 = vmul.f32 %v161, %v2992
  %v3221 = vmul.f32 %v162, %v2999
  %v3222 = vmul.f32 %v163, %v2999
  %v3223 = vmul.f32 %v164, %v3005
  %v3224 = vmul.f32 %v165, %v3005
  %v3225 = vmul.f32 %v166, %v3011
  %v3226 = vmul.f32 %v167, %v3011
  %v3227 = vmul.f32 %v168, %v3017
  %v3228 = vmul.f32 %v169, %v3017
  %v3229 = vmul.f32 %v170, %v3023
  %v3230 = vmul.f32 %v171, %v3023
  %v3231 = vmul.f32 %v172, %v3029
  %v3232 = vmul.f32 %v173, %v3029
  %v3233 = vmul.f32 %v174, %v3035
  %v3234 = vmul.f32 %v175, %v3035
  %v3235 = vmul.f32 %v176, %v3042
  %v3236 = vmul.f32 %v177, %v3042
  %v3237 = vmul.f32 %v178, %v3048
  %v3238 = vmul.f32 %v179, %v3048
  %v3239 = vmul.f32 %v180, %v3054
  %v3240 = vmul.f32 %v181, %v3054
  %v3241 = vmul.f32 %v182, %v3060
  %v3242 = vmul.f32 %v183, %v3060
  %v3243 = vmul.f32 %v184, %v3066
  %v3244 = vmul.f32 %v185, %v3066
  %v3245 = vmul.f32 %v186, %v3072
  %v3246 = vmul.f32 %v187, %v3072
  %v3247 = vmul.f32 %v188, %v3078
  %v3248 = vmul.f32 %v189, %v3078
  %v3249 = vmul.f32 %v190, %v3085
  %v3250 = vmul.f32 %v191, %v3085
  %v3251 = vmul.f32 %v192, %v3091
  %v3252 = vmul.f32 %v193, %v3091
  %v3253 = vmul.f32 %v194, %v3097
  %v3254 = vmul.f32 %v195, %v3097
  %v3255 = vmul.f32 %v196, %v3103
  %v3256 = vmul.f32 %v197, %v3103
  %v3257 = vmul.f32 %v198, %v3109
  %v3258 = vmul.f32 %v199, %v3109
  %v3259 = vmul.f32 %v200, %v3115
  %v3260 = vmul.f32 %v201, %v3115
  %v3261 = vmul.f32 %v202, %v3121
  %v3262 = vmul.f32 %v203, %v3121
  %v3263 = vmul.f32 %v204, %v3128
  %v3264 = vmul.f32 %v205, %v3128
  %v3265 = vmul.f32 %v206, %v3134
  %v3266 = vmul.f32 %v207, %v3134
  %v3267 = vmul.f32 %v208, %v3140
  %v3268 = vmul.f32 %v209, %v3140
  %v3269 = vmul.f32 %v210, %v3146
  %v3270 = vmul.f32 %v211, %v3146
  %v3271 = vmul.f32 %v212, %v3152
  %v3272 = vmul.f32 %v213, %v3152
  %v3273 = vmul.f32 %v214, %v3158
  %v3274 = vmul.f32 %v215, %v3158
  %v3275 = vmul.f32 %v216, %v3164
  %v3276 = vmul.f32 %v217, %v3164
  %v3277 = vadd.f32 %v3165, %v3167
  %v3278 = vadd.f32 %v3277, %v3169
  %v3279 = vadd.f32 %v3278, %v3171
  %v3280 = vadd.f32 %v3279, %v3173
  %v3281 = vadd.f32 %v3280, %v3175
  %v3282 = vadd.f32 %v3281, %v3177
  %v3283 = vrot.slane %v3282, 4
  %v3284 = vadd.f32 %v3282, %v3283
  %v3285 = vrot.slane %v3284, 2
  %v3286 = vadd.f32 %v3284, %v3285
  %v3287 = vrot.slane %v3286, 1
  %v3288 = vadd.f32 %v3286, %v3287
  %v3289 = vadd.f32 %v3166, %v3168
  %v3290 = vadd.f32 %v3289, %v3170
  %v3291 = vadd.f32 %v3290, %v3172
  %v3292 = vadd.f32 %v3291, %v3174
  %v3293 = vadd.f32 %v3292, %v3176
  %v3294 = vadd.f32 %v3293, %v3178
  %v3295 = vrot.slane %v3294, 4
  %v3296 = vadd.f32 %v3294, %v3295
  %v3297 = vrot.slane %v3296, 2
  %v3298 = vadd.f32 %v3296, %v3297
  %v3299 = vrot.slane %v3298, 1
  %v3300 = vadd.f32 %v3298, %v3299
  %v3301 = vadd.f32 %v3179, %v3181
  %v3302 = vadd.f32 %v3301, %v3183
  %v3303 = vadd.f32 %v3302, %v3185
  %v3304 = vadd.f32 %v3303, %v3187
  %v3305 = vadd.f32 %v3304, %v3189
  %v3306 = vadd.f32 %v3305, %v3191
  %v3307 = vrot.slane %v3306, 4
  %v3308 = vadd.f32 %v3306, %v3307
  %v3309 = vrot.slane %v3308, 2
  %v3310 = vadd.f32 %v3308, %v3309
  %v3311 = vrot.slane %v3310, 1
  %v3312 = vadd.f32 %v3310, %v3311
  %v3313 = vadd.f32 %v3180, %v3182
  %v3314 = vadd.f32 %v3313, %v3184
  %v3315 = vadd.f32 %v3314, %v3186
  %v3316 = vadd.f32 %v3315, %v3188
  %v3317 = vadd.f32 %v3316, %v3190
  %v3318 = vadd.f32 %v3317, %v3192
  %v3319 = vrot.slane %v3318, 4
  %v3320 = vadd.f32 %v3318, %v3319
  %v3321 = vrot.slane %v3320, 2
  %v3322 = vadd.f32 %v3320, %v3321
  %v3323 = vrot.slane %v3322, 1
  %v3324 = vadd.f32 %v3322, %v3323
  %v3325 = vadd.f32 %v3193, %v3195
  %v3326 = vadd.f32 %v3325, %v3197
  %v3327 = vadd.f32 %v3326, %v3199
  %v3328 = vadd.f32 %v3327, %v3201
  %v3329 = vadd.f32 %v3328, %v3203
  %v3330 = vadd.f32 %v3329, %v3205
  %v3331 = vrot.slane %v3330, 4
  %v3332 = vadd.f32 %v3330, %v3331
  %v3333 = vrot.slane %v3332, 2
  %v3334 = vadd.f32 %v3332, %v3333
  %v3335 = vrot.slane %v3334, 1
  %v3336 = vadd.f32 %v3334, %v3335
  %v3337 = vadd.f32 %v3194, %v3196
  %v3338 = vadd.f32 %v3337, %v3198
  %v3339 = vadd.f32 %v3338, %v3200
  %v3340 = vadd.f32 %v3339, %v3202
  %v3341 = vadd.f32 %v3340, %v3204
  %v3342 = vadd.f32 %v3341, %v3206
  %v3343 = vrot.slane %v3342, 4
  %v3344 = vadd.f32 %v3342, %v3343
  %v3345 = vrot.slane %v3344, 2
  %v3346 = vadd.f32 %v3344, %v3345
  %v3347 = vrot.slane %v3346, 1
  %v3348 = vadd.f32 %v3346, %v3347
  %v3349 = vadd.f32 %v3207, %v3209
  %v3350 = vadd.f32 %v3349, %v3211
  %v3351 = vadd.f32 %v3350, %v3213
  %v3352 = vadd.f32 %v3351, %v3215
  %v3353 = vadd.f32 %v3352, %v3217
  %v3354 = vadd.f32 %v3353, %v3219
  %v3355 = vrot.slane %v3354, 4
  %v3356 = vadd.f32 %v3354, %v3355
  %v3357 = vrot.slane %v3356, 2
  %v3358 = vadd.f32 %v3356, %v3357
  %v3359 = vrot.slane %v3358, 1
  %v3360 = vadd.f32 %v3358, %v3359
  %v3361 = vadd.f32 %v3208, %v3210
  %v3362 = vadd.f32 %v3361, %v3212
  %v3363 = vadd.f32 %v3362, %v3214
  %v3364 = vadd.f32 %v3363, %v3216
  %v3365 = vadd.f32 %v3364, %v3218
  %v3366 = vadd.f32 %v3365, %v3220
  %v3367 = vrot.slane %v3366, 4
  %v3368 = vadd.f32 %v3366, %v3367
  %v3369 = vrot.slane %v3368, 2
  %v3370 = vadd.f32 %v3368, %v3369
  %v3371 = vrot.slane %v3370, 1
  %v3372 = vadd.f32 %v3370, %v3371
  %v3373 = vadd.f32 %v3221, %v3223
  %v3374 = vadd.f32 %v3373, %v3225
  %v3375 = vadd.f32 %v3374, %v3227
  %v3376 = vadd.f32 %v3375, %v3229
  %v3377 = vadd.f32 %v3376, %v3231
  %v3378 = vadd.f32 %v3377, %v3233
  %v3379 = vrot.slane %v3378, 4
  %v3380 = vadd.f32 %v3378, %v3379
  %v3381 = vrot.slane %v3380, 2
  %v3382 = vadd.f32 %v3380, %v3381
  %v3383 = vrot.slane %v3382, 1
  %v3384 = vadd.f32 %v3382, %v3383
  %v3385 = vadd.f32 %v3222, %v3224
  %v3386 = vadd.f32 %v3385, %v3226
  %v3387 = vadd.f32 %v3386, %v3228
  %v3388 = vadd.f32 %v3387, %v3230
  %v3389 = vadd.f32 %v3388, %v3232
  %v3390 = vadd.f32 %v3389, %v3234
  %v3391 = vrot.slane %v3390, 4
  %v3392 = vadd.f32 %v3390, %v3391
  %v3393 = vrot.slane %v3392, 2
  %v3394 = vadd.f32 %v3392, %v3393
  %v3395 = vrot.slane %v3394, 1
  %v3396 = vadd.f32 %v3394, %v3395
  %v3397 = vadd.f32 %v3235, %v3237
  %v3398 = vadd.f32 %v3397, %v3239
  %v3399 = vadd.f32 %v3398, %v3241
  %v3400 = vadd.f32 %v3399, %v3243
  %v3401 = vadd.f32 %v3400, %v3245
  %v3402 = vadd.f32 %v3401, %v3247
  %v3403 = vrot.slane %v3402, 4
  %v3404 = vadd.f32 %v3402, %v3403
  %v3405 = vrot.slane %v3404, 2
  %v3406 = vadd.f32 %v3404, %v3405
  %v3407 = vrot.slane %v3406, 1
  %v3408 = vadd.f32 %v3406, %v3407
  %v3409 = vadd.f32 %v3236, %v3238
  %v3410 = vadd.f32 %v3409, %v3240
  %v3411 = vadd.f32 %v3410, %v3242
  %v3412 = vadd.f32 %v3411, %v3244
  %v3413 = vadd.f32 %v3412, %v3246
  %v3414 = vadd.f32 %v3413, %v3248
  %v3415 = vrot.slane %v3414, 4
  %v3416 = vadd.f32 %v3414, %v3415
  %v3417 = vrot.slane %v3416, 2
  %v3418 = vadd.f32 %v3416, %v3417
  %v3419 = vrot.slane %v3418, 1
  %v3420 = vadd.f32 %v3418, %v3419
  %v3421 = vadd.f32 %v3249, %v3251
  %v3422 = vadd.f32 %v3421, %v3253
  %v3423 = vadd.f32 %v3422, %v3255
  %v3424 = vadd.f32 %v3423, %v3257
  %v3425 = vadd.f32 %v3424, %v3259
  %v3426 = vadd.f32 %v3425, %v3261
  %v3427 = vrot.slane %v3426, 4
  %v3428 = vadd.f32 %v3426, %v3427
  %v3429 = vrot.slane %v3428, 2
  %v3430 = vadd.f32 %v3428, %v3429
  %v3431 = vrot.slane %v3430, 1
  %v3432 = vadd.f32 %v3430, %v3431
  %v3433 = vadd.f32 %v3250, %v3252
  %v3434 = vadd.f32 %v3433, %v3254
  %v3435 = vadd.f32 %v3434, %v3256
  %v3436 = vadd.f32 %v3435, %v3258
  %v3437 = vadd.f32 %v3436, %v3260
  %v3438 = vadd.f32 %v3437, %v3262
  %v3439 = vrot.slane %v3438, 4
  %v3440 = vadd.f32 %v3438, %v3439
  %v3441 = vrot.slane %v3440, 2
  %v3442 = vadd.f32 %v3440, %v3441
  %v3443 = vrot.slane %v3442, 1
  %v3444 = vadd.f32 %v3442, %v3443
  %v3445 = vadd.f32 %v3263, %v3265
  %v3446 = vadd.f32 %v3445, %v3267
  %v3447 = vadd.f32 %v3446, %v3269
  %v3448 = vadd.f32 %v3447, %v3271
  %v3449 = vadd.f32 %v3448, %v3273
  %v3450 = vadd.f32 %v3449, %v3275
  %v3451 = vrot.slane %v3450, 4
  %v3452 = vadd.f32 %v3450, %v3451
  %v3453 = vrot.slane %v3452, 2
  %v3454 = vadd.f32 %v3452, %v3453
  %v3455 = vrot.slane %v3454, 1
  %v3456 = vadd.f32 %v3454, %v3455
  %v3457 = vadd.f32 %v3264, %v3266
  %v3458 = vadd.f32 %v3457, %v3268
  %v3459 = vadd.f32 %v3458, %v3270
  %v3460 = vadd.f32 %v3459, %v3272
  %v3461 = vadd.f32 %v3460, %v3274
  %v3462 = vadd.f32 %v3461, %v3276
  %v3463 = vrot.slane %v3462, 4
  %v3464 = vadd.f32 %v3462, %v3463
  %v3465 = vrot.slane %v3464, 2
  %v3466 = vadd.f32 %v3464, %v3465
  %v3467 = vrot.slane %v3466, 1
  %v3468 = vadd.f32 %v3466, %v3467
  %v3469 = vmul.f32 %v3288, 0.020408163
  %v3470 = vmul.f32 %v3300, 0.020408163
  %v3471 = vmul.f32 %v3312, 0.020408163
  %v3472 = vmul.f32 %v3324, 0.020408163
  %v3473 = vmul.f32 %v3336, 0.020408163
  %v3474 = vmul.f32 %v3348, 0.020408163
  %v3475 = vmul.f32 %v3360, 0.020408163
  %v3476 = vmul.f32 %v3372, 0.020408163
  %v3477 = vmul.f32 %v3384, 0.020408163
  %v3478 = vmul.f32 %v3396, 0.020408163
  %v3479 = vmul.f32 %v3408, 0.020408163
  %v3480 = vmul.f32 %v3420, 0.020408163
  %v3481 = vmul.f32 %v3432, 0.020408163
  %v3482 = vmul.f32 %v3444, 0.020408163
  %v3483 = vmul.f32 %v3456, 0.020408163
  %v3484 = vmul.f32 %v3468, 0.020408163
  %v3485 = vpack.c.bf16 %v3469, %v3469
  %v3486 = vpack.c.bf16 %v3470, %v3470
  %v3487 = vpack.c.bf16 %v3471, %v3471
  %v3488 = vpack.c.bf16 %v3472, %v3472
  %v3489 = vpack.c.bf16 %v3473, %v3473
  %v3490 = vpack.c.bf16 %v3474, %v3474
  %v3491 = vpack.c.bf16 %v3475, %v3475
  %v3492 = vpack.c.bf16 %v3476, %v3476
  %v3493 = vpack.c.bf16 %v3477, %v3477
  %v3494 = vpack.c.bf16 %v3478, %v3478
  %v3495 = vpack.c.bf16 %v3479, %v3479
  %v3496 = vpack.c.bf16 %v3480, %v3480
  %v3497 = vpack.c.bf16 %v3481, %v3481
  %v3498 = vpack.c.bf16 %v3482, %v3482
  %v3499 = vpack.c.bf16 %v3483, %v3483
  %v3500 = vpack.c.bf16 %v3484, %v3484
  %v3517 = vunpack.c.l.b16 %v3485
  %v3518 = vunpack.c.l.b16 %v3486
  %v3519 = vunpack.c.l.b16 %v3487
  %v3520 = vunpack.c.l.b16 %v3488
  %v3521 = vunpack.c.l.b16 %v3489
  %v3522 = vunpack.c.l.b16 %v3490
  %v3523 = vunpack.c.l.b16 %v3491
  %v3524 = vunpack.c.l.b16 %v3492
  %v3525 = vunpack.c.l.b16 %v3493
  %v3526 = vunpack.c.l.b16 %v3494
  %v3527 = vunpack.c.l.b16 %v3495
  %v3528 = vunpack.c.l.b16 %v3496
  %v3529 = vunpack.c.l.b16 %v3497
  %v3530 = vunpack.c.l.b16 %v3498
  %v3531 = vunpack.c.l.b16 %v3499
  %v3532 = vunpack.c.l.b16 %v3500
  %v3533 = vsel %vm580, %v3519, %v3517
  %v3534 = vsel %vm582, %v3521, %v3533
  %v3535 = vsel %vm584, %v3523, %v3534
  %v3536 = vsel %vm586, %v3525, %v3535
  %v3537 = vsel %vm588, %v3527, %v3536
  %v3538 = vsel %vm590, %v3529, %v3537
  %v3539 = vsel %vm592, %v3531, %v3538
  %v3540 = vsel %vm580, %v3520, %v3518
  %v3541 = vsel %vm582, %v3522, %v3540
  %v3542 = vsel %vm584, %v3524, %v3541
  %v3543 = vsel %vm586, %v3526, %v3542
  %v3544 = vsel %vm588, %v3528, %v3543
  %v3545 = vsel %vm590, %v3530, %v3544
  %v3546 = vsel %vm592, %v3532, %v3545
  %v3547 = vpack.c.b16 %v3539, %v3539
  %v3548 = vpack.c.b16 %v3546, %v3546
  %3551 = vmatpush.bf16.msra.mxu0 %v786
  %3552 = vmatpush.bf16.msra.mxu0 %v783
  %3553 = vmatpush.bf16.msra.mxu0 %v780
  %3554 = vmatpush.bf16.msra.mxu0 %v777
  %3555 = vmatpush.bf16.msra.mxu0 %v774
  %3556 = vmatpush.bf16.msra.mxu0 %v771
  %3557 = vmatpush.bf16.msra.mxu0 %v768
  %3558 = vmatpush.bf16.msra.mxu0 %v765
  %3559 = vmatmul.bf16.gmra.mxu0 %v3547
  %v3560 = vpop.f32.mrf.mxu0
  %v3561 = vadd.f32 %v542, %v3560
  %v3562 = vpop.f32.mrf.mxu0
  %3563 = vdwg.mxu0
  %3564 = vmatpush.bf16.msra.mxu0 %v810
  %3565 = vmatpush.bf16.msra.mxu0 %v807
  %3566 = vmatpush.bf16.msra.mxu0 %v804
  %3567 = vmatpush.bf16.msra.mxu0 %v801
  %3568 = vmatpush.bf16.msra.mxu0 %v798
  %3569 = vmatpush.bf16.msra.mxu0 %v795
  %3570 = vmatpush.bf16.msra.mxu0 %v792
  %3571 = vmatpush.bf16.msra.mxu0 %v789
  %3572 = vmatmul.bf16.gmra.mxu0 %v3548
  %v3573 = vpop.f32.mrf.mxu0
  %v3574 = vadd.f32 %v3561, %v3573
  %v3575 = vpop.f32.mrf.mxu0
  %3576 = vdwg.mxu0
  %3577 = vmatpush.bf16.msra.mxu0 %v787
  %3578 = vmatpush.bf16.msra.mxu0 %v784
  %3579 = vmatpush.bf16.msra.mxu0 %v781
  %3580 = vmatpush.bf16.msra.mxu0 %v778
  %3581 = vmatpush.bf16.msra.mxu0 %v775
  %3582 = vmatpush.bf16.msra.mxu0 %v772
  %3583 = vmatpush.bf16.msra.mxu0 %v769
  %3584 = vmatpush.bf16.msra.mxu0 %v766
  %3585 = vmatmul.bf16.gmra.mxu0 %v3547
  %v3586 = vpop.f32.mrf.mxu0
  %v3587 = vadd.f32 %v543, %v3586
  %v3588 = vpop.f32.mrf.mxu0
  %3589 = vdwg.mxu0
  %3590 = vmatpush.bf16.msra.mxu0 %v811
  %3591 = vmatpush.bf16.msra.mxu0 %v808
  %3592 = vmatpush.bf16.msra.mxu0 %v805
  %3593 = vmatpush.bf16.msra.mxu0 %v802
  %3594 = vmatpush.bf16.msra.mxu0 %v799
  %3595 = vmatpush.bf16.msra.mxu0 %v796
  %3596 = vmatpush.bf16.msra.mxu0 %v793
  %3597 = vmatpush.bf16.msra.mxu0 %v790
  %3598 = vmatmul.bf16.gmra.mxu0 %v3548
  %v3599 = vpop.f32.mrf.mxu0
  %v3600 = vadd.f32 %v3587, %v3599
  %v3601 = vpop.f32.mrf.mxu0
  %3602 = vdwg.mxu0
  %3603 = vmatpush.bf16.msra.mxu0 %v788
  %3604 = vmatpush.bf16.msra.mxu0 %v785
  %3605 = vmatpush.bf16.msra.mxu0 %v782
  %3606 = vmatpush.bf16.msra.mxu0 %v779
  %3607 = vmatpush.bf16.msra.mxu0 %v776
  %3608 = vmatpush.bf16.msra.mxu0 %v773
  %3609 = vmatpush.bf16.msra.mxu0 %v770
  %3610 = vmatpush.bf16.msra.mxu0 %v767
  %3611 = vmatmul.bf16.gmra.mxu0 %v3547
  %v3612 = vpop.f32.mrf.mxu0
  %v3613 = vadd.f32 %v544, %v3612
  %v3614 = vpop.f32.mrf.mxu0
  %3615 = vdwg.mxu0
  %3616 = vmatpush.bf16.msra.mxu0 %v812
  %3617 = vmatpush.bf16.msra.mxu0 %v809
  %3618 = vmatpush.bf16.msra.mxu0 %v806
  %3619 = vmatpush.bf16.msra.mxu0 %v803
  %3620 = vmatpush.bf16.msra.mxu0 %v800
  %3621 = vmatpush.bf16.msra.mxu0 %v797
  %3622 = vmatpush.bf16.msra.mxu0 %v794
  %3623 = vmatpush.bf16.msra.mxu0 %v791
  %3624 = vmatmul.bf16.gmra.mxu0 %v3548
  %v3625 = vpop.f32.mrf.mxu0
  %v3626 = vadd.f32 %v3613, %v3625
  %v3627 = vpop.f32.mrf.mxu0
  %3628 = vdwg.mxu0
  %v3629 = vpack.c.bf16 %v1191, %v1191
  %3630 = vmatpush.bf16.msra.mxu0 %v1048
  %3631 = vmatpush.bf16.msra.mxu0 %v1045
  %3632 = vmatpush.bf16.msra.mxu0 %v1042
  %3633 = vmatpush.bf16.msra.mxu0 %v1039
  %3634 = vmatpush.bf16.msra.mxu0 %v1036
  %3635 = vmatpush.bf16.msra.mxu0 %v1033
  %3636 = vmatpush.bf16.msra.mxu0 %v1030
  %3637 = vmatpush.bf16.msra.mxu0 %v1027
  %3638 = vmatmul.bf16.gmra.mxu0 %v3629
  %v3639 = vpop.f32.mrf.mxu0
  %v3640 = vadd.f32 %v941, %v3639
  %v3641 = vpop.f32.mrf.mxu0
  %3642 = vdwg.mxu0
  %3643 = vmatpush.bf16.msra.mxu0 %v1049
  %3644 = vmatpush.bf16.msra.mxu0 %v1046
  %3645 = vmatpush.bf16.msra.mxu0 %v1043
  %3646 = vmatpush.bf16.msra.mxu0 %v1040
  %3647 = vmatpush.bf16.msra.mxu0 %v1037
  %3648 = vmatpush.bf16.msra.mxu0 %v1034
  %3649 = vmatpush.bf16.msra.mxu0 %v1031
  %3650 = vmatpush.bf16.msra.mxu0 %v1028
  %3651 = vmatmul.bf16.gmra.mxu0 %v3629
  %v3652 = vpop.f32.mrf.mxu0
  %v3653 = vadd.f32 %v942, %v3652
  %v3654 = vpop.f32.mrf.mxu0
  %3655 = vdwg.mxu0
  %3656 = vmatpush.bf16.msra.mxu0 %v1050
  %3657 = vmatpush.bf16.msra.mxu0 %v1047
  %3658 = vmatpush.bf16.msra.mxu0 %v1044
  %3659 = vmatpush.bf16.msra.mxu0 %v1041
  %3660 = vmatpush.bf16.msra.mxu0 %v1038
  %3661 = vmatpush.bf16.msra.mxu0 %v1035
  %3662 = vmatpush.bf16.msra.mxu0 %v1032
  %3663 = vmatpush.bf16.msra.mxu0 %v1029
  %3664 = vmatmul.bf16.gmra.mxu0 %v3629
  %v3665 = vpop.f32.mrf.mxu0
  %v3666 = vadd.f32 %v943, %v3665
  %v3667 = vpop.f32.mrf.mxu0
  %3668 = vdwg.mxu0
  %v3669 = vadd.f32 %v3574, %v3640
  %v3670 = vsub.f32 0.0, %v3669
  %v3671 = vmul.f32 %v3670, 1.442695
  %v3672 = vpow.pop %v3671
  %v3673 = vadd.f32 %v3672, 1.0
  %v3674 = vrcp.pop %v3673
  %v3675 = vadd.f32 %v3600, %v3653
  %v3676 = vsub.f32 0.0, %v3675
  %v3677 = vmul.f32 %v3676, 1.442695
  %v3678 = vpow.pop %v3677
  %v3679 = vadd.f32 %v3678, 1.0
  %v3680 = vrcp.pop %v3679
  %v3681 = vmul.f32 %v3674, %v3666
  %v3682 = vadd.f32 %v3626, %v3681
  %v3683 = vtanh.pop %v3682
  %v3684 = vsub.f32 1.0, %v3680
  %v3685 = vmul.f32 %v3684, %v3683
  %v3686 = vmul.f32 %v3680, %v1191
  %v3687 = vadd.f32 %v3685, %v3686
  %v3688 = vmul.f32 %v3687, %v3687
  %3689 = vadd.xlane.f32.xlu0 %v3688
  %v3690 = vpop.xlane.xlu0 %3689
  %v3691 = vrsqrt.pop %v3690
  %v3692 = vmul.f32 %v3691, %v3690
  %v3693 = vmul.f32 %v3692, %v3691
  %v3694 = vmul.f32 0.5, %v3693
  %v3695 = vsub.f32 1.5, %v3694
  %v3696 = vmul.f32 %v3691, %v3695
  %v3697 = vmul.f32 %v3690, %v3696
  %vm3698 = vcmp.eq.f32.partialorder %v3690, inf
  %v3699 = vsel %vm3698, %v3690, %v3697
  %vm3700 = vcmp.eq.f32.partialorder %v3690, 0.0
  %v3701 = vand.u32 %v3690, 2147483648
  %v3702 = vsel %vm3700, %v3701, %v3699
  %v3703 = vrcp.pop %v3702
  %v3704 = vmul.f32 %v3687, %v3703
  %3705 = vst [vmem:[%s16] sm:$0xff] %v3704
  %v3706 = vld [vmem:[%s6] sm:$0xf]
  %v3707 = vld [vmem:[%s6 + $0x4] sm:$0xf]
  %v3708 = vld [vmem:[%s6 + $0x8] sm:$0xf]
  %v3709 = vld [vmem:[%s6 + $0xc] sm:$0xf]
  %v3710 = vld [vmem:[%s6 + $0x10] sm:$0xf]
  %v3711 = vld [vmem:[%s6 + $0x14] sm:$0xf]
  %v3712 = vld [vmem:[%s6 + $0x18] sm:$0xf]
  %v3713 = vld [vmem:[%s6 + $0x1c] sm:$0xf]
  %v3714 = vld [vmem:[%s6 + $0x20] sm:$0xf]
  %v3715 = vld [vmem:[%s6 + $0x24] sm:$0xf]
  %v3716 = vld [vmem:[%s6 + $0x28] sm:$0xf]
  %v3717 = vld [vmem:[%s6 + $0x2c] sm:$0xf]
  %v3718 = vld [vmem:[%s6 + $0x30] sm:$0xf]
  %v3719 = vld [vmem:[%s6 + $0x34] sm:$0xf]
  %v3720 = vld [vmem:[%s6 + $0x38] sm:$0xf]
  %v3721 = vld [vmem:[%s6 + $0x3c] sm:$0xf]
  %v3722 = vld [vmem:[%s7] sm:$0x1]
  %v3724 = vperm.slane %v3722, 0
  %v3742 = vunpack.c.l.b16 %v3706
  %v3743 = vunpack.c.l.b16 %v3707
  %v3744 = vunpack.c.l.b16 %v3708
  %v3745 = vunpack.c.l.b16 %v3709
  %v3746 = vunpack.c.l.b16 %v3710
  %v3747 = vunpack.c.l.b16 %v3711
  %v3748 = vunpack.c.l.b16 %v3712
  %v3749 = vunpack.c.l.b16 %v3713
  %v3750 = vunpack.c.l.b16 %v3714
  %v3751 = vunpack.c.l.b16 %v3715
  %v3752 = vunpack.c.l.b16 %v3716
  %v3753 = vunpack.c.l.b16 %v3717
  %v3754 = vunpack.c.l.b16 %v3718
  %v3755 = vunpack.c.l.b16 %v3719
  %v3756 = vunpack.c.l.b16 %v3720
  %v3757 = vunpack.c.l.b16 %v3721
  %v3758 = vpack.c.b16 %v3743, %v3742
  %v3759 = vpack.c.b16 %v3745, %v3744
  %v3760 = vpack.c.b16 %v3747, %v3746
  %v3761 = vpack.c.b16 %v3749, %v3748
  %v3762 = vpack.c.b16 %v3751, %v3750
  %v3763 = vpack.c.b16 %v3753, %v3752
  %v3764 = vpack.c.b16 %v3755, %v3754
  %v3765 = vpack.c.b16 %v3757, %v3756
  %3774 = vmatpush.bf16.msra.mxu0 %v3765
  %3775 = vmatpush.bf16.msra.mxu0 %v3764
  %3776 = vmatpush.bf16.msra.mxu0 %v3763
  %3777 = vmatpush.bf16.msra.mxu0 %v3762
  %3778 = vmatpush.bf16.msra.mxu0 %v3761
  %3779 = vmatpush.bf16.msra.mxu0 %v3760
  %3780 = vmatpush.bf16.msra.mxu0 %v3759
  %3781 = vmatpush.bf16.msra.mxu0 %v3758
  %3782 = vmatmul.bf16.gmra.mxu0 %v1133
  %v3783 = vpop.f32.mrf.mxu0
  %v3784 = vadd.f32 %v3724, %v3783
  %v3785 = vpop.f32.mrf.mxu0
  %3786 = vdwg.mxu0
  %v3787 = vpack.c.bf16 %v3687, %v3687
  %v3788 = vld [vmem:[%s8] sm:$0xf]
  %v3789 = vld [vmem:[%s8 + $0x4] sm:$0xf]
  %v3790 = vld [vmem:[%s8 + $0x8] sm:$0xf]
  %v3791 = vld [vmem:[%s8 + $0xc] sm:$0xf]
  %v3792 = vld [vmem:[%s8 + $0x10] sm:$0xf]
  %v3793 = vld [vmem:[%s8 + $0x14] sm:$0xf]
  %v3794 = vld [vmem:[%s8 + $0x18] sm:$0xf]
  %v3795 = vld [vmem:[%s8 + $0x1c] sm:$0xf]
  %v3796 = vld [vmem:[%s8 + $0x20] sm:$0xf]
  %v3797 = vld [vmem:[%s8 + $0x24] sm:$0xf]
  %v3798 = vld [vmem:[%s8 + $0x28] sm:$0xf]
  %v3799 = vld [vmem:[%s8 + $0x2c] sm:$0xf]
  %v3800 = vld [vmem:[%s8 + $0x30] sm:$0xf]
  %v3801 = vld [vmem:[%s8 + $0x34] sm:$0xf]
  %v3802 = vld [vmem:[%s8 + $0x38] sm:$0xf]
  %v3803 = vld [vmem:[%s8 + $0x3c] sm:$0xf]
  %v3804 = vld [vmem:[%s9] sm:$0x1]
  %v3806 = vperm.slane %v3804, 0
  %v3824 = vunpack.c.l.b16 %v3788
  %v3825 = vunpack.c.l.b16 %v3789
  %v3826 = vunpack.c.l.b16 %v3790
  %v3827 = vunpack.c.l.b16 %v3791
  %v3828 = vunpack.c.l.b16 %v3792
  %v3829 = vunpack.c.l.b16 %v3793
  %v3830 = vunpack.c.l.b16 %v3794
  %v3831 = vunpack.c.l.b16 %v3795
  %v3832 = vunpack.c.l.b16 %v3796
  %v3833 = vunpack.c.l.b16 %v3797
  %v3834 = vunpack.c.l.b16 %v3798
  %v3835 = vunpack.c.l.b16 %v3799
  %v3836 = vunpack.c.l.b16 %v3800
  %v3837 = vunpack.c.l.b16 %v3801
  %v3838 = vunpack.c.l.b16 %v3802
  %v3839 = vunpack.c.l.b16 %v3803
  %v3840 = vpack.c.b16 %v3825, %v3824
  %v3841 = vpack.c.b16 %v3827, %v3826
  %v3842 = vpack.c.b16 %v3829, %v3828
  %v3843 = vpack.c.b16 %v3831, %v3830
  %v3844 = vpack.c.b16 %v3833, %v3832
  %v3845 = vpack.c.b16 %v3835, %v3834
  %v3846 = vpack.c.b16 %v3837, %v3836
  %v3847 = vpack.c.b16 %v3839, %v3838
  %3856 = vmatpush.bf16.msra.mxu0 %v3847
  %3857 = vmatpush.bf16.msra.mxu0 %v3846
  %3858 = vmatpush.bf16.msra.mxu0 %v3845
  %3859 = vmatpush.bf16.msra.mxu0 %v3844
  %3860 = vmatpush.bf16.msra.mxu0 %v3843
  %3861 = vmatpush.bf16.msra.mxu0 %v3842
  %3862 = vmatpush.bf16.msra.mxu0 %v3841
  %3863 = vmatpush.bf16.msra.mxu0 %v3840
  %3864 = vmatmul.bf16.gmra.mxu0 %v3787
  %v3865 = vpop.f32.mrf.mxu0
  %v3866 = vadd.f32 %v3806, %v3865
  %v3867 = vpop.f32.mrf.mxu0
  %3868 = vdwg.mxu0
  %3869 = vmax.xlane.f32.xlu0 %v3784
  %v3870 = vpop.xlane.xlu0 %3869
  %v3871 = vsub.f32 %v3784, %v3870
  %v3872 = vmul.f32 %v3871, 1.442695
  %v3873 = vpow.pop %v3872
  %3874 = vadd.xlane.f32.xlu0 %v3873
  %v3875 = vpop.xlane.xlu0 %3874
  %v3876 = vlog2.pop %v3875
  %v3877 = vmul.f32 %v3876, 0.6931472
  %v3878 = vsub.f32 %v3871, %v3877
  %3879 = vst [vmem:[%s14] sm:$0xff] %v3878
  %3880 = vmax.xlane.f32.xlu0 %v3866
  %v3881 = vpop.xlane.xlu0 %3880
  %v3882 = vsub.f32 %v3866, %v3881
  %v3883 = vmul.f32 %v3882, 1.442695
  %v3884 = vpow.pop %v3883
  %3885 = vadd.xlane.f32.xlu0 %v3884
  %v3886 = vpop.xlane.xlu0 %3885
  %v3887 = vlog2.pop %v3886
  %v3888 = vmul.f32 %v3887, 0.6931472
  %v3889 = vsub.f32 %v3882, %v3888
  %3890 = vst [vmem:[%s15] sm:$0xff] %v3889
  // Predicated region
  $region58: #{rnn_ha_forward.1} parent=0 // pred_check
    _
  $region59: #{rnn_ha_forward.1} parent=0 // pred_check_branch
    %3892 = sbr.rel (0) target = $region61
  $region60: #{rnn_ha_forward.1} parent=0 // pred_region
    _
  $region61: #{rnn_ha_forward.1} parent=0 // pred_fallthru
    _
  // Predicated region
  $region62: #{rnn_ha_forward.1} parent=0 // pred_check
    _
  $region63: #{rnn_ha_forward.1} parent=0 // pred_check_branch
    %3894 = sbr.rel (0) target = $region65
  $region64: #{rnn_ha_forward.1} parent=0 // pred_region
    _
  $region65: #{rnn_ha_forward.1} parent=0 // pred_fallthru
    _
  // Predicated region
  $region66: #{rnn_ha_forward.1} parent=0 // pred_check
    _
  $region67: #{rnn_ha_forward.1} parent=0 // pred_check_branch
    %3896 = sbr.rel (0) target = $region69
  $region68: #{rnn_ha_forward.1} parent=0 // pred_region
    _
  $region69: #{rnn_ha_forward.1} parent=0 // pred_fallthru
    _
  // Predicated region
  $region70: #{rnn_ha_forward.1} parent=0 // pred_check
    _
  $region71: #{rnn_ha_forward.1} parent=0 // pred_check_branch
    %3898 = sbr.rel (0) target = $region73
  $region72: #{rnn_ha_forward.1} parent=0 // pred_region
    _
  $region73: #{rnn_ha_forward.1} parent=0 // pred_fallthru
    _
  // Predicated region
  $region74: #{rnn_ha_forward.1} parent=0 // pred_check
    _
  $region75: #{rnn_ha_forward.1} parent=0 // pred_check_branch
    %3900 = sbr.rel (0) target = $region77
  $region76: #{rnn_ha_forward.1} parent=0 // pred_region
    _
  $region77: #{rnn_ha_forward.1} parent=0 // pred_fallthru
    _
  // Predicated region
  $region78: #{rnn_ha_forward.1} parent=0 // pred_check
    _
  $region79: #{rnn_ha_forward.1} parent=0 // pred_check_branch
    %3902 = sbr.rel (0) target = $region81
  $region80: #{rnn_ha_forward.1} parent=0 // pred_region
    _
  $region81: #{rnn_ha_forward.1} parent=0 // pred_fallthru
    _

</llo_original>
